<compile_context>
chip_gen: v7x
topology: tpu7x:2x2x1
jax: 0.10.0
libtpu: 0.0.40
codegen_flags: <defaults>
</compile_context>

<pallas_src>
import functools
from typing import NamedTuple, Tuple

import jax
import jax.numpy as jnp
from jax.experimental import pallas as pl
from jax.experimental.pallas import tpu as pltpu


def _round_up(v, m):
    return (v + m - 1) // m * m


# ---------------------------------------------------------------------------
# Kernel: the entire MLP for one (tile_m, K0) batch tile. ReLU on all layers
# except the last.
# ---------------------------------------------------------------------------
def _fused_mlp_kernel(*refs, num_layers, compute_dtype):
    x_ref = refs[0]
    w_refs = refs[1:1 + num_layers]
    b_refs = refs[1 + num_layers:1 + 2 * num_layers]
    o_ref = refs[1 + 2 * num_layers]

    h = x_ref[...]
    for i in range(num_layers):
        # MXU matmul with f32 accumulation; bias + ReLU stay f32 (v5e-safe VPU).
        y = jnp.dot(h, w_refs[i][...], preferred_element_type=jnp.float32)
        y = y + b_refs[i][...]
        if i < num_layers - 1:
            h = jnp.maximum(y, 0.0).astype(compute_dtype)
        else:
            o_ref[...] = y.astype(o_ref.dtype)


# ---------------------------------------------------------------------------
# One-time parameter preparation (hoisted out of the forward path).
# ---------------------------------------------------------------------------
class PreparedParams(NamedTuple):
    weights: Tuple[jax.Array, ...]   # (kin_p, nout_p), compute dtype
    biases: Tuple[jax.Array, ...]    # (1, nout_p), f32
    in_features: int                 # un-padded input feature count
    out_features: int                # un-padded logit count


def prepare_params(params, compute_dtype=jnp.bfloat16):
    """Pad every layer to lane/MXU-friendly shapes ONCE and cache the result.

    params: list of (W_t, b) with W_t stored as (in_features, out_features).
    All feature dims are zero-padded to multiples of 128 and weights cast to
    `compute_dtype`; biases are zero-padded and kept f32. Zero padding keeps
    the math exact. Doing this once removes ~MiBs of padding/cast HBM traffic
    from every forward call (the small-batch forward is weight-DMA bound).
    """
    in_features = params[0][0].shape[0]
    kin_p = _round_up(in_features, 128)
    weights, biases = [], []
    out_features = None
    for w_t, b in params:
        kin, nout = w_t.shape
        nout_p = _round_up(nout, 128)
        w_p = jnp.zeros((kin_p, nout_p), compute_dtype)
        w_p = w_p.at[:kin, :nout].set(w_t.astype(compute_dtype))
        b_p = jnp.zeros((1, nout_p), jnp.float32)
        b_p = b_p.at[0, :nout].set(b.astype(jnp.float32))
        weights.append(w_p)
        biases.append(b_p)
        out_features = nout
        kin_p = nout_p
    # TODO(synk): on v7x, W1 (3072x128) could additionally be stored as fp8
    # (e4m3) with per-output-channel f32 scales applied after the dot, halving
    # the dominant weight DMA again; needs accuracy validation.
    return PreparedParams(tuple(weights), tuple(biases), in_features, out_features)


# ---------------------------------------------------------------------------
# Tiling / BlockSpec helpers.
# ---------------------------------------------------------------------------
def _choose_tiling(B, itemsize):
    """Pick (tile_m, padded_M). Targets 512 (bf16) / 256 (f32, v5e-safe),
    rounds rows for packed sub-32-bit dtypes, and prefers >=2 M-tiles for
    large batches so the "parallel" axis shards across v7x's two cores."""
    row_align = 16 if itemsize < 4 else 8
    target = 512 if itemsize < 4 else 256
    if B <= 8:
        # Single full-array block: skips the x row-padding copy entirely.
        return B, B
    b_al = _round_up(B, row_align)
    tile_m = max(row_align, min(target, _round_up(pl.cdiv(b_al, 2), row_align)))
    m_pad = _round_up(B, tile_m)
    return tile_m, m_pad


_SINGLE_BUFFER_WEIGHTS = hasattr(pl, "Buffered")  # flipped off if unsupported


def _resident_spec(shape, single_buffer):
    """BlockSpec for a grid-invariant operand (weights/biases): same block at
    every grid step. Single-buffered when supported to free VMEM."""
    if single_buffer:
        return pl.BlockSpec(shape, lambda m: (0, 0), pipeline_mode=pl.Buffered(1))
    return pl.BlockSpec(shape, lambda m: (0, 0))


# ---------------------------------------------------------------------------
# Fused forward.
# ---------------------------------------------------------------------------
def fused_mlp_forward(x_flat, prepared, *, tile_m=None):
    """y = Linear_n(...ReLU(Linear_1(x))...) in a single pallas_call."""
    weights, biases = prepared.weights, prepared.biases
    num_layers = len(weights)
    compute_dtype = weights[0].dtype
    itemsize = compute_dtype.itemsize

    B, K0 = x_flat.shape
    assert K0 == prepared.in_features, (K0, prepared.in_features)
    k0_p = weights[0].shape[0]
    n_last_p = weights[-1].shape[1]

    if tile_m is None:
        tile_m, m_pad = _choose_tiling(B, itemsize)
    else:
        tile_m = max(8, _round_up(tile_m, 16 if itemsize < 4 else 8))
        m_pad = _round_up(B, tile_m)
    grid_m = m_pad // tile_m

    # Cast x once; pad rows/cols only when actually required.
    if m_pad != B or k0_p != K0:
        x_p = jnp.zeros((m_pad, k0_p), compute_dtype)
        x_p = x_p.at[:B, :K0].set(x_flat.astype(compute_dtype))
    else:
        x_p = x_flat.astype(compute_dtype)

    kernel = functools.partial(
        _fused_mlp_kernel, num_layers=num_layers, compute_dtype=compute_dtype)

    # Advisory cost estimate for XLA's scheduler around the custom call.
    flops = 2 * m_pad * sum(w.shape[0] * w.shape[1] for w in weights)
    w_bytes = (sum(w.size * w.dtype.itemsize for w in weights)
               + sum(b.size * b.dtype.itemsize for b in biases))
    bytes_accessed = (x_p.size * x_p.dtype.itemsize + w_bytes
                      + m_pad * n_last_p * 4)
    cost = pl.CostEstimate(flops=flops, transcendentals=0,
                           bytes_accessed=bytes_accessed)

    x_tile_bytes = tile_m * k0_p * itemsize
    out_tile_bytes = tile_m * n_last_p * 4

    def call(single_buffer):
        in_specs = [pl.BlockSpec((tile_m, k0_p), lambda m: (m, 0))]
        for w in weights:
            in_specs.append(_resident_spec(w.shape, single_buffer))
        for b in biases:
            in_specs.append(_resident_spec(b.shape, single_buffer))

        # Working-set estimate: double-buffered x/out tiles + resident params.
        weight_bufs = 1 if single_buffer else 2
        vmem_estimate = 2 * (x_tile_bytes + out_tile_bytes) + weight_bufs * w_bytes
        compiler_kwargs = dict(dimension_semantics=("parallel",))
        if vmem_estimate > 14 * 1024 * 1024:   # past v5e's 16 MiB scoped default
            compiler_kwargs["vmem_limit_bytes"] = min(
                int(1.5 * vmem_estimate) + (1 << 20), 64 * 1024 * 1024)

        return pl.pallas_call(
            kernel,
            out_shape=jax.ShapeDtypeStruct((m_pad, n_last_p), jnp.float32),
            grid_spec=pltpu.PrefetchScalarGridSpec(
                num_scalar_prefetch=0,
                grid=(grid_m,),
                in_specs=in_specs,
                out_specs=pl.BlockSpec((tile_m, n_last_p), lambda m: (m, 0)),
            ),
            compiler_params=pltpu.CompilerParams(**compiler_kwargs),
            cost_estimate=cost,
        )(x_p, *weights, *biases)

    global _SINGLE_BUFFER_WEIGHTS
    if _SINGLE_BUFFER_WEIGHTS:
        try:
            out_p = call(True)
        except Exception:
            # pipeline_mode=pl.Buffered(1) not supported by this JAX/Mosaic;
            # fall back to the default double-buffered (still correct) specs.
            _SINGLE_BUFFER_WEIGHTS = False
            out_p = call(False)
    else:
        out_p = call(False)

    return out_p[:B, :prepared.out_features]


def fc_cifar10_forward(x_nchw, prepared, **kwargs):
    """nn.Flatten() -> [Linear(+ReLU)] * n -> Linear(last, 10), fused."""
    B = x_nchw.shape[0]
    return fused_mlp_forward(x_nchw.reshape(B, -1), prepared, **kwargs)


# ---------------------------------------------------------------------------
# Deterministic init matching the PyTorch module's layer shapes.
# ---------------------------------------------------------------------------
def init_fc_cifar10_params(key, depth, width, last):
    """Returns a list of (W_t, b) with W_t stored as (in_features, out_features)."""
    dims = [32 * 32 * 3, width]
    for i in range(depth - 2):                        # self.features
        dims.append(width if i != depth - 3 else last)
    dims.append(10)                                   # out_features

    params = []
    for i in range(len(dims) - 1):
        fan_in, fan_out = dims[i], dims[i + 1]
        key, kw, kb = jax.random.split(key, 3)
        bound = 1.0 / jnp.sqrt(fan_in)
        w_t = jax.random.uniform(kw, (fan_in, fan_out), jnp.float32, -bound, bound)
        b = jax.random.uniform(kb, (fan_out,), jnp.float32, -bound, bound)
        params.append((w_t, b))
    return params


if __name__ == "__main__":
    # Module-consistent small config: depth=4, width=128, last=64.
    depth, width, last = 4, 128, 64
    batch = 2

    key = jax.random.PRNGKey(0)
    key, kx = jax.random.split(key)
    x = jax.random.normal(kx, (batch, 3, 32, 32), jnp.float32)  # NCHW CIFAR-sized
    params = init_fc_cifar10_params(key, depth, width, last)

    # One-time padded/cast parameter caches (hoisted out of the forward path).
    prepared_bf16 = prepare_params(params, compute_dtype=jnp.bfloat16)  # default
    prepared_f32 = prepare_params(params, compute_dtype=jnp.float32)    # exact check
    jax.block_until_ready((prepared_bf16, prepared_f32))

    # ---- f32 operand path: exact match to the plain-JAX reference. ----
    out_f32 = fc_cifar10_forward(x, prepared_f32)
    out_f32 = jax.block_until_ready(out_f32)
    assert out_f32.shape == (batch, 10), out_f32.shape

    ref = x.reshape(batch, -1)
    for i, (w_t, b) in enumerate(params):
        ref = ref @ w_t + b
        if i < len(params) - 1:
            ref = jnp.maximum(ref, 0.0)
    assert jnp.allclose(out_f32, ref, atol=1e-4, rtol=1e-4)

    # ---- bf16 operands (default deployment path), f32 accumulation. ----
    out_bf16 = fc_cifar10_forward(x, prepared_bf16)
    out_bf16 = jax.block_until_ready(out_bf16)
    ref_bf = x.reshape(batch, -1).astype(jnp.bfloat16)
    for i, (w_t, b) in enumerate(params):
        ref_bf = jnp.dot(ref_bf, w_t.astype(jnp.bfloat16),
                         preferred_element_type=jnp.float32) + b
        if i < len(params) - 1:
            ref_bf = jnp.maximum(ref_bf, 0.0).astype(jnp.bfloat16)
    assert jnp.allclose(out_bf16, ref_bf, atol=2e-2, rtol=2e-2)

    # ---- larger batch exercises the multi-tile ("parallel" megacore) path. ----
    xb = jax.random.normal(jax.random.PRNGKey(1), (96, 3, 32, 32), jnp.float32)
    out_big = jax.block_until_ready(fc_cifar10_forward(xb, prepared_bf16))
    assert out_big.shape == (96, 10)
    assert bool(jnp.all(jnp.isfinite(out_big)))

    print("KERNEL_OK")
</pallas_src>

<mosaic_0001>
module attributes {stable_mosaic.version = 11 : i64} {
  func.func @_fused_mlp_kernel(%arg0: i32, %arg1: memref<2x3072xf32, #tpu.memory_space<vmem>>, %arg2: memref<3072x128xf32, #tpu.memory_space<vmem>>, %arg3: memref<128x128xf32, #tpu.memory_space<vmem>>, %arg4: memref<128x128xf32, #tpu.memory_space<vmem>>, %arg5: memref<128x128xf32, #tpu.memory_space<vmem>>, %arg6: memref<1x128xf32, #tpu.memory_space<vmem>>, %arg7: memref<1x128xf32, #tpu.memory_space<vmem>>, %arg8: memref<1x128xf32, #tpu.memory_space<vmem>>, %arg9: memref<1x128xf32, #tpu.memory_space<vmem>>, %arg10: memref<2x128xf32, #tpu.memory_space<vmem>>) attributes {dimension_semantics = [#tpu.dimension_semantics<parallel>], iteration_bounds = array<i64: 1>, scalar_prefetch = 0 : i64, scratch_operands = 0 : i64, tpu.core_type = #tpu.core_type<tc>, window_params = [{transform_indices = @transform_0, window_bounds = array<i64: 2, 3072>}, {pipeline_mode = #tpu.pipeline_mode<synchronous>, transform_indices = @transform_1, window_bounds = array<i64: 3072, 128>}, {pipeline_mode = #tpu.pipeline_mode<synchronous>, transform_indices = @transform_2, window_bounds = array<i64: 128, 128>}, {pipeline_mode = #tpu.pipeline_mode<synchronous>, transform_indices = @transform_3, window_bounds = array<i64: 128, 128>}, {pipeline_mode = #tpu.pipeline_mode<synchronous>, transform_indices = @transform_4, window_bounds = array<i64: 128, 128>}, {pipeline_mode = #tpu.pipeline_mode<synchronous>, transform_indices = @transform_5, window_bounds = array<i64: 1, 128>}, {pipeline_mode = #tpu.pipeline_mode<synchronous>, transform_indices = @transform_6, window_bounds = array<i64: 1, 128>}, {pipeline_mode = #tpu.pipeline_mode<synchronous>, transform_indices = @transform_7, window_bounds = array<i64: 1, 128>}, {pipeline_mode = #tpu.pipeline_mode<synchronous>, transform_indices = @transform_8, window_bounds = array<i64: 1, 128>}, {transform_indices = @transform_9, window_bounds = array<i64: 2, 128>}]} {
    %c0 = arith.constant 0 : index
    %c0_0 = arith.constant 0 : index
    %0 = vector.load %arg1[%c0, %c0_0] : memref<2x3072xf32, #tpu.memory_space<vmem>>, vector<2x3072xf32>
    %c0_1 = arith.constant 0 : index
    %c0_2 = arith.constant 0 : index
    %1 = vector.load %arg2[%c0_1, %c0_2] : memref<3072x128xf32, #tpu.memory_space<vmem>>, vector<3072x128xf32>
    %cst = arith.constant dense<0.000000e+00> : vector<2x128xf32>
    %2 = tpu.matmul %0, %1, %cst {dimension_numbers = #tpu.dot_dimension_numbers<[1], [0], [0], [1], [0, 0, 1, 1], [], []>} : vector<2x3072xf32>, vector<3072x128xf32>, vector<2x128xf32> -> vector<2x128xf32>
    %c0_3 = arith.constant 0 : index
    %c0_4 = arith.constant 0 : index
    %3 = vector.load %arg6[%c0_3, %c0_4] : memref<1x128xf32, #tpu.memory_space<vmem>>, vector<1x128xf32>
    %4 = vector.broadcast %3 : vector<1x128xf32> to vector<2x128xf32>
    %5 = arith.addf %2, %4 : vector<2x128xf32>
    %cst_5 = arith.constant 0.000000e+00 : f32
    %6 = vector.broadcast %cst_5 : f32 to vector<2x128xf32>
    %7 = arith.maximumf %5, %6 : vector<2x128xf32>
    %c0_6 = arith.constant 0 : index
    %c0_7 = arith.constant 0 : index
    %8 = vector.load %arg3[%c0_6, %c0_7] : memref<128x128xf32, #tpu.memory_space<vmem>>, vector<128x128xf32>
    %cst_8 = arith.constant dense<0.000000e+00> : vector<2x128xf32>
    %9 = tpu.matmul %7, %8, %cst_8 {dimension_numbers = #tpu.dot_dimension_numbers<[1], [0], [0], [1], [0, 0, 1, 1], [], []>} : vector<2x128xf32>, vector<128x128xf32>, vector<2x128xf32> -> vector<2x128xf32>
    %c0_9 = arith.constant 0 : index
    %c0_10 = arith.constant 0 : index
    %10 = vector.load %arg7[%c0_9, %c0_10] : memref<1x128xf32, #tpu.memory_space<vmem>>, vector<1x128xf32>
    %11 = vector.broadcast %10 : vector<1x128xf32> to vector<2x128xf32>
    %12 = arith.addf %9, %11 : vector<2x128xf32>
    %cst_11 = arith.constant 0.000000e+00 : f32
    %13 = vector.broadcast %cst_11 : f32 to vector<2x128xf32>
    %14 = arith.maximumf %12, %13 : vector<2x128xf32>
    %c0_12 = arith.constant 0 : index
    %c0_13 = arith.constant 0 : index
    %15 = vector.load %arg4[%c0_12, %c0_13] : memref<128x128xf32, #tpu.memory_space<vmem>>, vector<128x128xf32>
    %cst_14 = arith.constant dense<0.000000e+00> : vector<2x128xf32>
    %16 = tpu.matmul %14, %15, %cst_14 {dimension_numbers = #tpu.dot_dimension_numbers<[1], [0], [0], [1], [0, 0, 1, 1], [], []>} : vector<2x128xf32>, vector<128x128xf32>, vector<2x128xf32> -> vector<2x128xf32>
    %c0_15 = arith.constant 0 : index
    %c0_16 = arith.constant 0 : index
    %17 = vector.load %arg8[%c0_15, %c0_16] : memref<1x128xf32, #tpu.memory_space<vmem>>, vector<1x128xf32>
    %18 = vector.broadcast %17 : vector<1x128xf32> to vector<2x128xf32>
    %19 = arith.addf %16, %18 : vector<2x128xf32>
    %cst_17 = arith.constant 0.000000e+00 : f32
    %20 = vector.broadcast %cst_17 : f32 to vector<2x128xf32>
    %21 = arith.maximumf %19, %20 : vector<2x128xf32>
    %c0_18 = arith.constant 0 : index
    %c0_19 = arith.constant 0 : index
    %22 = vector.load %arg5[%c0_18, %c0_19] : memref<128x128xf32, #tpu.memory_space<vmem>>, vector<128x128xf32>
    %cst_20 = arith.constant dense<0.000000e+00> : vector<2x128xf32>
    %23 = tpu.matmul %21, %22, %cst_20 {dimension_numbers = #tpu.dot_dimension_numbers<[1], [0], [0], [1], [0, 0, 1, 1], [], []>} : vector<2x128xf32>, vector<128x128xf32>, vector<2x128xf32> -> vector<2x128xf32>
    %c0_21 = arith.constant 0 : index
    %c0_22 = arith.constant 0 : index
    %24 = vector.load %arg9[%c0_21, %c0_22] : memref<1x128xf32, #tpu.memory_space<vmem>>, vector<1x128xf32>
    %25 = vector.broadcast %24 : vector<1x128xf32> to vector<2x128xf32>
    %26 = arith.addf %23, %25 : vector<2x128xf32>
    %c0_23 = arith.constant 0 : index
    %c0_24 = arith.constant 0 : index
    %27 = vector.load %arg10[%c0_23, %c0_24] : memref<2x128xf32, #tpu.memory_space<vmem>>, vector<2x128xf32>
    tpu.vector_store %arg10[%c0_23, %c0_24], %26 {strides = array<i32>} : memref<2x128xf32, #tpu.memory_space<vmem>>, vector<2x128xf32>,
    return
  }
  func.func @transform_0(%arg0: i32) -> (i32, i32) {
    %c0_i32 = arith.constant 0 : i32
    %c0_i32_0 = arith.constant 0 : i32
    return %arg0, %c0_i32 : i32, i32
  }
  func.func @transform_1(%arg0: i32) -> (i32, i32) {
    %c0_i32 = arith.constant 0 : i32
    %c0_i32_0 = arith.constant 0 : i32
    %c0_i32_1 = arith.constant 0 : i32
    return %c0_i32, %c0_i32_0 : i32, i32
  }
  func.func @transform_2(%arg0: i32) -> (i32, i32) {
    %c0_i32 = arith.constant 0 : i32
    %c0_i32_0 = arith.constant 0 : i32
    %c0_i32_1 = arith.constant 0 : i32
    return %c0_i32, %c0_i32_0 : i32, i32
  }
  func.func @transform_3(%arg0: i32) -> (i32, i32) {
    %c0_i32 = arith.constant 0 : i32
    %c0_i32_0 = arith.constant 0 : i32
    %c0_i32_1 = arith.constant 0 : i32
    return %c0_i32, %c0_i32_0 : i32, i32
  }
  func.func @transform_4(%arg0: i32) -> (i32, i32) {
    %c0_i32 = arith.constant 0 : i32
    %c0_i32_0 = arith.constant 0 : i32
    %c0_i32_1 = arith.constant 0 : i32
    return %c0_i32, %c0_i32_0 : i32, i32
  }
  func.func @transform_5(%arg0: i32) -> (i32, i32) {
    %c0_i32 = arith.constant 0 : i32
    %c0_i32_0 = arith.constant 0 : i32
    %c0_i32_1 = arith.constant 0 : i32
    return %c0_i32, %c0_i32_0 : i32, i32
  }
  func.func @transform_6(%arg0: i32) -> (i32, i32) {
    %c0_i32 = arith.constant 0 : i32
    %c0_i32_0 = arith.constant 0 : i32
    %c0_i32_1 = arith.constant 0 : i32
    return %c0_i32, %c0_i32_0 : i32, i32
  }
  func.func @transform_7(%arg0: i32) -> (i32, i32) {
    %c0_i32 = arith.constant 0 : i32
    %c0_i32_0 = arith.constant 0 : i32
    %c0_i32_1 = arith.constant 0 : i32
    return %c0_i32, %c0_i32_0 : i32, i32
  }
  func.func @transform_8(%arg0: i32) -> (i32, i32) {
    %c0_i32 = arith.constant 0 : i32
    %c0_i32_0 = arith.constant 0 : i32
    %c0_i32_1 = arith.constant 0 : i32
    return %c0_i32, %c0_i32_0 : i32, i32
  }
  func.func @transform_9(%arg0: i32) -> (i32, i32) {
    %c0_i32 = arith.constant 0 : i32
    %c0_i32_0 = arith.constant 0 : i32
    return %arg0, %c0_i32 : i32, i32
  }
}

module attributes {stable_mosaic.version = 11 : i64} {
  func.func @_fused_mlp_kernel(%arg0: i32, %arg1: memref<2x3072xf32, #tpu.memory_space<vmem>>, %arg2: memref<3072x128xf32, #tpu.memory_space<vmem>>, %arg3: memref<128x128xf32, #tpu.memory_space<vmem>>, %arg4: memref<128x128xf32, #tpu.memory_space<vmem>>, %arg5: memref<128x128xf32, #tpu.memory_space<vmem>>, %arg6: memref<1x128xf32, #tpu.memory_space<vmem>>, %arg7: memref<1x128xf32, #tpu.memory_space<vmem>>, %arg8: memref<1x128xf32, #tpu.memory_space<vmem>>, %arg9: memref<1x128xf32, #tpu.memory_space<vmem>>, %arg10: memref<2x128xf32, #tpu.memory_space<vmem>>) attributes {dimension_semantics = [#tpu.dimension_semantics<parallel>], iteration_bounds = array<i64: 1>, scalar_prefetch = 0 : i64, scratch_operands = 0 : i64, tpu.core_type = #tpu.core_type<tc>, window_params = [{transform_indices = @transform_0, window_bounds = array<i64: 2, 3072>}, {pipeline_mode = #tpu.pipeline_mode<synchronous>, transform_indices = @transform_1, window_bounds = array<i64: 3072, 128>}, {pipeline_mode = #tpu.pipeline_mode<synchronous>, transform_indices = @transform_2, window_bounds = array<i64: 128, 128>}, {pipeline_mode = #tpu.pipeline_mode<synchronous>, transform_indices = @transform_3, window_bounds = array<i64: 128, 128>}, {pipeline_mode = #tpu.pipeline_mode<synchronous>, transform_indices = @transform_4, window_bounds = array<i64: 128, 128>}, {pipeline_mode = #tpu.pipeline_mode<synchronous>, transform_indices = @transform_5, window_bounds = array<i64: 1, 128>}, {pipeline_mode = #tpu.pipeline_mode<synchronous>, transform_indices = @transform_6, window_bounds = array<i64: 1, 128>}, {pipeline_mode = #tpu.pipeline_mode<synchronous>, transform_indices = @transform_7, window_bounds = array<i64: 1, 128>}, {pipeline_mode = #tpu.pipeline_mode<synchronous>, transform_indices = @transform_8, window_bounds = array<i64: 1, 128>}, {transform_indices = @transform_9, window_bounds = array<i64: 2, 128>}]} {
    %c0 = arith.constant 0 : index
    %c0_0 = arith.constant 0 : index
    %0 = vector.load %arg1[%c0, %c0_0] : memref<2x3072xf32, #tpu.memory_space<vmem>>, vector<2x3072xf32>
    %c0_1 = arith.constant 0 : index
    %c0_2 = arith.constant 0 : index
    %1 = vector.load %arg2[%c0_1, %c0_2] : memref<3072x128xf32, #tpu.memory_space<vmem>>, vector<3072x128xf32>
    %cst = arith.constant dense<0.000000e+00> : vector<2x128xf32>
    %2 = tpu.matmul %0, %1, %cst {dimension_numbers = #tpu.dot_dimension_numbers<[1], [0], [0], [1], [0, 0, 1, 1], [], []>} : vector<2x3072xf32>, vector<3072x128xf32>, vector<2x128xf32> -> vector<2x128xf32>
    %c0_3 = arith.constant 0 : index
    %c0_4 = arith.constant 0 : index
    %3 = vector.load %arg6[%c0_3, %c0_4] : memref<1x128xf32, #tpu.memory_space<vmem>>, vector<1x128xf32>
    %4 = vector.broadcast %3 : vector<1x128xf32> to vector<2x128xf32>
    %5 = arith.addf %2, %4 : vector<2x128xf32>
    %cst_5 = arith.constant 0.000000e+00 : f32
    %6 = vector.broadcast %cst_5 : f32 to vector<2x128xf32>
    %7 = arith.maximumf %5, %6 : vector<2x128xf32>
    %c0_6 = arith.constant 0 : index
    %c0_7 = arith.constant 0 : index
    %8 = vector.load %arg3[%c0_6, %c0_7] : memref<128x128xf32, #tpu.memory_space<vmem>>, vector<128x128xf32>
    %cst_8 = arith.constant dense<0.000000e+00> : vector<2x128xf32>
    %9 = tpu.matmul %7, %8, %cst_8 {dimension_numbers = #tpu.dot_dimension_numbers<[1], [0], [0], [1], [0, 0, 1, 1], [], []>} : vector<2x128xf32>, vector<128x128xf32>, vector<2x128xf32> -> vector<2x128xf32>
    %c0_9 = arith.constant 0 : index
    %c0_10 = arith.constant 0 : index
    %10 = vector.load %arg7[%c0_9, %c0_10] : memref<1x128xf32, #tpu.memory_space<vmem>>, vector<1x128xf32>
    %11 = vector.broadcast %10 : vector<1x128xf32> to vector<2x128xf32>
    %12 = arith.addf %9, %11 : vector<2x128xf32>
    %cst_11 = arith.constant 0.000000e+00 : f32
    %13 = vector.broadcast %cst_11 : f32 to vector<2x128xf32>
    %14 = arith.maximumf %12, %13 : vector<2x128xf32>
    %c0_12 = arith.constant 0 : index
    %c0_13 = arith.constant 0 : index
    %15 = vector.load %arg4[%c0_12, %c0_13] : memref<128x128xf32, #tpu.memory_space<vmem>>, vector<128x128xf32>
    %cst_14 = arith.constant dense<0.000000e+00> : vector<2x128xf32>
    %16 = tpu.matmul %14, %15, %cst_14 {dimension_numbers = #tpu.dot_dimension_numbers<[1], [0], [0], [1], [0, 0, 1, 1], [], []>} : vector<2x128xf32>, vector<128x128xf32>, vector<2x128xf32> -> vector<2x128xf32>
    %c0_15 = arith.constant 0 : index
    %c0_16 = arith.constant 0 : index
    %17 = vector.load %arg8[%c0_15, %c0_16] : memref<1x128xf32, #tpu.memory_space<vmem>>, vector<1x128xf32>
    %18 = vector.broadcast %17 : vector<1x128xf32> to vector<2x128xf32>
    %19 = arith.addf %16, %18 : vector<2x128xf32>
    %cst_17 = arith.constant 0.000000e+00 : f32
    %20 = vector.broadcast %cst_17 : f32 to vector<2x128xf32>
    %21 = arith.maximumf %19, %20 : vector<2x128xf32>
    %c0_18 = arith.constant 0 : index
    %c0_19 = arith.constant 0 : index
    %22 = vector.load %arg5[%c0_18, %c0_19] : memref<128x128xf32, #tpu.memory_space<vmem>>, vector<128x128xf32>
    %cst_20 = arith.constant dense<0.000000e+00> : vector<2x128xf32>
    %23 = tpu.matmul %21, %22, %cst_20 {dimension_numbers = #tpu.dot_dimension_numbers<[1], [0], [0], [1], [0, 0, 1, 1], [], []>} : vector<2x128xf32>, vector<128x128xf32>, vector<2x128xf32> -> vector<2x128xf32>
    %c0_21 = arith.constant 0 : index
    %c0_22 = arith.constant 0 : index
    %24 = vector.load %arg9[%c0_21, %c0_22] : memref<1x128xf32, #tpu.memory_space<vmem>>, vector<1x128xf32>
    %25 = vector.broadcast %24 : vector<1x128xf32> to vector<2x128xf32>
    %26 = arith.addf %23, %25 : vector<2x128xf32>
    %c0_23 = arith.constant 0 : index
    %c0_24 = arith.constant 0 : index
    %27 = vector.load %arg10[%c0_23, %c0_24] : memref<2x128xf32, #tpu.memory_space<vmem>>, vector<2x128xf32>
    tpu.vector_store %arg10[%c0_23, %c0_24], %26 {strides = array<i32>} : memref<2x128xf32, #tpu.memory_space<vmem>>, vector<2x128xf32>,
    return
  }
  func.func @transform_0(%arg0: i32) -> (i32, i32) {
    %c0_i32 = arith.constant 0 : i32
    %c0_i32_0 = arith.constant 0 : i32
    return %arg0, %c0_i32 : i32, i32
  }
  func.func @transform_1(%arg0: i32) -> (i32, i32) {
    %c0_i32 = arith.constant 0 : i32
    %c0_i32_0 = arith.constant 0 : i32
    %c0_i32_1 = arith.constant 0 : i32
    return %c0_i32, %c0_i32_0 : i32, i32
  }
  func.func @transform_2(%arg0: i32) -> (i32, i32) {
    %c0_i32 = arith.constant 0 : i32
    %c0_i32_0 = arith.constant 0 : i32
    %c0_i32_1 = arith.constant 0 : i32
    return %c0_i32, %c0_i32_0 : i32, i32
  }
  func.func @transform_3(%arg0: i32) -> (i32, i32) {
    %c0_i32 = arith.constant 0 : i32
    %c0_i32_0 = arith.constant 0 : i32
    %c0_i32_1 = arith.constant 0 : i32
    return %c0_i32, %c0_i32_0 : i32, i32
  }
  func.func @transform_4(%arg0: i32) -> (i32, i32) {
    %c0_i32 = arith.constant 0 : i32
    %c0_i32_0 = arith.constant 0 : i32
    %c0_i32_1 = arith.constant 0 : i32
    return %c0_i32, %c0_i32_0 : i32, i32
  }
  func.func @transform_5(%arg0: i32) -> (i32, i32) {
    %c0_i32 = arith.constant 0 : i32
    %c0_i32_0 = arith.constant 0 : i32
    %c0_i32_1 = arith.constant 0 : i32
    return %c0_i32, %c0_i32_0 : i32, i32
  }
  func.func @transform_6(%arg0: i32) -> (i32, i32) {
    %c0_i32 = arith.constant 0 : i32
    %c0_i32_0 = arith.constant 0 : i32
    %c0_i32_1 = arith.constant 0 : i32
    return %c0_i32, %c0_i32_0 : i32, i32
  }
  func.func @transform_7(%arg0: i32) -> (i32, i32) {
    %c0_i32 = arith.constant 0 : i32
    %c0_i32_0 = arith.constant 0 : i32
    %c0_i32_1 = arith.constant 0 : i32
    return %c0_i32, %c0_i32_0 : i32, i32
  }
  func.func @transform_8(%arg0: i32) -> (i32, i32) {
    %c0_i32 = arith.constant 0 : i32
    %c0_i32_0 = arith.constant 0 : i32
    %c0_i32_1 = arith.constant 0 : i32
    return %c0_i32, %c0_i32_0 : i32, i32
  }
  func.func @transform_9(%arg0: i32) -> (i32, i32) {
    %c0_i32 = arith.constant 0 : i32
    %c0_i32_0 = arith.constant 0 : i32
    return %arg0, %c0_i32 : i32, i32
  }
}

</mosaic_0001>

<llo_original>
// kernel: tpu_custom_call.1
$region0: #{tpu_custom_call.1}
  #allocation0 [shape = 'u32[]', space=smem, size = 0x4, offset = 0x4, fixed_abs, tag = 'smem constant byte address 0x4 - core index']
  #allocation1 [shape = 'u32[144,128]{1,0:T(1,128)}', space=vmem, size = 0x12000, scoped, tag = 'internal scratch']
  %s0 = inlined_call_operand.hbm [shape: f32[2,3072], index: 0, kind: input, shape index: {}]
  %s1 = inlined_call_operand.hbm [shape: f32[3072,128], index: 1, kind: input, shape index: {}]
  %s2 = inlined_call_operand.hbm [shape: f32[128,128], index: 2, kind: input, shape index: {}]
  %s3 = inlined_call_operand.hbm [shape: f32[128,128], index: 3, kind: input, shape index: {}]
  %s4 = inlined_call_operand.hbm [shape: f32[128,128], index: 4, kind: input, shape index: {}]
  %s5 = inlined_call_operand.hbm [shape: f32[1,128], index: 5, kind: input, shape index: {}]
  %s6 = inlined_call_operand.hbm [shape: f32[1,128], index: 6, kind: input, shape index: {}]
  %s7 = inlined_call_operand.hbm [shape: f32[1,128], index: 7, kind: input, shape index: {}]
  %s8 = inlined_call_operand.hbm [shape: f32[1,128], index: 8, kind: input, shape index: {}]
  %s9 = inlined_call_operand.hbm [shape: f32[2,128], index: 9, kind: output, shape index: {}]
  %s10 = sld [smem:[#allocation0]]
  $region82: #{tpu_custom_call.1} parent=0
    _
  %s12 = ssub.s32 1, %s10
  %s13 = scalar_select 0, %s12, %s10
  $region1: #{tpu_custom_call.1} parent=0
    #allocation2 [shape = 'u8[24576]{0}', space=vmem, size = 0x6000, scoped, tag = 'input window, operand 0, single buffered']
    #allocation3 [shape = 's32[1]{0}', space=sflag, size = 0x4, scoped, tag = 'scoped memory for tpu_custom_call.1']
    #allocation4 [shape = 's32[1]{0}', space=sflag, size = 0x4, scoped, tag = 'scoped memory for tpu_custom_call.1']
    #allocation5 [shape = 'u8[1572864]{0}', space=vmem, size = 0x180000, scoped, tag = 'input window, operand 1, single buffered']
    #allocation6 [shape = 's32[1]{0}', space=sflag, size = 0x4, scoped, tag = 'scoped memory for tpu_custom_call.1']
    #allocation7 [shape = 'u8[65536]{0}', space=vmem, size = 0x10000, scoped, tag = 'input window, operand 2, single buffered']
    #allocation8 [shape = 'u8[65536]{0}', space=vmem, size = 0x10000, scoped, tag = 'input window, operand 3, single buffered']
    #allocation9 [shape = 's32[1]{0}', space=sflag, size = 0x4, scoped, tag = 'scoped memory for tpu_custom_call.1']
    #allocation10 [shape = 'u8[65536]{0}', space=vmem, size = 0x10000, scoped, tag = 'input window, operand 4, single buffered']
    #allocation11 [shape = 'u8[512]{0}', space=vmem, size = 0x400, scoped, tag = 'input window, operand 5, single buffered']
    #allocation12 [shape = 's32[1]{0}', space=sflag, size = 0x4, scoped, tag = 'scoped memory for tpu_custom_call.1']
    #allocation13 [shape = 'u8[512]{0}', space=vmem, size = 0x400, scoped, tag = 'input window, operand 6, single buffered']
    #allocation14 [shape = 'u8[512]{0}', space=vmem, size = 0x400, scoped, tag = 'input window, operand 7, single buffered']
    #allocation15 [shape = 's32[1]{0}', space=sflag, size = 0x4, scoped, tag = 'scoped memory for tpu_custom_call.1']
    #allocation16 [shape = 'u8[512]{0}', space=vmem, size = 0x400, scoped, tag = 'input window, operand 8, single buffered']
    #allocation17 [shape = 'u8[1024]{0}', space=vmem, size = 0x400, scoped, tag = 'output window, operand 0, single buffered']
    %14 = vsyncpa [#allocation3], 0
    %15 = vsyncpa [#allocation6], 0
    %16 = vsyncpa [#allocation9], 0
    %17 = vsyncpa [#allocation12], 0
    %18 = vsyncpa [#allocation15], 0
    %19 = vsyncpa [#allocation4], 0
    // Predicated region
    $region2: #{tpu_custom_call.1} parent=1 // pred_check
      _
    $region3: #{tpu_custom_call.1} parent=1 // pred_check_branch
      %21 = sbr.rel (0) target = $region5
    $region4: #{tpu_custom_call.1} parent=1 // pred_region
      %s23 = ssub.s32 768, 768
      %24 = vsyncadd [#allocation3], %s23
      %s26 = sshll.u32 [#allocation2], 4
      %s27 = int_to_ptr.vmem [resolvable:$true] %s26
      %29 = dma.hbm_to_vmem [thread:$0]  %s0, 768, %s27, [#allocation3]
    $region5: #{tpu_custom_call.1} parent=1 // pred_fallthru
      _
    // Predicated region
    $region6: #{tpu_custom_call.1} parent=1 // pred_check
      _
    $region7: #{tpu_custom_call.1} parent=1 // pred_check_branch
      %31 = sbr.rel (0) target = $region9
    $region8: #{tpu_custom_call.1} parent=1 // pred_region
      %s33 = ssub.s32 49152, 49152
      %34 = vsyncadd [#allocation6], %s33
      %s35 = sshll.u32 [#allocation5], 4
      %s36 = int_to_ptr.vmem [resolvable:$true] %s35
      %41 = dma.hbm_to_vmem [thread:$0]  %s1, 49152, %s36, [#allocation6], 128, 128, 8
    $region9: #{tpu_custom_call.1} parent=1 // pred_fallthru
      _
    // Predicated region
    $region10: #{tpu_custom_call.1} parent=1 // pred_check
      _
    $region11: #{tpu_custom_call.1} parent=1 // pred_check_branch
      %43 = sbr.rel (0) target = $region13
    $region12: #{tpu_custom_call.1} parent=1 // pred_region
      %s45 = ssub.s32 2048, 2048
      %46 = vsyncadd [#allocation6], %s45
      %s47 = sshll.u32 [#allocation7], 4
      %s48 = int_to_ptr.vmem [resolvable:$true] %s47
      %53 = dma.hbm_to_vmem [thread:$0]  %s2, 2048, %s48, [#allocation6], 128, 128, 8
    $region13: #{tpu_custom_call.1} parent=1 // pred_fallthru
      _
    // Predicated region
    $region14: #{tpu_custom_call.1} parent=1 // pred_check
      _
    $region15: #{tpu_custom_call.1} parent=1 // pred_check_branch
      %55 = sbr.rel (0) target = $region17
    $region16: #{tpu_custom_call.1} parent=1 // pred_region
      %s57 = ssub.s32 2048, 2048
      %58 = vsyncadd [#allocation9], %s57
      %s59 = sshll.u32 [#allocation8], 4
      %s60 = int_to_ptr.vmem [resolvable:$true] %s59
      %65 = dma.hbm_to_vmem [thread:$0]  %s3, 2048, %s60, [#allocation9], 128, 128, 8
    $region17: #{tpu_custom_call.1} parent=1 // pred_fallthru
      _
    // Predicated region
    $region18: #{tpu_custom_call.1} parent=1 // pred_check
      _
    $region19: #{tpu_custom_call.1} parent=1 // pred_check_branch
      %67 = sbr.rel (0) target = $region21
    $region20: #{tpu_custom_call.1} parent=1 // pred_region
      %s69 = ssub.s32 2048, 2048
      %70 = vsyncadd [#allocation9], %s69
      %s71 = sshll.u32 [#allocation10], 4
      %s72 = int_to_ptr.vmem [resolvable:$true] %s71
      %77 = dma.hbm_to_vmem [thread:$0]  %s4, 2048, %s72, [#allocation9], 128, 128, 8
    $region21: #{tpu_custom_call.1} parent=1 // pred_fallthru
      _
    // Predicated region
    $region22: #{tpu_custom_call.1} parent=1 // pred_check
      _
    $region23: #{tpu_custom_call.1} parent=1 // pred_check_branch
      %79 = sbr.rel (0) target = $region25
    $region24: #{tpu_custom_call.1} parent=1 // pred_region
      %s81 = ssub.s32 16, 16
      %82 = vsyncadd [#allocation12], %s81
      %s84 = sshll.u32 [#allocation11], 4
      %s85 = int_to_ptr.vmem [resolvable:$true] %s84
      %87 = dma.hbm_to_vmem [thread:$0]  %s5, 16, %s85, [#allocation12]
    $region25: #{tpu_custom_call.1} parent=1 // pred_fallthru
      _
    // Predicated region
    $region26: #{tpu_custom_call.1} parent=1 // pred_check
      _
    $region27: #{tpu_custom_call.1} parent=1 // pred_check_branch
      %89 = sbr.rel (0) target = $region29
    $region28: #{tpu_custom_call.1} parent=1 // pred_region
      %s91 = ssub.s32 16, 16
      %92 = vsyncadd [#allocation12], %s91
      %s94 = sshll.u32 [#allocation13], 4
      %s95 = int_to_ptr.vmem [resolvable:$true] %s94
      %97 = dma.hbm_to_vmem [thread:$0]  %s6, 16, %s95, [#allocation12]
    $region29: #{tpu_custom_call.1} parent=1 // pred_fallthru
      _
    // Predicated region
    $region30: #{tpu_custom_call.1} parent=1 // pred_check
      _
    $region31: #{tpu_custom_call.1} parent=1 // pred_check_branch
      %99 = sbr.rel (0) target = $region33
    $region32: #{tpu_custom_call.1} parent=1 // pred_region
      %s101 = ssub.s32 16, 16
      %102 = vsyncadd [#allocation15], %s101
      %s104 = sshll.u32 [#allocation14], 4
      %s105 = int_to_ptr.vmem [resolvable:$true] %s104
      %107 = dma.hbm_to_vmem [thread:$0]  %s7, 16, %s105, [#allocation15]
    $region33: #{tpu_custom_call.1} parent=1 // pred_fallthru
      _
    // Predicated region
    $region34: #{tpu_custom_call.1} parent=1 // pred_check
      _
    $region35: #{tpu_custom_call.1} parent=1 // pred_check_branch
      %109 = sbr.rel (0) target = $region37
    $region36: #{tpu_custom_call.1} parent=1 // pred_region
      %s111 = ssub.s32 16, 16
      %112 = vsyncadd [#allocation15], %s111
      %s114 = sshll.u32 [#allocation16], 4
      %s115 = int_to_ptr.vmem [resolvable:$true] %s114
      %117 = dma.hbm_to_vmem [thread:$0]  %s8, 16, %s115, [#allocation15]
    $region37: #{tpu_custom_call.1} parent=1 // pred_fallthru
      _
    // Predicated region
    $region38: #{tpu_custom_call.1} parent=1 // pred_check
      _
    $region39: #{tpu_custom_call.1} parent=1 // pred_check_branch
      %119 = sbr.rel (0) target = $region41
    $region40: #{tpu_custom_call.1} parent=1 // pred_region
      %120 = dma.done [#allocation3], 768
    $region41: #{tpu_custom_call.1} parent=1 // pred_fallthru
      _
    // Predicated region
    $region42: #{tpu_custom_call.1} parent=1 // pred_check
      _
    $region43: #{tpu_custom_call.1} parent=1 // pred_check_branch
      %122 = sbr.rel (0) target = $region45
    $region44: #{tpu_custom_call.1} parent=1 // pred_region
      %123 = dma.done [#allocation6], 49152
    $region45: #{tpu_custom_call.1} parent=1 // pred_fallthru
      _
    // Predicated region
    $region46: #{tpu_custom_call.1} parent=1 // pred_check
      _
    $region47: #{tpu_custom_call.1} parent=1 // pred_check_branch
      %125 = sbr.rel (0) target = $region49
    $region48: #{tpu_custom_call.1} parent=1 // pred_region
      %126 = dma.done [#allocation6], 2048
    $region49: #{tpu_custom_call.1} parent=1 // pred_fallthru
      _
    // Predicated region
    $region50: #{tpu_custom_call.1} parent=1 // pred_check
      _
    $region51: #{tpu_custom_call.1} parent=1 // pred_check_branch
      %128 = sbr.rel (0) target = $region53
    $region52: #{tpu_custom_call.1} parent=1 // pred_region
      %129 = dma.done [#allocation9], 2048
    $region53: #{tpu_custom_call.1} parent=1 // pred_fallthru
      _
    // Predicated region
    $region54: #{tpu_custom_call.1} parent=1 // pred_check
      _
    $region55: #{tpu_custom_call.1} parent=1 // pred_check_branch
      %131 = sbr.rel (0) target = $region57
    $region56: #{tpu_custom_call.1} parent=1 // pred_region
      %132 = dma.done [#allocation9], 2048
    $region57: #{tpu_custom_call.1} parent=1 // pred_fallthru
      _
    // Predicated region
    $region58: #{tpu_custom_call.1} parent=1 // pred_check
      _
    $region59: #{tpu_custom_call.1} parent=1 // pred_check_branch
      %134 = sbr.rel (0) target = $region61
    $region60: #{tpu_custom_call.1} parent=1 // pred_region
      %135 = dma.done [#allocation12], 16
    $region61: #{tpu_custom_call.1} parent=1 // pred_fallthru
      _
    // Predicated region
    $region62: #{tpu_custom_call.1} parent=1 // pred_check
      _
    $region63: #{tpu_custom_call.1} parent=1 // pred_check_branch
      %137 = sbr.rel (0) target = $region65
    $region64: #{tpu_custom_call.1} parent=1 // pred_region
      %138 = dma.done [#allocation12], 16
    $region65: #{tpu_custom_call.1} parent=1 // pred_fallthru
      _
    // Predicated region
    $region66: #{tpu_custom_call.1} parent=1 // pred_check
      _
    $region67: #{tpu_custom_call.1} parent=1 // pred_check_branch
      %140 = sbr.rel (0) target = $region69
    $region68: #{tpu_custom_call.1} parent=1 // pred_region
      %141 = dma.done [#allocation15], 16
    $region69: #{tpu_custom_call.1} parent=1 // pred_fallthru
      _
    // Predicated region
    $region70: #{tpu_custom_call.1} parent=1 // pred_check
      _
    $region71: #{tpu_custom_call.1} parent=1 // pred_check_branch
      %143 = sbr.rel (0) target = $region73
    $region72: #{tpu_custom_call.1} parent=1 // pred_region
      %144 = dma.done [#allocation15], 16
    $region73: #{tpu_custom_call.1} parent=1 // pred_fallthru
      _
    %v145 = vld [vmem:[#allocation2] sm:$0xff]
    %v146 = vld [vmem:[#allocation2 + $0x8] sm:$0xff]
    %v147 = vld [vmem:[#allocation2 + $0x10] sm:$0xff]
    %v148 = vld [vmem:[#allocation2 + $0x18] sm:$0xff]
    %v149 = vld [vmem:[#allocation2 + $0x20] sm:$0xff]
    %v150 = vld [vmem:[#allocation2 + $0x28] sm:$0xff]
    %v151 = vld [vmem:[#allocation5] sm:$0xff]
    %v152 = vld [vmem:[#allocation5 + $0x8] sm:$0xff]
    %v153 = vld [vmem:[#allocation5 + $0x10] sm:$0xff]
    %v154 = vld [vmem:[#allocation5 + $0x18] sm:$0xff]
    %v155 = vld [vmem:[#allocation5 + $0x20] sm:$0xff]
    %v156 = vld [vmem:[#allocation5 + $0x28] sm:$0xff]
    %v157 = vld [vmem:[#allocation5 + $0x30] sm:$0xff]
    %v158 = vld [vmem:[#allocation5 + $0x38] sm:$0xff]
    %v159 = vld [vmem:[#allocation5 + $0x40] sm:$0xff]
    %v160 = vld [vmem:[#allocation5 + $0x48] sm:$0xff]
    %v161 = vld [vmem:[#allocation5 + $0x50] sm:$0xff]
    %v162 = vld [vmem:[#allocation5 + $0x58] sm:$0xff]
    %v163 = vld [vmem:[#allocation5 + $0x60] sm:$0xff]
    %v164 = vld [vmem:[#allocation5 + $0x68] sm:$0xff]
    %v165 = vld [vmem:[#allocation5 + $0x70] sm:$0xff]
    %v166 = vld [vmem:[#allocation5 + $0x78] sm:$0xff]
    %v167 = vld [vmem:[#allocation5 + $0x80] sm:$0xff]
    %v168 = vld [vmem:[#allocation5 + $0x88] sm:$0xff]
    %v169 = vld [vmem:[#allocation5 + $0x90] sm:$0xff]
    %v170 = vld [vmem:[#allocation5 + $0x98] sm:$0xff]
    %v171 = vld [vmem:[#allocation5 + $0xa0] sm:$0xff]
    %v172 = vld [vmem:[#allocation5 + $0xa8] sm:$0xff]
    %v173 = vld [vmem:[#allocation5 + $0xb0] sm:$0xff]
    %v174 = vld [vmem:[#allocation5 + $0xb8] sm:$0xff]
    %v175 = vld [vmem:[#allocation5 + $0xc0] sm:$0xff]
    %v176 = vld [vmem:[#allocation5 + $0xc8] sm:$0xff]
    %v177 = vld [vmem:[#allocation5 + $0xd0] sm:$0xff]
    %v178 = vld [vmem:[#allocation5 + $0xd8] sm:$0xff]
    %v179 = vld [vmem:[#allocation5 + $0xe0] sm:$0xff]
    %v180 = vld [vmem:[#allocation5 + $0xe8] sm:$0xff]
    %v181 = vld [vmem:[#allocation5 + $0xf0] sm:$0xff]
    %v182 = vld [vmem:[#allocation5 + $0xf8] sm:$0xff]
    %v183 = vld [vmem:[#allocation5 + $0x100] sm:$0xff]
    %v184 = vld [vmem:[#allocation5 + $0x108] sm:$0xff]
    %v185 = vld [vmem:[#allocation5 + $0x110] sm:$0xff]
    %v186 = vld [vmem:[#allocation5 + $0x118] sm:$0xff]
    %v187 = vld [vmem:[#allocation5 + $0x120] sm:$0xff]
    %v188 = vld [vmem:[#allocation5 + $0x128] sm:$0xff]
    %v189 = vld [vmem:[#allocation5 + $0x130] sm:$0xff]
    %v190 = vld [vmem:[#allocation5 + $0x138] sm:$0xff]
    %v191 = vld [vmem:[#allocation5 + $0x140] sm:$0xff]
    %v192 = vld [vmem:[#allocation5 + $0x148] sm:$0xff]
    %v193 = vld [vmem:[#allocation5 + $0x150] sm:$0xff]
    %v194 = vld [vmem:[#allocation5 + $0x158] sm:$0xff]
    %v195 = vld [vmem:[#allocation5 + $0x160] sm:$0xff]
    %v196 = vld [vmem:[#allocation5 + $0x168] sm:$0xff]
    %v197 = vld [vmem:[#allocation5 + $0x170] sm:$0xff]
    %v198 = vld [vmem:[#allocation5 + $0x178] sm:$0xff]
    %v199 = vld [vmem:[#allocation5 + $0x180] sm:$0xff]
    %v200 = vld [vmem:[#allocation5 + $0x188] sm:$0xff]
    %v201 = vld [vmem:[#allocation5 + $0x190] sm:$0xff]
    %v202 = vld [vmem:[#allocation5 + $0x198] sm:$0xff]
    %v203 = vld [vmem:[#allocation5 + $0x1a0] sm:$0xff]
    %v204 = vld [vmem:[#allocation5 + $0x1a8] sm:$0xff]
    %v205 = vld [vmem:[#allocation5 + $0x1b0] sm:$0xff]
    %v206 = vld [vmem:[#allocation5 + $0x1b8] sm:$0xff]
    %v207 = vld [vmem:[#allocation5 + $0x1c0] sm:$0xff]
    %v208 = vld [vmem:[#allocation5 + $0x1c8] sm:$0xff]
    %v209 = vld [vmem:[#allocation5 + $0x1d0] sm:$0xff]
    %v210 = vld [vmem:[#allocation5 + $0x1d8] sm:$0xff]
    %v211 = vld [vmem:[#allocation5 + $0x1e0] sm:$0xff]
    %v212 = vld [vmem:[#allocation5 + $0x1e8] sm:$0xff]
    %v213 = vld [vmem:[#allocation5 + $0x1f0] sm:$0xff]
    %v214 = vld [vmem:[#allocation5 + $0x1f8] sm:$0xff]
    %v215 = vld [vmem:[#allocation5 + $0x200] sm:$0xff]
    %v216 = vld [vmem:[#allocation5 + $0x208] sm:$0xff]
    %v217 = vld [vmem:[#allocation5 + $0x210] sm:$0xff]
    %v218 = vld [vmem:[#allocation5 + $0x218] sm:$0xff]
    %v219 = vld [vmem:[#allocation5 + $0x220] sm:$0xff]
    %v220 = vld [vmem:[#allocation5 + $0x228] sm:$0xff]
    %v221 = vld [vmem:[#allocation5 + $0x230] sm:$0xff]
    %v222 = vld [vmem:[#allocation5 + $0x238] sm:$0xff]
    %v223 = vld [vmem:[#allocation5 + $0x240] sm:$0xff]
    %v224 = vld [vmem:[#allocation5 + $0x248] sm:$0xff]
    %v225 = vld [vmem:[#allocation5 + $0x250] sm:$0xff]
    %v226 = vld [vmem:[#allocation5 + $0x258] sm:$0xff]
    %v227 = vld [vmem:[#allocation5 + $0x260] sm:$0xff]
    %v228 = vld [vmem:[#allocation5 + $0x268] sm:$0xff]
    %v229 = vld [vmem:[#allocation5 + $0x270] sm:$0xff]
    %v230 = vld [vmem:[#allocation5 + $0x278] sm:$0xff]
    %v231 = vld [vmem:[#allocation5 + $0x280] sm:$0xff]
    %v232 = vld [vmem:[#allocation5 + $0x288] sm:$0xff]
    %v233 = vld [vmem:[#allocation5 + $0x290] sm:$0xff]
    %v234 = vld [vmem:[#allocation5 + $0x298] sm:$0xff]
    %v235 = vld [vmem:[#allocation5 + $0x2a0] sm:$0xff]
    %v236 = vld [vmem:[#allocation5 + $0x2a8] sm:$0xff]
    %v237 = vld [vmem:[#allocation5 + $0x2b0] sm:$0xff]
    %v238 = vld [vmem:[#allocation5 + $0x2b8] sm:$0xff]
    %v239 = vld [vmem:[#allocation5 + $0x2c0] sm:$0xff]
    %v240 = vld [vmem:[#allocation5 + $0x2c8] sm:$0xff]
    %v241 = vld [vmem:[#allocation5 + $0x2d0] sm:$0xff]
    %v242 = vld [vmem:[#allocation5 + $0x2d8] sm:$0xff]
    %v243 = vld [vmem:[#allocation5 + $0x2e0] sm:$0xff]
    %v244 = vld [vmem:[#allocation5 + $0x2e8] sm:$0xff]
    %v245 = vld [vmem:[#allocation5 + $0x2f0] sm:$0xff]
    %v246 = vld [vmem:[#allocation5 + $0x2f8] sm:$0xff]
    %v247 = vld [vmem:[#allocation5 + $0x300] sm:$0xff]
    %v248 = vld [vmem:[#allocation5 + $0x308] sm:$0xff]
    %v249 = vld [vmem:[#allocation5 + $0x310] sm:$0xff]
    %v250 = vld [vmem:[#allocation5 + $0x318] sm:$0xff]
    %v251 = vld [vmem:[#allocation5 + $0x320] sm:$0xff]
    %v252 = vld [vmem:[#allocation5 + $0x328] sm:$0xff]
    %v253 = vld [vmem:[#allocation5 + $0x330] sm:$0xff]
    %v254 = vld [vmem:[#allocation5 + $0x338] sm:$0xff]
    %v255 = vld [vmem:[#allocation5 + $0x340] sm:$0xff]
    %v256 = vld [vmem:[#allocation5 + $0x348] sm:$0xff]
    %v257 = vld [vmem:[#allocation5 + $0x350] sm:$0xff]
    %v258 = vld [vmem:[#allocation5 + $0x358] sm:$0xff]
    %v259 = vld [vmem:[#allocation5 + $0x360] sm:$0xff]
    %v260 = vld [vmem:[#allocation5 + $0x368] sm:$0xff]
    %v261 = vld [vmem:[#allocation5 + $0x370] sm:$0xff]
    %v262 = vld [vmem:[#allocation5 + $0x378] sm:$0xff]
    %v263 = vld [vmem:[#allocation5 + $0x380] sm:$0xff]
    %v264 = vld [vmem:[#allocation5 + $0x388] sm:$0xff]
    %v265 = vld [vmem:[#allocation5 + $0x390] sm:$0xff]
    %v266 = vld [vmem:[#allocation5 + $0x398] sm:$0xff]
    %v267 = vld [vmem:[#allocation5 + $0x3a0] sm:$0xff]
    %v268 = vld [vmem:[#allocation5 + $0x3a8] sm:$0xff]
    %v269 = vld [vmem:[#allocation5 + $0x3b0] sm:$0xff]
    %v270 = vld [vmem:[#allocation5 + $0x3b8] sm:$0xff]
    %v271 = vld [vmem:[#allocation5 + $0x3c0] sm:$0xff]
    %v272 = vld [vmem:[#allocation5 + $0x3c8] sm:$0xff]
    %v273 = vld [vmem:[#allocation5 + $0x3d0] sm:$0xff]
    %v274 = vld [vmem:[#allocation5 + $0x3d8] sm:$0xff]
    %v275 = vld [vmem:[#allocation5 + $0x3e0] sm:$0xff]
    %v276 = vld [vmem:[#allocation5 + $0x3e8] sm:$0xff]
    %v277 = vld [vmem:[#allocation5 + $0x3f0] sm:$0xff]
    %v278 = vld [vmem:[#allocation5 + $0x3f8] sm:$0xff]
    %v279 = vld [vmem:[#allocation5 + $0x400] sm:$0xff]
    %v280 = vld [vmem:[#allocation5 + $0x408] sm:$0xff]
    %v281 = vld [vmem:[#allocation5 + $0x410] sm:$0xff]
    %v282 = vld [vmem:[#allocation5 + $0x418] sm:$0xff]
    %v283 = vld [vmem:[#allocation5 + $0x420] sm:$0xff]
    %v284 = vld [vmem:[#allocation5 + $0x428] sm:$0xff]
    %v285 = vld [vmem:[#allocation5 + $0x430] sm:$0xff]
    %v286 = vld [vmem:[#allocation5 + $0x438] sm:$0xff]
    %v287 = vld [vmem:[#allocation5 + $0x440] sm:$0xff]
    %v288 = vld [vmem:[#allocation5 + $0x448] sm:$0xff]
    %v289 = vld [vmem:[#allocation5 + $0x450] sm:$0xff]
    %v290 = vld [vmem:[#allocation5 + $0x458] sm:$0xff]
    %v291 = vld [vmem:[#allocation5 + $0x460] sm:$0xff]
    %v292 = vld [vmem:[#allocation5 + $0x468] sm:$0xff]
    %v293 = vld [vmem:[#allocation5 + $0x470] sm:$0xff]
    %v294 = vld [vmem:[#allocation5 + $0x478] sm:$0xff]
    %v295 = vld [vmem:[#allocation5 + $0x480] sm:$0xff]
    %v296 = vld [vmem:[#allocation5 + $0x488] sm:$0xff]
    %v297 = vld [vmem:[#allocation5 + $0x490] sm:$0xff]
    %v298 = vld [vmem:[#allocation5 + $0x498] sm:$0xff]
    %v299 = vld [vmem:[#allocation5 + $0x4a0] sm:$0xff]
    %v300 = vld [vmem:[#allocation5 + $0x4a8] sm:$0xff]
    %v301 = vld [vmem:[#allocation5 + $0x4b0] sm:$0xff]
    %v302 = vld [vmem:[#allocation5 + $0x4b8] sm:$0xff]
    %v303 = vld [vmem:[#allocation5 + $0x4c0] sm:$0xff]
    %v304 = vld [vmem:[#allocation5 + $0x4c8] sm:$0xff]
    %v305 = vld [vmem:[#allocation5 + $0x4d0] sm:$0xff]
    %v306 = vld [vmem:[#allocation5 + $0x4d8] sm:$0xff]
    %v307 = vld [vmem:[#allocation5 + $0x4e0] sm:$0xff]
    %v308 = vld [vmem:[#allocation5 + $0x4e8] sm:$0xff]
    %v309 = vld [vmem:[#allocation5 + $0x4f0] sm:$0xff]
    %v310 = vld [vmem:[#allocation5 + $0x4f8] sm:$0xff]
    %v311 = vld [vmem:[#allocation5 + $0x500] sm:$0xff]
    %v312 = vld [vmem:[#allocation5 + $0x508] sm:$0xff]
    %v313 = vld [vmem:[#allocation5 + $0x510] sm:$0xff]
    %v314 = vld [vmem:[#allocation5 + $0x518] sm:$0xff]
    %v315 = vld [vmem:[#allocation5 + $0x520] sm:$0xff]
    %v316 = vld [vmem:[#allocation5 + $0x528] sm:$0xff]
    %v317 = vld [vmem:[#allocation5 + $0x530] sm:$0xff]
    %v318 = vld [vmem:[#allocation5 + $0x538] sm:$0xff]
    %v319 = vld [vmem:[#allocation5 + $0x540] sm:$0xff]
    %v320 = vld [vmem:[#allocation5 + $0x548] sm:$0xff]
    %v321 = vld [vmem:[#allocation5 + $0x550] sm:$0xff]
    %v322 = vld [vmem:[#allocation5 + $0x558] sm:$0xff]
    %v323 = vld [vmem:[#allocation5 + $0x560] sm:$0xff]
    %v324 = vld [vmem:[#allocation5 + $0x568] sm:$0xff]
    %v325 = vld [vmem:[#allocation5 + $0x570] sm:$0xff]
    %v326 = vld [vmem:[#allocation5 + $0x578] sm:$0xff]
    %v327 = vld [vmem:[#allocation5 + $0x580] sm:$0xff]
    %v328 = vld [vmem:[#allocation5 + $0x588] sm:$0xff]
    %v329 = vld [vmem:[#allocation5 + $0x590] sm:$0xff]
    %v330 = vld [vmem:[#allocation5 + $0x598] sm:$0xff]
    %v331 = vld [vmem:[#allocation5 + $0x5a0] sm:$0xff]
    %v332 = vld [vmem:[#allocation5 + $0x5a8] sm:$0xff]
    %v333 = vld [vmem:[#allocation5 + $0x5b0] sm:$0xff]
    %v334 = vld [vmem:[#allocation5 + $0x5b8] sm:$0xff]
    %v335 = vld [vmem:[#allocation5 + $0x5c0] sm:$0xff]
    %v336 = vld [vmem:[#allocation5 + $0x5c8] sm:$0xff]
    %v337 = vld [vmem:[#allocation5 + $0x5d0] sm:$0xff]
    %v338 = vld [vmem:[#allocation5 + $0x5d8] sm:$0xff]
    %v339 = vld [vmem:[#allocation5 + $0x5e0] sm:$0xff]
    %v340 = vld [vmem:[#allocation5 + $0x5e8] sm:$0xff]
    %v341 = vld [vmem:[#allocation5 + $0x5f0] sm:$0xff]
    %v342 = vld [vmem:[#allocation5 + $0x5f8] sm:$0xff]
    %v343 = vld [vmem:[#allocation5 + $0x600] sm:$0xff]
    %v344 = vld [vmem:[#allocation5 + $0x608] sm:$0xff]
    %v345 = vld [vmem:[#allocation5 + $0x610] sm:$0xff]
    %v346 = vld [vmem:[#allocation5 + $0x618] sm:$0xff]
    %v347 = vld [vmem:[#allocation5 + $0x620] sm:$0xff]
    %v348 = vld [vmem:[#allocation5 + $0x628] sm:$0xff]
    %v349 = vld [vmem:[#allocation5 + $0x630] sm:$0xff]
    %v350 = vld [vmem:[#allocation5 + $0x638] sm:$0xff]
    %v351 = vld [vmem:[#allocation5 + $0x640] sm:$0xff]
    %v352 = vld [vmem:[#allocation5 + $0x648] sm:$0xff]
    %v353 = vld [vmem:[#allocation5 + $0x650] sm:$0xff]
    %v354 = vld [vmem:[#allocation5 + $0x658] sm:$0xff]
    %v355 = vld [vmem:[#allocation5 + $0x660] sm:$0xff]
    %v356 = vld [vmem:[#allocation5 + $0x668] sm:$0xff]
    %v357 = vld [vmem:[#allocation5 + $0x670] sm:$0xff]
    %v358 = vld [vmem:[#allocation5 + $0x678] sm:$0xff]
    %v359 = vld [vmem:[#allocation5 + $0x680] sm:$0xff]
    %v360 = vld [vmem:[#allocation5 + $0x688] sm:$0xff]
    %v361 = vld [vmem:[#allocation5 + $0x690] sm:$0xff]
    %v362 = vld [vmem:[#allocation5 + $0x698] sm:$0xff]
    %v363 = vld [vmem:[#allocation5 + $0x6a0] sm:$0xff]
    %v364 = vld [vmem:[#allocation5 + $0x6a8] sm:$0xff]
    %v365 = vld [vmem:[#allocation5 + $0x6b0] sm:$0xff]
    %v366 = vld [vmem:[#allocation5 + $0x6b8] sm:$0xff]
    %v367 = vld [vmem:[#allocation5 + $0x6c0] sm:$0xff]
    %v368 = vld [vmem:[#allocation5 + $0x6c8] sm:$0xff]
    %v369 = vld [vmem:[#allocation5 + $0x6d0] sm:$0xff]
    %v370 = vld [vmem:[#allocation5 + $0x6d8] sm:$0xff]
    %v371 = vld [vmem:[#allocation5 + $0x6e0] sm:$0xff]
    %v372 = vld [vmem:[#allocation5 + $0x6e8] sm:$0xff]
    %v373 = vld [vmem:[#allocation5 + $0x6f0] sm:$0xff]
    %v374 = vld [vmem:[#allocation5 + $0x6f8] sm:$0xff]
    %v375 = vld [vmem:[#allocation5 + $0x700] sm:$0xff]
    %v376 = vld [vmem:[#allocation5 + $0x708] sm:$0xff]
    %v377 = vld [vmem:[#allocation5 + $0x710] sm:$0xff]
    %v378 = vld [vmem:[#allocation5 + $0x718] sm:$0xff]
    %v379 = vld [vmem:[#allocation5 + $0x720] sm:$0xff]
    %v380 = vld [vmem:[#allocation5 + $0x728] sm:$0xff]
    %v381 = vld [vmem:[#allocation5 + $0x730] sm:$0xff]
    %v382 = vld [vmem:[#allocation5 + $0x738] sm:$0xff]
    %v383 = vld [vmem:[#allocation5 + $0x740] sm:$0xff]
    %v384 = vld [vmem:[#allocation5 + $0x748] sm:$0xff]
    %v385 = vld [vmem:[#allocation5 + $0x750] sm:$0xff]
    %v386 = vld [vmem:[#allocation5 + $0x758] sm:$0xff]
    %v387 = vld [vmem:[#allocation5 + $0x760] sm:$0xff]
    %v388 = vld [vmem:[#allocation5 + $0x768] sm:$0xff]
    %v389 = vld [vmem:[#allocation5 + $0x770] sm:$0xff]
    %v390 = vld [vmem:[#allocation5 + $0x778] sm:$0xff]
    %v391 = vld [vmem:[#allocation5 + $0x780] sm:$0xff]
    %v392 = vld [vmem:[#allocation5 + $0x788] sm:$0xff]
    %v393 = vld [vmem:[#allocation5 + $0x790] sm:$0xff]
    %v394 = vld [vmem:[#allocation5 + $0x798] sm:$0xff]
    %v395 = vld [vmem:[#allocation5 + $0x7a0] sm:$0xff]
    %v396 = vld [vmem:[#allocation5 + $0x7a8] sm:$0xff]
    %v397 = vld [vmem:[#allocation5 + $0x7b0] sm:$0xff]
    %v398 = vld [vmem:[#allocation5 + $0x7b8] sm:$0xff]
    %v399 = vld [vmem:[#allocation5 + $0x7c0] sm:$0xff]
    %v400 = vld [vmem:[#allocation5 + $0x7c8] sm:$0xff]
    %v401 = vld [vmem:[#allocation5 + $0x7d0] sm:$0xff]
    %v402 = vld [vmem:[#allocation5 + $0x7d8] sm:$0xff]
    %v403 = vld [vmem:[#allocation5 + $0x7e0] sm:$0xff]
    %v404 = vld [vmem:[#allocation5 + $0x7e8] sm:$0xff]
    %v405 = vld [vmem:[#allocation5 + $0x7f0] sm:$0xff]
    %v406 = vld [vmem:[#allocation5 + $0x7f8] sm:$0xff]
    %v407 = vld [vmem:[#allocation5 + $0x800] sm:$0xff]
    %v408 = vld [vmem:[#allocation5 + $0x808] sm:$0xff]
    %v409 = vld [vmem:[#allocation5 + $0x810] sm:$0xff]
    %v410 = vld [vmem:[#allocation5 + $0x818] sm:$0xff]
    %v411 = vld [vmem:[#allocation5 + $0x820] sm:$0xff]
    %v412 = vld [vmem:[#allocation5 + $0x828] sm:$0xff]
    %v413 = vld [vmem:[#allocation5 + $0x830] sm:$0xff]
    %v414 = vld [vmem:[#allocation5 + $0x838] sm:$0xff]
    %v415 = vld [vmem:[#allocation5 + $0x840] sm:$0xff]
    %v416 = vld [vmem:[#allocation5 + $0x848] sm:$0xff]
    %v417 = vld [vmem:[#allocation5 + $0x850] sm:$0xff]
    %v418 = vld [vmem:[#allocation5 + $0x858] sm:$0xff]
    %v419 = vld [vmem:[#allocation5 + $0x860] sm:$0xff]
    %v420 = vld [vmem:[#allocation5 + $0x868] sm:$0xff]
    %v421 = vld [vmem:[#allocation5 + $0x870] sm:$0xff]
    %v422 = vld [vmem:[#allocation5 + $0x878] sm:$0xff]
    %v423 = vld [vmem:[#allocation5 + $0x880] sm:$0xff]
    %v424 = vld [vmem:[#allocation5 + $0x888] sm:$0xff]
    %v425 = vld [vmem:[#allocation5 + $0x890] sm:$0xff]
    %v426 = vld [vmem:[#allocation5 + $0x898] sm:$0xff]
    %v427 = vld [vmem:[#allocation5 + $0x8a0] sm:$0xff]
    %v428 = vld [vmem:[#allocation5 + $0x8a8] sm:$0xff]
    %v429 = vld [vmem:[#allocation5 + $0x8b0] sm:$0xff]
    %v430 = vld [vmem:[#allocation5 + $0x8b8] sm:$0xff]
    %v431 = vld [vmem:[#allocation5 + $0x8c0] sm:$0xff]
    %v432 = vld [vmem:[#allocation5 + $0x8c8] sm:$0xff]
    %v433 = vld [vmem:[#allocation5 + $0x8d0] sm:$0xff]
    %v434 = vld [vmem:[#allocation5 + $0x8d8] sm:$0xff]
    %v435 = vld [vmem:[#allocation5 + $0x8e0] sm:$0xff]
    %v436 = vld [vmem:[#allocation5 + $0x8e8] sm:$0xff]
    %v437 = vld [vmem:[#allocation5 + $0x8f0] sm:$0xff]
    %v438 = vld [vmem:[#allocation5 + $0x8f8] sm:$0xff]
    %v439 = vld [vmem:[#allocation5 + $0x900] sm:$0xff]
    %v440 = vld [vmem:[#allocation5 + $0x908] sm:$0xff]
    %v441 = vld [vmem:[#allocation5 + $0x910] sm:$0xff]
    %v442 = vld [vmem:[#allocation5 + $0x918] sm:$0xff]
    %v443 = vld [vmem:[#allocation5 + $0x920] sm:$0xff]
    %v444 = vld [vmem:[#allocation5 + $0x928] sm:$0xff]
    %v445 = vld [vmem:[#allocation5 + $0x930] sm:$0xff]
    %v446 = vld [vmem:[#allocation5 + $0x938] sm:$0xff]
    %v447 = vld [vmem:[#allocation5 + $0x940] sm:$0xff]
    %v448 = vld [vmem:[#allocation5 + $0x948] sm:$0xff]
    %v449 = vld [vmem:[#allocation5 + $0x950] sm:$0xff]
    %v450 = vld [vmem:[#allocation5 + $0x958] sm:$0xff]
    %v451 = vld [vmem:[#allocation5 + $0x960] sm:$0xff]
    %v452 = vld [vmem:[#allocation5 + $0x968] sm:$0xff]
    %v453 = vld [vmem:[#allocation5 + $0x970] sm:$0xff]
    %v454 = vld [vmem:[#allocation5 + $0x978] sm:$0xff]
    %v455 = vld [vmem:[#allocation5 + $0x980] sm:$0xff]
    %v456 = vld [vmem:[#allocation5 + $0x988] sm:$0xff]
    %v457 = vld [vmem:[#allocation5 + $0x990] sm:$0xff]
    %v458 = vld [vmem:[#allocation5 + $0x998] sm:$0xff]
    %v459 = vld [vmem:[#allocation5 + $0x9a0] sm:$0xff]
    %v460 = vld [vmem:[#allocation5 + $0x9a8] sm:$0xff]
    %v461 = vld [vmem:[#allocation5 + $0x9b0] sm:$0xff]
    %v462 = vld [vmem:[#allocation5 + $0x9b8] sm:$0xff]
    %v463 = vld [vmem:[#allocation5 + $0x9c0] sm:$0xff]
    %v464 = vld [vmem:[#allocation5 + $0x9c8] sm:$0xff]
    %v465 = vld [vmem:[#allocation5 + $0x9d0] sm:$0xff]
    %v466 = vld [vmem:[#allocation5 + $0x9d8] sm:$0xff]
    %v467 = vld [vmem:[#allocation5 + $0x9e0] sm:$0xff]
    %v468 = vld [vmem:[#allocation5 + $0x9e8] sm:$0xff]
    %v469 = vld [vmem:[#allocation5 + $0x9f0] sm:$0xff]
    %v470 = vld [vmem:[#allocation5 + $0x9f8] sm:$0xff]
    %v471 = vld [vmem:[#allocation5 + $0xa00] sm:$0xff]
    %v472 = vld [vmem:[#allocation5 + $0xa08] sm:$0xff]
    %v473 = vld [vmem:[#allocation5 + $0xa10] sm:$0xff]
    %v474 = vld [vmem:[#allocation5 + $0xa18] sm:$0xff]
    %v475 = vld [vmem:[#allocation5 + $0xa20] sm:$0xff]
    %v476 = vld [vmem:[#allocation5 + $0xa28] sm:$0xff]
    %v477 = vld [vmem:[#allocation5 + $0xa30] sm:$0xff]
    %v478 = vld [vmem:[#allocation5 + $0xa38] sm:$0xff]
    %v479 = vld [vmem:[#allocation5 + $0xa40] sm:$0xff]
    %v480 = vld [vmem:[#allocation5 + $0xa48] sm:$0xff]
    %v481 = vld [vmem:[#allocation5 + $0xa50] sm:$0xff]
    %v482 = vld [vmem:[#allocation5 + $0xa58] sm:$0xff]
    %v483 = vld [vmem:[#allocation5 + $0xa60] sm:$0xff]
    %v484 = vld [vmem:[#allocation5 + $0xa68] sm:$0xff]
    %v485 = vld [vmem:[#allocation5 + $0xa70] sm:$0xff]
    %v486 = vld [vmem:[#allocation5 + $0xa78] sm:$0xff]
    %v487 = vld [vmem:[#allocation5 + $0xa80] sm:$0xff]
    %v488 = vld [vmem:[#allocation5 + $0xa88] sm:$0xff]
    %v489 = vld [vmem:[#allocation5 + $0xa90] sm:$0xff]
    %v490 = vld [vmem:[#allocation5 + $0xa98] sm:$0xff]
    %v491 = vld [vmem:[#allocation5 + $0xaa0] sm:$0xff]
    %v492 = vld [vmem:[#allocation5 + $0xaa8] sm:$0xff]
    %v493 = vld [vmem:[#allocation5 + $0xab0] sm:$0xff]
    %v494 = vld [vmem:[#allocation5 + $0xab8] sm:$0xff]
    %v495 = vld [vmem:[#allocation5 + $0xac0] sm:$0xff]
    %v496 = vld [vmem:[#allocation5 + $0xac8] sm:$0xff]
    %v497 = vld [vmem:[#allocation5 + $0xad0] sm:$0xff]
    %v498 = vld [vmem:[#allocation5 + $0xad8] sm:$0xff]
    %v499 = vld [vmem:[#allocation5 + $0xae0] sm:$0xff]
    %v500 = vld [vmem:[#allocation5 + $0xae8] sm:$0xff]
    %v501 = vld [vmem:[#allocation5 + $0xaf0] sm:$0xff]
    %v502 = vld [vmem:[#allocation5 + $0xaf8] sm:$0xff]
    %v503 = vld [vmem:[#allocation5 + $0xb00] sm:$0xff]
    %v504 = vld [vmem:[#allocation5 + $0xb08] sm:$0xff]
    %v505 = vld [vmem:[#allocation5 + $0xb10] sm:$0xff]
    %v506 = vld [vmem:[#allocation5 + $0xb18] sm:$0xff]
    %v507 = vld [vmem:[#allocation5 + $0xb20] sm:$0xff]
    %v508 = vld [vmem:[#allocation5 + $0xb28] sm:$0xff]
    %v509 = vld [vmem:[#allocation5 + $0xb30] sm:$0xff]
    %v510 = vld [vmem:[#allocation5 + $0xb38] sm:$0xff]
    %v511 = vld [vmem:[#allocation5 + $0xb40] sm:$0xff]
    %v512 = vld [vmem:[#allocation5 + $0xb48] sm:$0xff]
    %v513 = vld [vmem:[#allocation5 + $0xb50] sm:$0xff]
    %v514 = vld [vmem:[#allocation5 + $0xb58] sm:$0xff]
    %v515 = vld [vmem:[#allocation5 + $0xb60] sm:$0xff]
    %v516 = vld [vmem:[#allocation5 + $0xb68] sm:$0xff]
    %v517 = vld [vmem:[#allocation5 + $0xb70] sm:$0xff]
    %v518 = vld [vmem:[#allocation5 + $0xb78] sm:$0xff]
    %v519 = vld [vmem:[#allocation5 + $0xb80] sm:$0xff]
    %v520 = vld [vmem:[#allocation5 + $0xb88] sm:$0xff]
    %v521 = vld [vmem:[#allocation5 + $0xb90] sm:$0xff]
    %v522 = vld [vmem:[#allocation5 + $0xb98] sm:$0xff]
    %v523 = vld [vmem:[#allocation5 + $0xba0] sm:$0xff]
    %v524 = vld [vmem:[#allocation5 + $0xba8] sm:$0xff]
    %v525 = vld [vmem:[#allocation5 + $0xbb0] sm:$0xff]
    %v526 = vld [vmem:[#allocation5 + $0xbb8] sm:$0xff]
    %v527 = vld [vmem:[#allocation5 + $0xbc0] sm:$0xff]
    %v528 = vld [vmem:[#allocation5 + $0xbc8] sm:$0xff]
    %v529 = vld [vmem:[#allocation5 + $0xbd0] sm:$0xff]
    %v530 = vld [vmem:[#allocation5 + $0xbd8] sm:$0xff]
    %v531 = vld [vmem:[#allocation5 + $0xbe0] sm:$0xff]
    %v532 = vld [vmem:[#allocation5 + $0xbe8] sm:$0xff]
    %v533 = vld [vmem:[#allocation5 + $0xbf0] sm:$0xff]
    %v534 = vld [vmem:[#allocation5 + $0xbf8] sm:$0xff]
    %v535 = vld [vmem:[#allocation11] sm:$0x1]
    %v537 = vlaneseq
    %v538 = vshrl.u32 %v537, 7
    %v539 = vsub.s32 0, %v538
    %v540 = vrot.slane %v535, %v539
    %v548 = vcombine.high %v145, %v145
    %v550 = vunpack.c.l.s4 1983009808
    %v551 = vunpack.c.0.s8 %v550
    %v552 = vlaneseq
    %v553 = vshrl.u32 %v552, 7
    %v554 = vsub.s32 %v551, %v553
    %v555 = vrot.slane %v145, %v554
    %v557 = vunpack.c.l.s4 1983009808
    %v558 = vunpack.c.0.s8 %v557
    %v559 = vlaneseq
    %v560 = vshrl.u32 %v559, 7
    %v561 = vsub.s32 %v558, %v560
    %v562 = vrot.slane %v548, %v561
    %v563 = vcombine.high %v555, %v555
    %v564 = vcombine.high %v562, %v562
    %v565 = vcombine.high %v146, %v146
    %v567 = vunpack.c.l.s4 1983009808
    %v568 = vunpack.c.0.s8 %v567
    %v569 = vlaneseq
    %v570 = vshrl.u32 %v569, 7
    %v571 = vsub.s32 %v568, %v570
    %v572 = vrot.slane %v146, %v571
    %v574 = vunpack.c.l.s4 1983009808
    %v575 = vunpack.c.0.s8 %v574
    %v576 = vlaneseq
    %v577 = vshrl.u32 %v576, 7
    %v578 = vsub.s32 %v575, %v577
    %v579 = vrot.slane %v565, %v578
    %v580 = vcombine.high %v572, %v572
    %v581 = vcombine.high %v579, %v579
    %v582 = vcombine.high %v147, %v147
    %v584 = vunpack.c.l.s4 1983009808
    %v585 = vunpack.c.0.s8 %v584
    %v586 = vlaneseq
    %v587 = vshrl.u32 %v586, 7
    %v588 = vsub.s32 %v585, %v587
    %v589 = vrot.slane %v147, %v588
    %v591 = vunpack.c.l.s4 1983009808
    %v592 = vunpack.c.0.s8 %v591
    %v593 = vlaneseq
    %v594 = vshrl.u32 %v593, 7
    %v595 = vsub.s32 %v592, %v594
    %v596 = vrot.slane %v582, %v595
    %v597 = vcombine.high %v589, %v589
    %v598 = vcombine.high %v596, %v596
    %v599 = vcombine.high %v148, %v148
    %v601 = vunpack.c.l.s4 1983009808
    %v602 = vunpack.c.0.s8 %v601
    %v603 = vlaneseq
    %v604 = vshrl.u32 %v603, 7
    %v605 = vsub.s32 %v602, %v604
    %v606 = vrot.slane %v148, %v605
    %v608 = vunpack.c.l.s4 1983009808
    %v609 = vunpack.c.0.s8 %v608
    %v610 = vlaneseq
    %v611 = vshrl.u32 %v610, 7
    %v612 = vsub.s32 %v609, %v611
    %v613 = vrot.slane %v599, %v612
    %v614 = vcombine.high %v606, %v606
    %v615 = vcombine.high %v613, %v613
    %v616 = vcombine.high %v149, %v149
    %v618 = vunpack.c.l.s4 1983009808
    %v619 = vunpack.c.0.s8 %v618
    %v620 = vlaneseq
    %v621 = vshrl.u32 %v620, 7
    %v622 = vsub.s32 %v619, %v621
    %v623 = vrot.slane %v149, %v622
    %v625 = vunpack.c.l.s4 1983009808
    %v626 = vunpack.c.0.s8 %v625
    %v627 = vlaneseq
    %v628 = vshrl.u32 %v627, 7
    %v629 = vsub.s32 %v626, %v628
    %v630 = vrot.slane %v616, %v629
    %v631 = vcombine.high %v623, %v623
    %v632 = vcombine.high %v630, %v630
    %v633 = vcombine.high %v150, %v150
    %v635 = vunpack.c.l.s4 1983009808
    %v636 = vunpack.c.0.s8 %v635
    %v637 = vlaneseq
    %v638 = vshrl.u32 %v637, 7
    %v639 = vsub.s32 %v636, %v638
    %v640 = vrot.slane %v150, %v639
    %v642 = vunpack.c.l.s4 1983009808
    %v643 = vunpack.c.0.s8 %v642
    %v644 = vlaneseq
    %v645 = vshrl.u32 %v644, 7
    %v646 = vsub.s32 %v643, %v645
    %v647 = vrot.slane %v633, %v646
    %v648 = vcombine.high %v640, %v640
    %v649 = vcombine.high %v647, %v647
    %674 = vmatprep.subr.mxu0 0.0
    %675 = vmatpush1.msra.mxu0 %v151
    %676 = vmatprep.subr.mxu0 0.0
    %677 = vmatpush1.msra.mxu0 %v152
    %678 = vmatprep.subr.mxu0 0.0
    %679 = vmatpush1.msra.mxu0 %v153
    %680 = vmatprep.subr.mxu0 0.0
    %681 = vmatpush1.msra.mxu0 %v154
    %682 = vmatprep.subr.mxu0 0.0
    %683 = vmatpush1.msra.mxu0 %v155
    %684 = vmatprep.subr.mxu0 0.0
    %685 = vmatpush1.msra.mxu0 %v156
    %686 = vmatprep.subr.mxu0 0.0
    %687 = vmatpush1.msra.mxu0 %v157
    %688 = vmatprep.subr.mxu0 0.0
    %689 = vmatpush1.msra.mxu0 %v158
    %690 = vmatprep.subr.mxu0 0.0
    %691 = vmatpush1.msra.mxu0 %v159
    %692 = vmatprep.subr.mxu0 0.0
    %693 = vmatpush1.msra.mxu0 %v160
    %694 = vmatprep.subr.mxu0 0.0
    %695 = vmatpush1.msra.mxu0 %v161
    %696 = vmatprep.subr.mxu0 0.0
    %697 = vmatpush1.msra.mxu0 %v162
    %698 = vmatprep.subr.mxu0 0.0
    %699 = vmatpush1.msra.mxu0 %v163
    %700 = vmatprep.subr.mxu0 0.0
    %701 = vmatpush1.msra.mxu0 %v164
    %702 = vmatprep.subr.mxu0 0.0
    %703 = vmatpush1.msra.mxu0 %v165
    %704 = vmatprep.subr.mxu0 0.0
    %705 = vmatpush1.msra.mxu0 %v166
    %706 = vmatprep.subr.mxu0 0.0
    %707 = vmatpush1.msra.mxu0 %v167
    %708 = vmatprep.subr.mxu0 0.0
    %709 = vmatpush1.msra.mxu0 %v168
    %710 = vmatprep.subr.mxu0 0.0
    %711 = vmatpush1.msra.mxu0 %v169
    %712 = vmatprep.subr.mxu0 0.0
    %713 = vmatpush1.msra.mxu0 %v170
    %714 = vmatprep.subr.mxu0 0.0
    %715 = vmatpush1.msra.mxu0 %v171
    %716 = vmatprep.subr.mxu0 0.0
    %717 = vmatpush1.msra.mxu0 %v172
    %718 = vmatprep.subr.mxu0 0.0
    %719 = vmatpush1.msra.mxu0 %v173
    %720 = vmatprep.subr.mxu0 0.0
    %721 = vmatpush1.msra.mxu0 %v174
    %722 = vmatprep.subr.mxu0 0.0
    %723 = vmatpush1.msra.mxu0 %v175
    %724 = vmatprep.subr.mxu0 0.0
    %725 = vmatpush1.msra.mxu0 %v176
    %726 = vmatprep.subr.mxu0 0.0
    %727 = vmatpush1.msra.mxu0 %v177
    %728 = vmatprep.subr.mxu0 0.0
    %729 = vmatpush1.msra.mxu0 %v178
    %730 = vmatprep.subr.mxu0 0.0
    %731 = vmatpush1.msra.mxu0 %v179
    %732 = vmatprep.subr.mxu0 0.0
    %733 = vmatpush1.msra.mxu0 %v180
    %734 = vmatprep.subr.mxu0 0.0
    %735 = vmatpush1.msra.mxu0 %v181
    %736 = vmatprep.subr.mxu0 0.0
    %737 = vmatpush1.msra.mxu0 %v182
    %738 = vmatprep.mubr.f32.mxu0 %v563
    %739 = vmatmul.mubr.f32.gmra.mrb[0].mxu0 %v555
    %v740 = vpop.f32.mrb[0].mxu0
    %v741 = vadd.f32 %v540, %v740
    %v742 = vpop.f32.mrb[0].mxu0
    %743 = vdwg.mxu0
    %744 = vmatprep.subr.mxu0 0.0
    %745 = vmatpush1.msra.mxu0 %v183
    %746 = vmatprep.subr.mxu0 0.0
    %747 = vmatpush1.msra.mxu0 %v184
    %748 = vmatprep.subr.mxu0 0.0
    %749 = vmatpush1.msra.mxu0 %v185
    %750 = vmatprep.subr.mxu0 0.0
    %751 = vmatpush1.msra.mxu0 %v186
    %752 = vmatprep.subr.mxu0 0.0
    %753 = vmatpush1.msra.mxu0 %v187
    %754 = vmatprep.subr.mxu0 0.0
    %755 = vmatpush1.msra.mxu0 %v188
    %756 = vmatprep.subr.mxu0 0.0
    %757 = vmatpush1.msra.mxu0 %v189
    %758 = vmatprep.subr.mxu0 0.0
    %759 = vmatpush1.msra.mxu0 %v190
    %760 = vmatprep.subr.mxu0 0.0
    %761 = vmatpush1.msra.mxu0 %v191
    %762 = vmatprep.subr.mxu0 0.0
    %763 = vmatpush1.msra.mxu0 %v192
    %764 = vmatprep.subr.mxu0 0.0
    %765 = vmatpush1.msra.mxu0 %v193
    %766 = vmatprep.subr.mxu0 0.0
    %767 = vmatpush1.msra.mxu0 %v194
    %768 = vmatprep.subr.mxu0 0.0
    %769 = vmatpush1.msra.mxu0 %v195
    %770 = vmatprep.subr.mxu0 0.0
    %771 = vmatpush1.msra.mxu0 %v196
    %772 = vmatprep.subr.mxu0 0.0
    %773 = vmatpush1.msra.mxu0 %v197
    %774 = vmatprep.subr.mxu0 0.0
    %775 = vmatpush1.msra.mxu0 %v198
    %776 = vmatprep.subr.mxu0 0.0
    %777 = vmatpush1.msra.mxu0 %v199
    %778 = vmatprep.subr.mxu0 0.0
    %779 = vmatpush1.msra.mxu0 %v200
    %780 = vmatprep.subr.mxu0 0.0
    %781 = vmatpush1.msra.mxu0 %v201
    %782 = vmatprep.subr.mxu0 0.0
    %783 = vmatpush1.msra.mxu0 %v202
    %784 = vmatprep.subr.mxu0 0.0
    %785 = vmatpush1.msra.mxu0 %v203
    %786 = vmatprep.subr.mxu0 0.0
    %787 = vmatpush1.msra.mxu0 %v204
    %788 = vmatprep.subr.mxu0 0.0
    %789 = vmatpush1.msra.mxu0 %v205
    %790 = vmatprep.subr.mxu0 0.0
    %791 = vmatpush1.msra.mxu0 %v206
    %792 = vmatprep.subr.mxu0 0.0
    %793 = vmatpush1.msra.mxu0 %v207
    %794 = vmatprep.subr.mxu0 0.0
    %795 = vmatpush1.msra.mxu0 %v208
    %796 = vmatprep.subr.mxu0 0.0
    %797 = vmatpush1.msra.mxu0 %v209
    %798 = vmatprep.subr.mxu0 0.0
    %799 = vmatpush1.msra.mxu0 %v210
    %800 = vmatprep.subr.mxu0 0.0
    %801 = vmatpush1.msra.mxu0 %v211
    %802 = vmatprep.subr.mxu0 0.0
    %803 = vmatpush1.msra.mxu0 %v212
    %804 = vmatprep.subr.mxu0 0.0
    %805 = vmatpush1.msra.mxu0 %v213
    %806 = vmatprep.subr.mxu0 0.0
    %807 = vmatpush1.msra.mxu0 %v214
    %808 = vmatprep.mubr.f32.mxu0 %v564
    %809 = vmatmul.mubr.f32.gmra.mrb[0].mxu0 %v562
    %v810 = vpop.f32.mrb[0].mxu0
    %v811 = vadd.f32 %v741, %v810
    %v812 = vpop.f32.mrb[0].mxu0
    %813 = vdwg.mxu0
    %814 = vmatprep.subr.mxu0 0.0
    %815 = vmatpush1.msra.mxu0 %v215
    %816 = vmatprep.subr.mxu0 0.0
    %817 = vmatpush1.msra.mxu0 %v216
    %818 = vmatprep.subr.mxu0 0.0
    %819 = vmatpush1.msra.mxu0 %v217
    %820 = vmatprep.subr.mxu0 0.0
    %821 = vmatpush1.msra.mxu0 %v218
    %822 = vmatprep.subr.mxu0 0.0
    %823 = vmatpush1.msra.mxu0 %v219
    %824 = vmatprep.subr.mxu0 0.0
    %825 = vmatpush1.msra.mxu0 %v220
    %826 = vmatprep.subr.mxu0 0.0
    %827 = vmatpush1.msra.mxu0 %v221
    %828 = vmatprep.subr.mxu0 0.0
    %829 = vmatpush1.msra.mxu0 %v222
    %830 = vmatprep.subr.mxu0 0.0
    %831 = vmatpush1.msra.mxu0 %v223
    %832 = vmatprep.subr.mxu0 0.0
    %833 = vmatpush1.msra.mxu0 %v224
    %834 = vmatprep.subr.mxu0 0.0
    %835 = vmatpush1.msra.mxu0 %v225
    %836 = vmatprep.subr.mxu0 0.0
    %837 = vmatpush1.msra.mxu0 %v226
    %838 = vmatprep.subr.mxu0 0.0
    %839 = vmatpush1.msra.mxu0 %v227
    %840 = vmatprep.subr.mxu0 0.0
    %841 = vmatpush1.msra.mxu0 %v228
    %842 = vmatprep.subr.mxu0 0.0
    %843 = vmatpush1.msra.mxu0 %v229
    %844 = vmatprep.subr.mxu0 0.0
    %845 = vmatpush1.msra.mxu0 %v230
    %846 = vmatprep.subr.mxu0 0.0
    %847 = vmatpush1.msra.mxu0 %v231
    %848 = vmatprep.subr.mxu0 0.0
    %849 = vmatpush1.msra.mxu0 %v232
    %850 = vmatprep.subr.mxu0 0.0
    %851 = vmatpush1.msra.mxu0 %v233
    %852 = vmatprep.subr.mxu0 0.0
    %853 = vmatpush1.msra.mxu0 %v234
    %854 = vmatprep.subr.mxu0 0.0
    %855 = vmatpush1.msra.mxu0 %v235
    %856 = vmatprep.subr.mxu0 0.0
    %857 = vmatpush1.msra.mxu0 %v236
    %858 = vmatprep.subr.mxu0 0.0
    %859 = vmatpush1.msra.mxu0 %v237
    %860 = vmatprep.subr.mxu0 0.0
    %861 = vmatpush1.msra.mxu0 %v238
    %862 = vmatprep.subr.mxu0 0.0
    %863 = vmatpush1.msra.mxu0 %v239
    %864 = vmatprep.subr.mxu0 0.0
    %865 = vmatpush1.msra.mxu0 %v240
    %866 = vmatprep.subr.mxu0 0.0
    %867 = vmatpush1.msra.mxu0 %v241
    %868 = vmatprep.subr.mxu0 0.0
    %869 = vmatpush1.msra.mxu0 %v242
    %870 = vmatprep.subr.mxu0 0.0
    %871 = vmatpush1.msra.mxu0 %v243
    %872 = vmatprep.subr.mxu0 0.0
    %873 = vmatpush1.msra.mxu0 %v244
    %874 = vmatprep.subr.mxu0 0.0
    %875 = vmatpush1.msra.mxu0 %v245
    %876 = vmatprep.subr.mxu0 0.0
    %877 = vmatpush1.msra.mxu0 %v246
    %878 = vmatprep.mubr.f32.mxu0 %v580
    %879 = vmatmul.mubr.f32.gmra.mrb[0].mxu0 %v572
    %v880 = vpop.f32.mrb[0].mxu0
    %v881 = vadd.f32 %v811, %v880
    %v882 = vpop.f32.mrb[0].mxu0
    %883 = vdwg.mxu0
    %884 = vmatprep.subr.mxu0 0.0
    %885 = vmatpush1.msra.mxu0 %v247
    %886 = vmatprep.subr.mxu0 0.0
    %887 = vmatpush1.msra.mxu0 %v248
    %888 = vmatprep.subr.mxu0 0.0
    %889 = vmatpush1.msra.mxu0 %v249
    %890 = vmatprep.subr.mxu0 0.0
    %891 = vmatpush1.msra.mxu0 %v250
    %892 = vmatprep.subr.mxu0 0.0
    %893 = vmatpush1.msra.mxu0 %v251
    %894 = vmatprep.subr.mxu0 0.0
    %895 = vmatpush1.msra.mxu0 %v252
    %896 = vmatprep.subr.mxu0 0.0
    %897 = vmatpush1.msra.mxu0 %v253
    %898 = vmatprep.subr.mxu0 0.0
    %899 = vmatpush1.msra.mxu0 %v254
    %900 = vmatprep.subr.mxu0 0.0
    %901 = vmatpush1.msra.mxu0 %v255
    %902 = vmatprep.subr.mxu0 0.0
    %903 = vmatpush1.msra.mxu0 %v256
    %904 = vmatprep.subr.mxu0 0.0
    %905 = vmatpush1.msra.mxu0 %v257
    %906 = vmatprep.subr.mxu0 0.0
    %907 = vmatpush1.msra.mxu0 %v258
    %908 = vmatprep.subr.mxu0 0.0
    %909 = vmatpush1.msra.mxu0 %v259
    %910 = vmatprep.subr.mxu0 0.0
    %911 = vmatpush1.msra.mxu0 %v260
    %912 = vmatprep.subr.mxu0 0.0
    %913 = vmatpush1.msra.mxu0 %v261
    %914 = vmatprep.subr.mxu0 0.0
    %915 = vmatpush1.msra.mxu0 %v262
    %916 = vmatprep.subr.mxu0 0.0
    %917 = vmatpush1.msra.mxu0 %v263
    %918 = vmatprep.subr.mxu0 0.0
    %919 = vmatpush1.msra.mxu0 %v264
    %920 = vmatprep.subr.mxu0 0.0
    %921 = vmatpush1.msra.mxu0 %v265
    %922 = vmatprep.subr.mxu0 0.0
    %923 = vmatpush1.msra.mxu0 %v266
    %924 = vmatprep.subr.mxu0 0.0
    %925 = vmatpush1.msra.mxu0 %v267
    %926 = vmatprep.subr.mxu0 0.0
    %927 = vmatpush1.msra.mxu0 %v268
    %928 = vmatprep.subr.mxu0 0.0
    %929 = vmatpush1.msra.mxu0 %v269
    %930 = vmatprep.subr.mxu0 0.0
    %931 = vmatpush1.msra.mxu0 %v270
    %932 = vmatprep.subr.mxu0 0.0
    %933 = vmatpush1.msra.mxu0 %v271
    %934 = vmatprep.subr.mxu0 0.0
    %935 = vmatpush1.msra.mxu0 %v272
    %936 = vmatprep.subr.mxu0 0.0
    %937 = vmatpush1.msra.mxu0 %v273
    %938 = vmatprep.subr.mxu0 0.0
    %939 = vmatpush1.msra.mxu0 %v274
    %940 = vmatprep.subr.mxu0 0.0
    %941 = vmatpush1.msra.mxu0 %v275
    %942 = vmatprep.subr.mxu0 0.0
    %943 = vmatpush1.msra.mxu0 %v276
    %944 = vmatprep.subr.mxu0 0.0
    %945 = vmatpush1.msra.mxu0 %v277
    %946 = vmatprep.subr.mxu0 0.0
    %947 = vmatpush1.msra.mxu0 %v278
    %948 = vmatprep.mubr.f32.mxu0 %v581
    %949 = vmatmul.mubr.f32.gmra.mrb[0].mxu0 %v579
    %v950 = vpop.f32.mrb[0].mxu0
    %v951 = vadd.f32 %v881, %v950
    %v952 = vpop.f32.mrb[0].mxu0
    %953 = vdwg.mxu0
    %954 = vmatprep.subr.mxu0 0.0
    %955 = vmatpush1.msra.mxu0 %v279
    %956 = vmatprep.subr.mxu0 0.0
    %957 = vmatpush1.msra.mxu0 %v280
    %958 = vmatprep.subr.mxu0 0.0
    %959 = vmatpush1.msra.mxu0 %v281
    %960 = vmatprep.subr.mxu0 0.0
    %961 = vmatpush1.msra.mxu0 %v282
    %962 = vmatprep.subr.mxu0 0.0
    %963 = vmatpush1.msra.mxu0 %v283
    %964 = vmatprep.subr.mxu0 0.0
    %965 = vmatpush1.msra.mxu0 %v284
    %966 = vmatprep.subr.mxu0 0.0
    %967 = vmatpush1.msra.mxu0 %v285
    %968 = vmatprep.subr.mxu0 0.0
    %969 = vmatpush1.msra.mxu0 %v286
    %970 = vmatprep.subr.mxu0 0.0
    %971 = vmatpush1.msra.mxu0 %v287
    %972 = vmatprep.subr.mxu0 0.0
    %973 = vmatpush1.msra.mxu0 %v288
    %974 = vmatprep.subr.mxu0 0.0
    %975 = vmatpush1.msra.mxu0 %v289
    %976 = vmatprep.subr.mxu0 0.0
    %977 = vmatpush1.msra.mxu0 %v290
    %978 = vmatprep.subr.mxu0 0.0
    %979 = vmatpush1.msra.mxu0 %v291
    %980 = vmatprep.subr.mxu0 0.0
    %981 = vmatpush1.msra.mxu0 %v292
    %982 = vmatprep.subr.mxu0 0.0
    %983 = vmatpush1.msra.mxu0 %v293
    %984 = vmatprep.subr.mxu0 0.0
    %985 = vmatpush1.msra.mxu0 %v294
    %986 = vmatprep.subr.mxu0 0.0
    %987 = vmatpush1.msra.mxu0 %v295
    %988 = vmatprep.subr.mxu0 0.0
    %989 = vmatpush1.msra.mxu0 %v296
    %990 = vmatprep.subr.mxu0 0.0
    %991 = vmatpush1.msra.mxu0 %v297
    %992 = vmatprep.subr.mxu0 0.0
    %993 = vmatpush1.msra.mxu0 %v298
    %994 = vmatprep.subr.mxu0 0.0
    %995 = vmatpush1.msra.mxu0 %v299
    %996 = vmatprep.subr.mxu0 0.0
    %997 = vmatpush1.msra.mxu0 %v300
    %998 = vmatprep.subr.mxu0 0.0
    %999 = vmatpush1.msra.mxu0 %v301
    %1000 = vmatprep.subr.mxu0 0.0
    %1001 = vmatpush1.msra.mxu0 %v302
    %1002 = vmatprep.subr.mxu0 0.0
    %1003 = vmatpush1.msra.mxu0 %v303
    %1004 = vmatprep.subr.mxu0 0.0
    %1005 = vmatpush1.msra.mxu0 %v304
    %1006 = vmatprep.subr.mxu0 0.0
    %1007 = vmatpush1.msra.mxu0 %v305
    %1008 = vmatprep.subr.mxu0 0.0
    %1009 = vmatpush1.msra.mxu0 %v306
    %1010 = vmatprep.subr.mxu0 0.0
    %1011 = vmatpush1.msra.mxu0 %v307
    %1012 = vmatprep.subr.mxu0 0.0
    %1013 = vmatpush1.msra.mxu0 %v308
    %1014 = vmatprep.subr.mxu0 0.0
    %1015 = vmatpush1.msra.mxu0 %v309
    %1016 = vmatprep.subr.mxu0 0.0
    %1017 = vmatpush1.msra.mxu0 %v310
    %1018 = vmatprep.mubr.f32.mxu0 %v597
    %1019 = vmatmul.mubr.f32.gmra.mrb[0].mxu0 %v589
    %v1020 = vpop.f32.mrb[0].mxu0
    %v1021 = vadd.f32 %v951, %v1020
    %v1022 = vpop.f32.mrb[0].mxu0
    %1023 = vdwg.mxu0
    %1024 = vmatprep.subr.mxu0 0.0
    %1025 = vmatpush1.msra.mxu0 %v311
    %1026 = vmatprep.subr.mxu0 0.0
    %1027 = vmatpush1.msra.mxu0 %v312
    %1028 = vmatprep.subr.mxu0 0.0
    %1029 = vmatpush1.msra.mxu0 %v313
    %1030 = vmatprep.subr.mxu0 0.0
    %1031 = vmatpush1.msra.mxu0 %v314
    %1032 = vmatprep.subr.mxu0 0.0
    %1033 = vmatpush1.msra.mxu0 %v315
    %1034 = vmatprep.subr.mxu0 0.0
    %1035 = vmatpush1.msra.mxu0 %v316
    %1036 = vmatprep.subr.mxu0 0.0
    %1037 = vmatpush1.msra.mxu0 %v317
    %1038 = vmatprep.subr.mxu0 0.0
    %1039 = vmatpush1.msra.mxu0 %v318
    %1040 = vmatprep.subr.mxu0 0.0
    %1041 = vmatpush1.msra.mxu0 %v319
    %1042 = vmatprep.subr.mxu0 0.0
    %1043 = vmatpush1.msra.mxu0 %v320
    %1044 = vmatprep.subr.mxu0 0.0
    %1045 = vmatpush1.msra.mxu0 %v321
    %1046 = vmatprep.subr.mxu0 0.0
    %1047 = vmatpush1.msra.mxu0 %v322
    %1048 = vmatprep.subr.mxu0 0.0
    %1049 = vmatpush1.msra.mxu0 %v323
    %1050 = vmatprep.subr.mxu0 0.0
    %1051 = vmatpush1.msra.mxu0 %v324
    %1052 = vmatprep.subr.mxu0 0.0
    %1053 = vmatpush1.msra.mxu0 %v325
    %1054 = vmatprep.subr.mxu0 0.0
    %1055 = vmatpush1.msra.mxu0 %v326
    %1056 = vmatprep.subr.mxu0 0.0
    %1057 = vmatpush1.msra.mxu0 %v327
    %1058 = vmatprep.subr.mxu0 0.0
    %1059 = vmatpush1.msra.mxu0 %v328
    %1060 = vmatprep.subr.mxu0 0.0
    %1061 = vmatpush1.msra.mxu0 %v329
    %1062 = vmatprep.subr.mxu0 0.0
    %1063 = vmatpush1.msra.mxu0 %v330
    %1064 = vmatprep.subr.mxu0 0.0
    %1065 = vmatpush1.msra.mxu0 %v331
    %1066 = vmatprep.subr.mxu0 0.0
    %1067 = vmatpush1.msra.mxu0 %v332
    %1068 = vmatprep.subr.mxu0 0.0
    %1069 = vmatpush1.msra.mxu0 %v333
    %1070 = vmatprep.subr.mxu0 0.0
    %1071 = vmatpush1.msra.mxu0 %v334
    %1072 = vmatprep.subr.mxu0 0.0
    %1073 = vmatpush1.msra.mxu0 %v335
    %1074 = vmatprep.subr.mxu0 0.0
    %1075 = vmatpush1.msra.mxu0 %v336
    %1076 = vmatprep.subr.mxu0 0.0
    %1077 = vmatpush1.msra.mxu0 %v337
    %1078 = vmatprep.subr.mxu0 0.0
    %1079 = vmatpush1.msra.mxu0 %v338
    %1080 = vmatprep.subr.mxu0 0.0
    %1081 = vmatpush1.msra.mxu0 %v339
    %1082 = vmatprep.subr.mxu0 0.0
    %1083 = vmatpush1.msra.mxu0 %v340
    %1084 = vmatprep.subr.mxu0 0.0
    %1085 = vmatpush1.msra.mxu0 %v341
    %1086 = vmatprep.subr.mxu0 0.0
    %1087 = vmatpush1.msra.mxu0 %v342
    %1088 = vmatprep.mubr.f32.mxu0 %v598
    %1089 = vmatmul.mubr.f32.gmra.mrb[0].mxu0 %v596
    %v1090 = vpop.f32.mrb[0].mxu0
    %v1091 = vadd.f32 %v1021, %v1090
    %v1092 = vpop.f32.mrb[0].mxu0
    %1093 = vdwg.mxu0
    %1094 = vmatprep.subr.mxu0 0.0
    %1095 = vmatpush1.msra.mxu0 %v343
    %1096 = vmatprep.subr.mxu0 0.0
    %1097 = vmatpush1.msra.mxu0 %v344
    %1098 = vmatprep.subr.mxu0 0.0
    %1099 = vmatpush1.msra.mxu0 %v345
    %1100 = vmatprep.subr.mxu0 0.0
    %1101 = vmatpush1.msra.mxu0 %v346
    %1102 = vmatprep.subr.mxu0 0.0
    %1103 = vmatpush1.msra.mxu0 %v347
    %1104 = vmatprep.subr.mxu0 0.0
    %1105 = vmatpush1.msra.mxu0 %v348
    %1106 = vmatprep.subr.mxu0 0.0
    %1107 = vmatpush1.msra.mxu0 %v349
    %1108 = vmatprep.subr.mxu0 0.0
    %1109 = vmatpush1.msra.mxu0 %v350
    %1110 = vmatprep.subr.mxu0 0.0
    %1111 = vmatpush1.msra.mxu0 %v351
    %1112 = vmatprep.subr.mxu0 0.0
    %1113 = vmatpush1.msra.mxu0 %v352
    %1114 = vmatprep.subr.mxu0 0.0
    %1115 = vmatpush1.msra.mxu0 %v353
    %1116 = vmatprep.subr.mxu0 0.0
    %1117 = vmatpush1.msra.mxu0 %v354
    %1118 = vmatprep.subr.mxu0 0.0
    %1119 = vmatpush1.msra.mxu0 %v355
    %1120 = vmatprep.subr.mxu0 0.0
    %1121 = vmatpush1.msra.mxu0 %v356
    %1122 = vmatprep.subr.mxu0 0.0
    %1123 = vmatpush1.msra.mxu0 %v357
    %1124 = vmatprep.subr.mxu0 0.0
    %1125 = vmatpush1.msra.mxu0 %v358
    %1126 = vmatprep.subr.mxu0 0.0
    %1127 = vmatpush1.msra.mxu0 %v359
    %1128 = vmatprep.subr.mxu0 0.0
    %1129 = vmatpush1.msra.mxu0 %v360
    %1130 = vmatprep.subr.mxu0 0.0
    %1131 = vmatpush1.msra.mxu0 %v361
    %1132 = vmatprep.subr.mxu0 0.0
    %1133 = vmatpush1.msra.mxu0 %v362
    %1134 = vmatprep.subr.mxu0 0.0
    %1135 = vmatpush1.msra.mxu0 %v363
    %1136 = vmatprep.subr.mxu0 0.0
    %1137 = vmatpush1.msra.mxu0 %v364
    %1138 = vmatprep.subr.mxu0 0.0
    %1139 = vmatpush1.msra.mxu0 %v365
    %1140 = vmatprep.subr.mxu0 0.0
    %1141 = vmatpush1.msra.mxu0 %v366
    %1142 = vmatprep.subr.mxu0 0.0
    %1143 = vmatpush1.msra.mxu0 %v367
    %1144 = vmatprep.subr.mxu0 0.0
    %1145 = vmatpush1.msra.mxu0 %v368
    %1146 = vmatprep.subr.mxu0 0.0
    %1147 = vmatpush1.msra.mxu0 %v369
    %1148 = vmatprep.subr.mxu0 0.0
    %1149 = vmatpush1.msra.mxu0 %v370
    %1150 = vmatprep.subr.mxu0 0.0
    %1151 = vmatpush1.msra.mxu0 %v371
    %1152 = vmatprep.subr.mxu0 0.0
    %1153 = vmatpush1.msra.mxu0 %v372
    %1154 = vmatprep.subr.mxu0 0.0
    %1155 = vmatpush1.msra.mxu0 %v373
    %1156 = vmatprep.subr.mxu0 0.0
    %1157 = vmatpush1.msra.mxu0 %v374
    %1158 = vmatprep.mubr.f32.mxu0 %v614
    %1159 = vmatmul.mubr.f32.gmra.mrb[0].mxu0 %v606
    %v1160 = vpop.f32.mrb[0].mxu0
    %v1161 = vadd.f32 %v1091, %v1160
    %v1162 = vpop.f32.mrb[0].mxu0
    %1163 = vdwg.mxu0
    %1164 = vmatprep.subr.mxu0 0.0
    %1165 = vmatpush1.msra.mxu0 %v375
    %1166 = vmatprep.subr.mxu0 0.0
    %1167 = vmatpush1.msra.mxu0 %v376
    %1168 = vmatprep.subr.mxu0 0.0
    %1169 = vmatpush1.msra.mxu0 %v377
    %1170 = vmatprep.subr.mxu0 0.0
    %1171 = vmatpush1.msra.mxu0 %v378
    %1172 = vmatprep.subr.mxu0 0.0
    %1173 = vmatpush1.msra.mxu0 %v379
    %1174 = vmatprep.subr.mxu0 0.0
    %1175 = vmatpush1.msra.mxu0 %v380
    %1176 = vmatprep.subr.mxu0 0.0
    %1177 = vmatpush1.msra.mxu0 %v381
    %1178 = vmatprep.subr.mxu0 0.0
    %1179 = vmatpush1.msra.mxu0 %v382
    %1180 = vmatprep.subr.mxu0 0.0
    %1181 = vmatpush1.msra.mxu0 %v383
    %1182 = vmatprep.subr.mxu0 0.0
    %1183 = vmatpush1.msra.mxu0 %v384
    %1184 = vmatprep.subr.mxu0 0.0
    %1185 = vmatpush1.msra.mxu0 %v385
    %1186 = vmatprep.subr.mxu0 0.0
    %1187 = vmatpush1.msra.mxu0 %v386
    %1188 = vmatprep.subr.mxu0 0.0
    %1189 = vmatpush1.msra.mxu0 %v387
    %1190 = vmatprep.subr.mxu0 0.0
    %1191 = vmatpush1.msra.mxu0 %v388
    %1192 = vmatprep.subr.mxu0 0.0
    %1193 = vmatpush1.msra.mxu0 %v389
    %1194 = vmatprep.subr.mxu0 0.0
    %1195 = vmatpush1.msra.mxu0 %v390
    %1196 = vmatprep.subr.mxu0 0.0
    %1197 = vmatpush1.msra.mxu0 %v391
    %1198 = vmatprep.subr.mxu0 0.0
    %1199 = vmatpush1.msra.mxu0 %v392
    %1200 = vmatprep.subr.mxu0 0.0
    %1201 = vmatpush1.msra.mxu0 %v393
    %1202 = vmatprep.subr.mxu0 0.0
    %1203 = vmatpush1.msra.mxu0 %v394
    %1204 = vmatprep.subr.mxu0 0.0
    %1205 = vmatpush1.msra.mxu0 %v395
    %1206 = vmatprep.subr.mxu0 0.0
    %1207 = vmatpush1.msra.mxu0 %v396
    %1208 = vmatprep.subr.mxu0 0.0
    %1209 = vmatpush1.msra.mxu0 %v397
    %1210 = vmatprep.subr.mxu0 0.0
    %1211 = vmatpush1.msra.mxu0 %v398
    %1212 = vmatprep.subr.mxu0 0.0
    %1213 = vmatpush1.msra.mxu0 %v399
    %1214 = vmatprep.subr.mxu0 0.0
    %1215 = vmatpush1.msra.mxu0 %v400
    %1216 = vmatprep.subr.mxu0 0.0
    %1217 = vmatpush1.msra.mxu0 %v401
    %1218 = vmatprep.subr.mxu0 0.0
    %1219 = vmatpush1.msra.mxu0 %v402
    %1220 = vmatprep.subr.mxu0 0.0
    %1221 = vmatpush1.msra.mxu0 %v403
    %1222 = vmatprep.subr.mxu0 0.0
    %1223 = vmatpush1.msra.mxu0 %v404
    %1224 = vmatprep.subr.mxu0 0.0
    %1225 = vmatpush1.msra.mxu0 %v405
    %1226 = vmatprep.subr.mxu0 0.0
    %1227 = vmatpush1.msra.mxu0 %v406
    %1228 = vmatprep.mubr.f32.mxu0 %v615
    %1229 = vmatmul.mubr.f32.gmra.mrb[0].mxu0 %v613
    %v1230 = vpop.f32.mrb[0].mxu0
    %v1231 = vadd.f32 %v1161, %v1230
    %v1232 = vpop.f32.mrb[0].mxu0
    %1233 = vdwg.mxu0
    %1234 = vmatprep.subr.mxu0 0.0
    %1235 = vmatpush1.msra.mxu0 %v407
    %1236 = vmatprep.subr.mxu0 0.0
    %1237 = vmatpush1.msra.mxu0 %v408
    %1238 = vmatprep.subr.mxu0 0.0
    %1239 = vmatpush1.msra.mxu0 %v409
    %1240 = vmatprep.subr.mxu0 0.0
    %1241 = vmatpush1.msra.mxu0 %v410
    %1242 = vmatprep.subr.mxu0 0.0
    %1243 = vmatpush1.msra.mxu0 %v411
    %1244 = vmatprep.subr.mxu0 0.0
    %1245 = vmatpush1.msra.mxu0 %v412
    %1246 = vmatprep.subr.mxu0 0.0
    %1247 = vmatpush1.msra.mxu0 %v413
    %1248 = vmatprep.subr.mxu0 0.0
    %1249 = vmatpush1.msra.mxu0 %v414
    %1250 = vmatprep.subr.mxu0 0.0
    %1251 = vmatpush1.msra.mxu0 %v415
    %1252 = vmatprep.subr.mxu0 0.0
    %1253 = vmatpush1.msra.mxu0 %v416
    %1254 = vmatprep.subr.mxu0 0.0
    %1255 = vmatpush1.msra.mxu0 %v417
    %1256 = vmatprep.subr.mxu0 0.0
    %1257 = vmatpush1.msra.mxu0 %v418
    %1258 = vmatprep.subr.mxu0 0.0
    %1259 = vmatpush1.msra.mxu0 %v419
    %1260 = vmatprep.subr.mxu0 0.0
    %1261 = vmatpush1.msra.mxu0 %v420
    %1262 = vmatprep.subr.mxu0 0.0
    %1263 = vmatpush1.msra.mxu0 %v421
    %1264 = vmatprep.subr.mxu0 0.0
    %1265 = vmatpush1.msra.mxu0 %v422
    %1266 = vmatprep.subr.mxu0 0.0
    %1267 = vmatpush1.msra.mxu0 %v423
    %1268 = vmatprep.subr.mxu0 0.0
    %1269 = vmatpush1.msra.mxu0 %v424
    %1270 = vmatprep.subr.mxu0 0.0
    %1271 = vmatpush1.msra.mxu0 %v425
    %1272 = vmatprep.subr.mxu0 0.0
    %1273 = vmatpush1.msra.mxu0 %v426
    %1274 = vmatprep.subr.mxu0 0.0
    %1275 = vmatpush1.msra.mxu0 %v427
    %1276 = vmatprep.subr.mxu0 0.0
    %1277 = vmatpush1.msra.mxu0 %v428
    %1278 = vmatprep.subr.mxu0 0.0
    %1279 = vmatpush1.msra.mxu0 %v429
    %1280 = vmatprep.subr.mxu0 0.0
    %1281 = vmatpush1.msra.mxu0 %v430
    %1282 = vmatprep.subr.mxu0 0.0
    %1283 = vmatpush1.msra.mxu0 %v431
    %1284 = vmatprep.subr.mxu0 0.0
    %1285 = vmatpush1.msra.mxu0 %v432
    %1286 = vmatprep.subr.mxu0 0.0
    %1287 = vmatpush1.msra.mxu0 %v433
    %1288 = vmatprep.subr.mxu0 0.0
    %1289 = vmatpush1.msra.mxu0 %v434
    %1290 = vmatprep.subr.mxu0 0.0
    %1291 = vmatpush1.msra.mxu0 %v435
    %1292 = vmatprep.subr.mxu0 0.0
    %1293 = vmatpush1.msra.mxu0 %v436
    %1294 = vmatprep.subr.mxu0 0.0
    %1295 = vmatpush1.msra.mxu0 %v437
    %1296 = vmatprep.subr.mxu0 0.0
    %1297 = vmatpush1.msra.mxu0 %v438
    %1298 = vmatprep.mubr.f32.mxu0 %v631
    %1299 = vmatmul.mubr.f32.gmra.mrb[0].mxu0 %v623
    %v1300 = vpop.f32.mrb[0].mxu0
    %v1301 = vadd.f32 %v1231, %v1300
    %v1302 = vpop.f32.mrb[0].mxu0
    %1303 = vdwg.mxu0
    %1304 = vmatprep.subr.mxu0 0.0
    %1305 = vmatpush1.msra.mxu0 %v439
    %1306 = vmatprep.subr.mxu0 0.0
    %1307 = vmatpush1.msra.mxu0 %v440
    %1308 = vmatprep.subr.mxu0 0.0
    %1309 = vmatpush1.msra.mxu0 %v441
    %1310 = vmatprep.subr.mxu0 0.0
    %1311 = vmatpush1.msra.mxu0 %v442
    %1312 = vmatprep.subr.mxu0 0.0
    %1313 = vmatpush1.msra.mxu0 %v443
    %1314 = vmatprep.subr.mxu0 0.0
    %1315 = vmatpush1.msra.mxu0 %v444
    %1316 = vmatprep.subr.mxu0 0.0
    %1317 = vmatpush1.msra.mxu0 %v445
    %1318 = vmatprep.subr.mxu0 0.0
    %1319 = vmatpush1.msra.mxu0 %v446
    %1320 = vmatprep.subr.mxu0 0.0
    %1321 = vmatpush1.msra.mxu0 %v447
    %1322 = vmatprep.subr.mxu0 0.0
    %1323 = vmatpush1.msra.mxu0 %v448
    %1324 = vmatprep.subr.mxu0 0.0
    %1325 = vmatpush1.msra.mxu0 %v449
    %1326 = vmatprep.subr.mxu0 0.0
    %1327 = vmatpush1.msra.mxu0 %v450
    %1328 = vmatprep.subr.mxu0 0.0
    %1329 = vmatpush1.msra.mxu0 %v451
    %1330 = vmatprep.subr.mxu0 0.0
    %1331 = vmatpush1.msra.mxu0 %v452
    %1332 = vmatprep.subr.mxu0 0.0
    %1333 = vmatpush1.msra.mxu0 %v453
    %1334 = vmatprep.subr.mxu0 0.0
    %1335 = vmatpush1.msra.mxu0 %v454
    %1336 = vmatprep.subr.mxu0 0.0
    %1337 = vmatpush1.msra.mxu0 %v455
    %1338 = vmatprep.subr.mxu0 0.0
    %1339 = vmatpush1.msra.mxu0 %v456
    %1340 = vmatprep.subr.mxu0 0.0
    %1341 = vmatpush1.msra.mxu0 %v457
    %1342 = vmatprep.subr.mxu0 0.0
    %1343 = vmatpush1.msra.mxu0 %v458
    %1344 = vmatprep.subr.mxu0 0.0
    %1345 = vmatpush1.msra.mxu0 %v459
    %1346 = vmatprep.subr.mxu0 0.0
    %1347 = vmatpush1.msra.mxu0 %v460
    %1348 = vmatprep.subr.mxu0 0.0
    %1349 = vmatpush1.msra.mxu0 %v461
    %1350 = vmatprep.subr.mxu0 0.0
    %1351 = vmatpush1.msra.mxu0 %v462
    %1352 = vmatprep.subr.mxu0 0.0
    %1353 = vmatpush1.msra.mxu0 %v463
    %1354 = vmatprep.subr.mxu0 0.0
    %1355 = vmatpush1.msra.mxu0 %v464
    %1356 = vmatprep.subr.mxu0 0.0
    %1357 = vmatpush1.msra.mxu0 %v465
    %1358 = vmatprep.subr.mxu0 0.0
    %1359 = vmatpush1.msra.mxu0 %v466
    %1360 = vmatprep.subr.mxu0 0.0
    %1361 = vmatpush1.msra.mxu0 %v467
    %1362 = vmatprep.subr.mxu0 0.0
    %1363 = vmatpush1.msra.mxu0 %v468
    %1364 = vmatprep.subr.mxu0 0.0
    %1365 = vmatpush1.msra.mxu0 %v469
    %1366 = vmatprep.subr.mxu0 0.0
    %1367 = vmatpush1.msra.mxu0 %v470
    %1368 = vmatprep.mubr.f32.mxu0 %v632
    %1369 = vmatmul.mubr.f32.gmra.mrb[0].mxu0 %v630
    %v1370 = vpop.f32.mrb[0].mxu0
    %v1371 = vadd.f32 %v1301, %v1370
    %v1372 = vpop.f32.mrb[0].mxu0
    %1373 = vdwg.mxu0
    %1374 = vmatprep.subr.mxu0 0.0
    %1375 = vmatpush1.msra.mxu0 %v471
    %1376 = vmatprep.subr.mxu0 0.0
    %1377 = vmatpush1.msra.mxu0 %v472
    %1378 = vmatprep.subr.mxu0 0.0
    %1379 = vmatpush1.msra.mxu0 %v473
    %1380 = vmatprep.subr.mxu0 0.0
    %1381 = vmatpush1.msra.mxu0 %v474
    %1382 = vmatprep.subr.mxu0 0.0
    %1383 = vmatpush1.msra.mxu0 %v475
    %1384 = vmatprep.subr.mxu0 0.0
    %1385 = vmatpush1.msra.mxu0 %v476
    %1386 = vmatprep.subr.mxu0 0.0
    %1387 = vmatpush1.msra.mxu0 %v477
    %1388 = vmatprep.subr.mxu0 0.0
    %1389 = vmatpush1.msra.mxu0 %v478
    %1390 = vmatprep.subr.mxu0 0.0
    %1391 = vmatpush1.msra.mxu0 %v479
    %1392 = vmatprep.subr.mxu0 0.0
    %1393 = vmatpush1.msra.mxu0 %v480
    %1394 = vmatprep.subr.mxu0 0.0
    %1395 = vmatpush1.msra.mxu0 %v481
    %1396 = vmatprep.subr.mxu0 0.0
    %1397 = vmatpush1.msra.mxu0 %v482
    %1398 = vmatprep.subr.mxu0 0.0
    %1399 = vmatpush1.msra.mxu0 %v483
    %1400 = vmatprep.subr.mxu0 0.0
    %1401 = vmatpush1.msra.mxu0 %v484
    %1402 = vmatprep.subr.mxu0 0.0
    %1403 = vmatpush1.msra.mxu0 %v485
    %1404 = vmatprep.subr.mxu0 0.0
    %1405 = vmatpush1.msra.mxu0 %v486
    %1406 = vmatprep.subr.mxu0 0.0
    %1407 = vmatpush1.msra.mxu0 %v487
    %1408 = vmatprep.subr.mxu0 0.0
    %1409 = vmatpush1.msra.mxu0 %v488
    %1410 = vmatprep.subr.mxu0 0.0
    %1411 = vmatpush1.msra.mxu0 %v489
    %1412 = vmatprep.subr.mxu0 0.0
    %1413 = vmatpush1.msra.mxu0 %v490
    %1414 = vmatprep.subr.mxu0 0.0
    %1415 = vmatpush1.msra.mxu0 %v491
    %1416 = vmatprep.subr.mxu0 0.0
    %1417 = vmatpush1.msra.mxu0 %v492
    %1418 = vmatprep.subr.mxu0 0.0
    %1419 = vmatpush1.msra.mxu0 %v493
    %1420 = vmatprep.subr.mxu0 0.0
    %1421 = vmatpush1.msra.mxu0 %v494
    %1422 = vmatprep.subr.mxu0 0.0
    %1423 = vmatpush1.msra.mxu0 %v495
    %1424 = vmatprep.subr.mxu0 0.0
    %1425 = vmatpush1.msra.mxu0 %v496
    %1426 = vmatprep.subr.mxu0 0.0
    %1427 = vmatpush1.msra.mxu0 %v497
    %1428 = vmatprep.subr.mxu0 0.0
    %1429 = vmatpush1.msra.mxu0 %v498
    %1430 = vmatprep.subr.mxu0 0.0
    %1431 = vmatpush1.msra.mxu0 %v499
    %1432 = vmatprep.subr.mxu0 0.0
    %1433 = vmatpush1.msra.mxu0 %v500
    %1434 = vmatprep.subr.mxu0 0.0
    %1435 = vmatpush1.msra.mxu0 %v501
    %1436 = vmatprep.subr.mxu0 0.0
    %1437 = vmatpush1.msra.mxu0 %v502
    %1438 = vmatprep.mubr.f32.mxu0 %v648
    %1439 = vmatmul.mubr.f32.gmra.mrb[0].mxu0 %v640
    %v1440 = vpop.f32.mrb[0].mxu0
    %v1441 = vadd.f32 %v1371, %v1440
    %v1442 = vpop.f32.mrb[0].mxu0
    %1443 = vdwg.mxu0
    %1444 = vmatprep.subr.mxu0 0.0
    %1445 = vmatpush1.msra.mxu0 %v503
    %1446 = vmatprep.subr.mxu0 0.0
    %1447 = vmatpush1.msra.mxu0 %v504
    %1448 = vmatprep.subr.mxu0 0.0
    %1449 = vmatpush1.msra.mxu0 %v505
    %1450 = vmatprep.subr.mxu0 0.0
    %1451 = vmatpush1.msra.mxu0 %v506
    %1452 = vmatprep.subr.mxu0 0.0
    %1453 = vmatpush1.msra.mxu0 %v507
    %1454 = vmatprep.subr.mxu0 0.0
    %1455 = vmatpush1.msra.mxu0 %v508
    %1456 = vmatprep.subr.mxu0 0.0
    %1457 = vmatpush1.msra.mxu0 %v509
    %1458 = vmatprep.subr.mxu0 0.0
    %1459 = vmatpush1.msra.mxu0 %v510
    %1460 = vmatprep.subr.mxu0 0.0
    %1461 = vmatpush1.msra.mxu0 %v511
    %1462 = vmatprep.subr.mxu0 0.0
    %1463 = vmatpush1.msra.mxu0 %v512
    %1464 = vmatprep.subr.mxu0 0.0
    %1465 = vmatpush1.msra.mxu0 %v513
    %1466 = vmatprep.subr.mxu0 0.0
    %1467 = vmatpush1.msra.mxu0 %v514
    %1468 = vmatprep.subr.mxu0 0.0
    %1469 = vmatpush1.msra.mxu0 %v515
    %1470 = vmatprep.subr.mxu0 0.0
    %1471 = vmatpush1.msra.mxu0 %v516
    %1472 = vmatprep.subr.mxu0 0.0
    %1473 = vmatpush1.msra.mxu0 %v517
    %1474 = vmatprep.subr.mxu0 0.0
    %1475 = vmatpush1.msra.mxu0 %v518
    %1476 = vmatprep.subr.mxu0 0.0
    %1477 = vmatpush1.msra.mxu0 %v519
    %1478 = vmatprep.subr.mxu0 0.0
    %1479 = vmatpush1.msra.mxu0 %v520
    %1480 = vmatprep.subr.mxu0 0.0
    %1481 = vmatpush1.msra.mxu0 %v521
    %1482 = vmatprep.subr.mxu0 0.0
    %1483 = vmatpush1.msra.mxu0 %v522
    %1484 = vmatprep.subr.mxu0 0.0
    %1485 = vmatpush1.msra.mxu0 %v523
    %1486 = vmatprep.subr.mxu0 0.0
    %1487 = vmatpush1.msra.mxu0 %v524
    %1488 = vmatprep.subr.mxu0 0.0
    %1489 = vmatpush1.msra.mxu0 %v525
    %1490 = vmatprep.subr.mxu0 0.0
    %1491 = vmatpush1.msra.mxu0 %v526
    %1492 = vmatprep.subr.mxu0 0.0
    %1493 = vmatpush1.msra.mxu0 %v527
    %1494 = vmatprep.subr.mxu0 0.0
    %1495 = vmatpush1.msra.mxu0 %v528
    %1496 = vmatprep.subr.mxu0 0.0
    %1497 = vmatpush1.msra.mxu0 %v529
    %1498 = vmatprep.subr.mxu0 0.0
    %1499 = vmatpush1.msra.mxu0 %v530
    %1500 = vmatprep.subr.mxu0 0.0
    %1501 = vmatpush1.msra.mxu0 %v531
    %1502 = vmatprep.subr.mxu0 0.0
    %1503 = vmatpush1.msra.mxu0 %v532
    %1504 = vmatprep.subr.mxu0 0.0
    %1505 = vmatpush1.msra.mxu0 %v533
    %1506 = vmatprep.subr.mxu0 0.0
    %1507 = vmatpush1.msra.mxu0 %v534
    %1508 = vmatprep.mubr.f32.mxu0 %v649
    %1509 = vmatmul.mubr.f32.gmra.mrb[0].mxu0 %v647
    %v1510 = vpop.f32.mrb[0].mxu0
    %v1511 = vadd.f32 %v1441, %v1510
    %v1512 = vpop.f32.mrb[0].mxu0
    %1513 = vdwg.mxu0
    %v1514 = vmax.f32 %v1511, 0.0
    %v1515 = vld [vmem:[#allocation7] sm:$0xff]
    %v1516 = vld [vmem:[#allocation7 + $0x8] sm:$0xff]
    %v1517 = vld [vmem:[#allocation7 + $0x10] sm:$0xff]
    %v1518 = vld [vmem:[#allocation7 + $0x18] sm:$0xff]
    %v1519 = vld [vmem:[#allocation7 + $0x20] sm:$0xff]
    %v1520 = vld [vmem:[#allocation7 + $0x28] sm:$0xff]
    %v1521 = vld [vmem:[#allocation7 + $0x30] sm:$0xff]
    %v1522 = vld [vmem:[#allocation7 + $0x38] sm:$0xff]
    %v1523 = vld [vmem:[#allocation7 + $0x40] sm:$0xff]
    %v1524 = vld [vmem:[#allocation7 + $0x48] sm:$0xff]
    %v1525 = vld [vmem:[#allocation7 + $0x50] sm:$0xff]
    %v1526 = vld [vmem:[#allocation7 + $0x58] sm:$0xff]
    %v1527 = vld [vmem:[#allocation7 + $0x60] sm:$0xff]
    %v1528 = vld [vmem:[#allocation7 + $0x68] sm:$0xff]
    %v1529 = vld [vmem:[#allocation7 + $0x70] sm:$0xff]
    %v1530 = vld [vmem:[#allocation7 + $0x78] sm:$0xff]
    %v1531 = vld [vmem:[#allocation13] sm:$0x1]
    %v1533 = vlaneseq
    %v1534 = vshrl.u32 %v1533, 7
    %v1535 = vsub.s32 0, %v1534
    %v1536 = vrot.slane %v1531, %v1535
    %1538 = vmatprep.subr.mxu0 0.0
    %1539 = vmatpush1.msra.mxu0 %v1515
    %1540 = vmatprep.subr.mxu0 0.0
    %1541 = vmatpush1.msra.mxu0 %v1516
    %1542 = vmatprep.subr.mxu0 0.0
    %1543 = vmatpush1.msra.mxu0 %v1517
    %1544 = vmatprep.subr.mxu0 0.0
    %1545 = vmatpush1.msra.mxu0 %v1518
    %1546 = vmatprep.subr.mxu0 0.0
    %1547 = vmatpush1.msra.mxu0 %v1519
    %1548 = vmatprep.subr.mxu0 0.0
    %1549 = vmatpush1.msra.mxu0 %v1520
    %1550 = vmatprep.subr.mxu0 0.0
    %1551 = vmatpush1.msra.mxu0 %v1521
    %1552 = vmatprep.subr.mxu0 0.0
    %1553 = vmatpush1.msra.mxu0 %v1522
    %1554 = vmatprep.subr.mxu0 0.0
    %1555 = vmatpush1.msra.mxu0 %v1523
    %1556 = vmatprep.subr.mxu0 0.0
    %1557 = vmatpush1.msra.mxu0 %v1524
    %1558 = vmatprep.subr.mxu0 0.0
    %1559 = vmatpush1.msra.mxu0 %v1525
    %1560 = vmatprep.subr.mxu0 0.0
    %1561 = vmatpush1.msra.mxu0 %v1526
    %1562 = vmatprep.subr.mxu0 0.0
    %1563 = vmatpush1.msra.mxu0 %v1527
    %1564 = vmatprep.subr.mxu0 0.0
    %1565 = vmatpush1.msra.mxu0 %v1528
    %1566 = vmatprep.subr.mxu0 0.0
    %1567 = vmatpush1.msra.mxu0 %v1529
    %1568 = vmatprep.subr.mxu0 0.0
    %1569 = vmatpush1.msra.mxu0 %v1530
    %1570 = vmatprep.subr.mxu0 0.0
    %1571 = vmatpush1.msra.mxu0 0.0
    %1572 = vmatprep.subr.mxu0 0.0
    %1573 = vmatpush1.msra.mxu0 0.0
    %1574 = vmatprep.subr.mxu0 0.0
    %1575 = vmatpush1.msra.mxu0 0.0
    %1576 = vmatprep.subr.mxu0 0.0
    %1577 = vmatpush1.msra.mxu0 0.0
    %1578 = vmatprep.subr.mxu0 0.0
    %1579 = vmatpush1.msra.mxu0 0.0
    %1580 = vmatprep.subr.mxu0 0.0
    %1581 = vmatpush1.msra.mxu0 0.0
    %1582 = vmatprep.subr.mxu0 0.0
    %1583 = vmatpush1.msra.mxu0 0.0
    %1584 = vmatprep.subr.mxu0 0.0
    %1585 = vmatpush1.msra.mxu0 0.0
    %1586 = vmatprep.subr.mxu0 0.0
    %1587 = vmatpush1.msra.mxu0 0.0
    %1588 = vmatprep.subr.mxu0 0.0
    %1589 = vmatpush1.msra.mxu0 0.0
    %1590 = vmatprep.subr.mxu0 0.0
    %1591 = vmatpush1.msra.mxu0 0.0
    %1592 = vmatprep.subr.mxu0 0.0
    %1593 = vmatpush1.msra.mxu0 0.0
    %1594 = vmatprep.subr.mxu0 0.0
    %1595 = vmatpush1.msra.mxu0 0.0
    %1596 = vmatprep.subr.mxu0 0.0
    %1597 = vmatpush1.msra.mxu0 0.0
    %1598 = vmatprep.subr.mxu0 0.0
    %1599 = vmatpush1.msra.mxu0 0.0
    %1600 = vmatprep.subr.mxu0 0.0
    %1601 = vmatpush1.msra.mxu0 0.0
    %1602 = vmatprep.mubr.f32.mxu0 0.0
    %1603 = vmatmul.mubr.f32.gmra.mrb[0].mxu0 %v1514
    %v1604 = vpop.f32.mrb[0].mxu0
    %v1605 = vadd.f32 %v1536, %v1604
    %v1606 = vpop.f32.mrb[0].mxu0
    %1607 = vdwg.mxu0
    %v1608 = vmax.f32 %v1605, 0.0
    %v1609 = vld [vmem:[#allocation8] sm:$0xff]
    %v1610 = vld [vmem:[#allocation8 + $0x8] sm:$0xff]
    %v1611 = vld [vmem:[#allocation8 + $0x10] sm:$0xff]
    %v1612 = vld [vmem:[#allocation8 + $0x18] sm:$0xff]
    %v1613 = vld [vmem:[#allocation8 + $0x20] sm:$0xff]
    %v1614 = vld [vmem:[#allocation8 + $0x28] sm:$0xff]
    %v1615 = vld [vmem:[#allocation8 + $0x30] sm:$0xff]
    %v1616 = vld [vmem:[#allocation8 + $0x38] sm:$0xff]
    %v1617 = vld [vmem:[#allocation8 + $0x40] sm:$0xff]
    %v1618 = vld [vmem:[#allocation8 + $0x48] sm:$0xff]
    %v1619 = vld [vmem:[#allocation8 + $0x50] sm:$0xff]
    %v1620 = vld [vmem:[#allocation8 + $0x58] sm:$0xff]
    %v1621 = vld [vmem:[#allocation8 + $0x60] sm:$0xff]
    %v1622 = vld [vmem:[#allocation8 + $0x68] sm:$0xff]
    %v1623 = vld [vmem:[#allocation8 + $0x70] sm:$0xff]
    %v1624 = vld [vmem:[#allocation8 + $0x78] sm:$0xff]
    %v1625 = vld [vmem:[#allocation14] sm:$0x1]
    %v1627 = vlaneseq
    %v1628 = vshrl.u32 %v1627, 7
    %v1629 = vsub.s32 0, %v1628
    %v1630 = vrot.slane %v1625, %v1629
    %1632 = vmatprep.subr.mxu0 0.0
    %1633 = vmatpush1.msra.mxu0 %v1609
    %1634 = vmatprep.subr.mxu0 0.0
    %1635 = vmatpush1.msra.mxu0 %v1610
    %1636 = vmatprep.subr.mxu0 0.0
    %1637 = vmatpush1.msra.mxu0 %v1611
    %1638 = vmatprep.subr.mxu0 0.0
    %1639 = vmatpush1.msra.mxu0 %v1612
    %1640 = vmatprep.subr.mxu0 0.0
    %1641 = vmatpush1.msra.mxu0 %v1613
    %1642 = vmatprep.subr.mxu0 0.0
    %1643 = vmatpush1.msra.mxu0 %v1614
    %1644 = vmatprep.subr.mxu0 0.0
    %1645 = vmatpush1.msra.mxu0 %v1615
    %1646 = vmatprep.subr.mxu0 0.0
    %1647 = vmatpush1.msra.mxu0 %v1616
    %1648 = vmatprep.subr.mxu0 0.0
    %1649 = vmatpush1.msra.mxu0 %v1617
    %1650 = vmatprep.subr.mxu0 0.0
    %1651 = vmatpush1.msra.mxu0 %v1618
    %1652 = vmatprep.subr.mxu0 0.0
    %1653 = vmatpush1.msra.mxu0 %v1619
    %1654 = vmatprep.subr.mxu0 0.0
    %1655 = vmatpush1.msra.mxu0 %v1620
    %1656 = vmatprep.subr.mxu0 0.0
    %1657 = vmatpush1.msra.mxu0 %v1621
    %1658 = vmatprep.subr.mxu0 0.0
    %1659 = vmatpush1.msra.mxu0 %v1622
    %1660 = vmatprep.subr.mxu0 0.0
    %1661 = vmatpush1.msra.mxu0 %v1623
    %1662 = vmatprep.subr.mxu0 0.0
    %1663 = vmatpush1.msra.mxu0 %v1624
    %1664 = vmatprep.subr.mxu0 0.0
    %1665 = vmatpush1.msra.mxu0 0.0
    %1666 = vmatprep.subr.mxu0 0.0
    %1667 = vmatpush1.msra.mxu0 0.0
    %1668 = vmatprep.subr.mxu0 0.0
    %1669 = vmatpush1.msra.mxu0 0.0
    %1670 = vmatprep.subr.mxu0 0.0
    %1671 = vmatpush1.msra.mxu0 0.0
    %1672 = vmatprep.subr.mxu0 0.0
    %1673 = vmatpush1.msra.mxu0 0.0
    %1674 = vmatprep.subr.mxu0 0.0
    %1675 = vmatpush1.msra.mxu0 0.0
    %1676 = vmatprep.subr.mxu0 0.0
    %1677 = vmatpush1.msra.mxu0 0.0
    %1678 = vmatprep.subr.mxu0 0.0
    %1679 = vmatpush1.msra.mxu0 0.0
    %1680 = vmatprep.subr.mxu0 0.0
    %1681 = vmatpush1.msra.mxu0 0.0
    %1682 = vmatprep.subr.mxu0 0.0
    %1683 = vmatpush1.msra.mxu0 0.0
    %1684 = vmatprep.subr.mxu0 0.0
    %1685 = vmatpush1.msra.mxu0 0.0
    %1686 = vmatprep.subr.mxu0 0.0
    %1687 = vmatpush1.msra.mxu0 0.0
    %1688 = vmatprep.subr.mxu0 0.0
    %1689 = vmatpush1.msra.mxu0 0.0
    %1690 = vmatprep.subr.mxu0 0.0
    %1691 = vmatpush1.msra.mxu0 0.0
    %1692 = vmatprep.subr.mxu0 0.0
    %1693 = vmatpush1.msra.mxu0 0.0
    %1694 = vmatprep.subr.mxu0 0.0
    %1695 = vmatpush1.msra.mxu0 0.0
    %1696 = vmatprep.mubr.f32.mxu0 0.0
    %1697 = vmatmul.mubr.f32.gmra.mrb[0].mxu0 %v1608
    %v1698 = vpop.f32.mrb[0].mxu0
    %v1699 = vadd.f32 %v1630, %v1698
    %v1700 = vpop.f32.mrb[0].mxu0
    %1701 = vdwg.mxu0
    %v1702 = vmax.f32 %v1699, 0.0
    %v1703 = vld [vmem:[#allocation10] sm:$0xff]
    %v1704 = vld [vmem:[#allocation10 + $0x8] sm:$0xff]
    %v1705 = vld [vmem:[#allocation10 + $0x10] sm:$0xff]
    %v1706 = vld [vmem:[#allocation10 + $0x18] sm:$0xff]
    %v1707 = vld [vmem:[#allocation10 + $0x20] sm:$0xff]
    %v1708 = vld [vmem:[#allocation10 + $0x28] sm:$0xff]
    %v1709 = vld [vmem:[#allocation10 + $0x30] sm:$0xff]
    %v1710 = vld [vmem:[#allocation10 + $0x38] sm:$0xff]
    %v1711 = vld [vmem:[#allocation10 + $0x40] sm:$0xff]
    %v1712 = vld [vmem:[#allocation10 + $0x48] sm:$0xff]
    %v1713 = vld [vmem:[#allocation10 + $0x50] sm:$0xff]
    %v1714 = vld [vmem:[#allocation10 + $0x58] sm:$0xff]
    %v1715 = vld [vmem:[#allocation10 + $0x60] sm:$0xff]
    %v1716 = vld [vmem:[#allocation10 + $0x68] sm:$0xff]
    %v1717 = vld [vmem:[#allocation10 + $0x70] sm:$0xff]
    %v1718 = vld [vmem:[#allocation10 + $0x78] sm:$0xff]
    %v1719 = vld [vmem:[#allocation16] sm:$0x1]
    %v1721 = vlaneseq
    %v1722 = vshrl.u32 %v1721, 7
    %v1723 = vsub.s32 0, %v1722
    %v1724 = vrot.slane %v1719, %v1723
    %1726 = vmatprep.subr.mxu0 0.0
    %1727 = vmatpush1.msra.mxu0 %v1703
    %1728 = vmatprep.subr.mxu0 0.0
    %1729 = vmatpush1.msra.mxu0 %v1704
    %1730 = vmatprep.subr.mxu0 0.0
    %1731 = vmatpush1.msra.mxu0 %v1705
    %1732 = vmatprep.subr.mxu0 0.0
    %1733 = vmatpush1.msra.mxu0 %v1706
    %1734 = vmatprep.subr.mxu0 0.0
    %1735 = vmatpush1.msra.mxu0 %v1707
    %1736 = vmatprep.subr.mxu0 0.0
    %1737 = vmatpush1.msra.mxu0 %v1708
    %1738 = vmatprep.subr.mxu0 0.0
    %1739 = vmatpush1.msra.mxu0 %v1709
    %1740 = vmatprep.subr.mxu0 0.0
    %1741 = vmatpush1.msra.mxu0 %v1710
    %1742 = vmatprep.subr.mxu0 0.0
    %1743 = vmatpush1.msra.mxu0 %v1711
    %1744 = vmatprep.subr.mxu0 0.0
    %1745 = vmatpush1.msra.mxu0 %v1712
    %1746 = vmatprep.subr.mxu0 0.0
    %1747 = vmatpush1.msra.mxu0 %v1713
    %1748 = vmatprep.subr.mxu0 0.0
    %1749 = vmatpush1.msra.mxu0 %v1714
    %1750 = vmatprep.subr.mxu0 0.0
    %1751 = vmatpush1.msra.mxu0 %v1715
    %1752 = vmatprep.subr.mxu0 0.0
    %1753 = vmatpush1.msra.mxu0 %v1716
    %1754 = vmatprep.subr.mxu0 0.0
    %1755 = vmatpush1.msra.mxu0 %v1717
    %1756 = vmatprep.subr.mxu0 0.0
    %1757 = vmatpush1.msra.mxu0 %v1718
    %1758 = vmatprep.subr.mxu0 0.0
    %1759 = vmatpush1.msra.mxu0 0.0
    %1760 = vmatprep.subr.mxu0 0.0
    %1761 = vmatpush1.msra.mxu0 0.0
    %1762 = vmatprep.subr.mxu0 0.0
    %1763 = vmatpush1.msra.mxu0 0.0
    %1764 = vmatprep.subr.mxu0 0.0
    %1765 = vmatpush1.msra.mxu0 0.0
    %1766 = vmatprep.subr.mxu0 0.0
    %1767 = vmatpush1.msra.mxu0 0.0
    %1768 = vmatprep.subr.mxu0 0.0
    %1769 = vmatpush1.msra.mxu0 0.0
    %1770 = vmatprep.subr.mxu0 0.0
    %1771 = vmatpush1.msra.mxu0 0.0
    %1772 = vmatprep.subr.mxu0 0.0
    %1773 = vmatpush1.msra.mxu0 0.0
    %1774 = vmatprep.subr.mxu0 0.0
    %1775 = vmatpush1.msra.mxu0 0.0
    %1776 = vmatprep.subr.mxu0 0.0
    %1777 = vmatpush1.msra.mxu0 0.0
    %1778 = vmatprep.subr.mxu0 0.0
    %1779 = vmatpush1.msra.mxu0 0.0
    %1780 = vmatprep.subr.mxu0 0.0
    %1781 = vmatpush1.msra.mxu0 0.0
    %1782 = vmatprep.subr.mxu0 0.0
    %1783 = vmatpush1.msra.mxu0 0.0
    %1784 = vmatprep.subr.mxu0 0.0
    %1785 = vmatpush1.msra.mxu0 0.0
    %1786 = vmatprep.subr.mxu0 0.0
    %1787 = vmatpush1.msra.mxu0 0.0
    %1788 = vmatprep.subr.mxu0 0.0
    %1789 = vmatpush1.msra.mxu0 0.0
    %1790 = vmatprep.mubr.f32.mxu0 0.0
    %1791 = vmatmul.mubr.f32.gmra.mrb[0].mxu0 %v1702
    %v1792 = vpop.f32.mrb[0].mxu0
    %v1793 = vadd.f32 %v1724, %v1792
    %v1794 = vpop.f32.mrb[0].mxu0
    %1795 = vdwg.mxu0
    %1796 = vst [vmem:[#allocation17] sm:$0x3] %v1793
    // Predicated region
    $region74: #{tpu_custom_call.1} parent=1 // pred_check
      _
    $region75: #{tpu_custom_call.1} parent=1 // pred_check_branch
      %1798 = sbr.rel (0) target = $region77
    $region76: #{tpu_custom_call.1} parent=1 // pred_region
      %s1800 = ssub.s32 32, 32
      %1801 = vsyncadd [#allocation4], %s1800
      %s1803 = sshll.u32 [#allocation17], 4
      %s1804 = int_to_ptr.vmem [resolvable:$true] %s1803
      %1806 = dma.vmem_to_hbm [thread:$0]  %s1804, 32, %s9, [#allocation4]
    $region77: #{tpu_custom_call.1} parent=1 // pred_fallthru
      _
    // Predicated region
    $region78: #{tpu_custom_call.1} parent=1 // pred_check
      _
    $region79: #{tpu_custom_call.1} parent=1 // pred_check_branch
      %1808 = sbr.rel (0) target = $region81
    $region80: #{tpu_custom_call.1} parent=1 // pred_region
      %1809 = dma.done [#allocation4], 32
    $region81: #{tpu_custom_call.1} parent=1 // pred_fallthru
      _
    %1810 = vsyncpa [#allocation3], 1
    %1811 = vsyncpa [#allocation6], 1
    %1812 = vsyncpa [#allocation9], 1
    %1813 = vsyncpa [#allocation12], 1
    %1814 = vsyncpa [#allocation15], 1
    %1815 = vsyncpa [#allocation4], 1

// kernel: tpu_custom_call.1
$region0: #{tpu_custom_call.1}
  #allocation0 [shape = 'u32[]', space=smem, size = 0x4, offset = 0x4, fixed_abs, tag = 'smem constant byte address 0x4 - core index']
  #allocation1 [shape = 'u32[144,128]{1,0:T(1,128)}', space=vmem, size = 0x12000, scoped, tag = 'internal scratch']
  %s0 = inlined_call_operand.hbm [shape: f32[2,3072], index: 0, kind: input, shape index: {}]
  %s1 = inlined_call_operand.hbm [shape: f32[3072,128], index: 1, kind: input, shape index: {}]
  %s2 = inlined_call_operand.hbm [shape: f32[128,128], index: 2, kind: input, shape index: {}]
  %s3 = inlined_call_operand.hbm [shape: f32[128,128], index: 3, kind: input, shape index: {}]
  %s4 = inlined_call_operand.hbm [shape: f32[128,128], index: 4, kind: input, shape index: {}]
  %s5 = inlined_call_operand.hbm [shape: f32[1,128], index: 5, kind: input, shape index: {}]
  %s6 = inlined_call_operand.hbm [shape: f32[1,128], index: 6, kind: input, shape index: {}]
  %s7 = inlined_call_operand.hbm [shape: f32[1,128], index: 7, kind: input, shape index: {}]
  %s8 = inlined_call_operand.hbm [shape: f32[1,128], index: 8, kind: input, shape index: {}]
  %s9 = inlined_call_operand.hbm [shape: f32[2,128], index: 9, kind: output, shape index: {}]
  %s10 = sld [smem:[#allocation0]]
  $region82: #{tpu_custom_call.1} parent=0
    _
  %s12 = ssub.s32 1, %s10
  %s13 = scalar_select 0, %s12, %s10
  $region1: #{tpu_custom_call.1} parent=0
    #allocation2 [shape = 'u8[24576]{0}', space=vmem, size = 0x6000, scoped, tag = 'input window, operand 0, single buffered']
    #allocation3 [shape = 's32[1]{0}', space=sflag, size = 0x4, scoped, tag = 'scoped memory for tpu_custom_call.1']
    #allocation4 [shape = 's32[1]{0}', space=sflag, size = 0x4, scoped, tag = 'scoped memory for tpu_custom_call.1']
    #allocation5 [shape = 'u8[1572864]{0}', space=vmem, size = 0x180000, scoped, tag = 'input window, operand 1, single buffered']
    #allocation6 [shape = 's32[1]{0}', space=sflag, size = 0x4, scoped, tag = 'scoped memory for tpu_custom_call.1']
    #allocation7 [shape = 'u8[65536]{0}', space=vmem, size = 0x10000, scoped, tag = 'input window, operand 2, single buffered']
    #allocation8 [shape = 'u8[65536]{0}', space=vmem, size = 0x10000, scoped, tag = 'input window, operand 3, single buffered']
    #allocation9 [shape = 's32[1]{0}', space=sflag, size = 0x4, scoped, tag = 'scoped memory for tpu_custom_call.1']
    #allocation10 [shape = 'u8[65536]{0}', space=vmem, size = 0x10000, scoped, tag = 'input window, operand 4, single buffered']
    #allocation11 [shape = 'u8[512]{0}', space=vmem, size = 0x400, scoped, tag = 'input window, operand 5, single buffered']
    #allocation12 [shape = 's32[1]{0}', space=sflag, size = 0x4, scoped, tag = 'scoped memory for tpu_custom_call.1']
    #allocation13 [shape = 'u8[512]{0}', space=vmem, size = 0x400, scoped, tag = 'input window, operand 6, single buffered']
    #allocation14 [shape = 'u8[512]{0}', space=vmem, size = 0x400, scoped, tag = 'input window, operand 7, single buffered']
    #allocation15 [shape = 's32[1]{0}', space=sflag, size = 0x4, scoped, tag = 'scoped memory for tpu_custom_call.1']
    #allocation16 [shape = 'u8[512]{0}', space=vmem, size = 0x400, scoped, tag = 'input window, operand 8, single buffered']
    #allocation17 [shape = 'u8[1024]{0}', space=vmem, size = 0x400, scoped, tag = 'output window, operand 0, single buffered']
    %14 = vsyncpa [#allocation3], 0
    %15 = vsyncpa [#allocation6], 0
    %16 = vsyncpa [#allocation9], 0
    %17 = vsyncpa [#allocation12], 0
    %18 = vsyncpa [#allocation15], 0
    %19 = vsyncpa [#allocation4], 0
    // Predicated region
    $region2: #{tpu_custom_call.1} parent=1 // pred_check
      _
    $region3: #{tpu_custom_call.1} parent=1 // pred_check_branch
      %21 = sbr.rel (0) target = $region5
    $region4: #{tpu_custom_call.1} parent=1 // pred_region
      %s23 = ssub.s32 768, 768
      %24 = vsyncadd [#allocation3], %s23
      %s26 = sshll.u32 [#allocation2], 4
      %s27 = int_to_ptr.vmem [resolvable:$true] %s26
      %29 = dma.hbm_to_vmem [thread:$0]  %s0, 768, %s27, [#allocation3]
    $region5: #{tpu_custom_call.1} parent=1 // pred_fallthru
      _
    // Predicated region
    $region6: #{tpu_custom_call.1} parent=1 // pred_check
      _
    $region7: #{tpu_custom_call.1} parent=1 // pred_check_branch
      %31 = sbr.rel (0) target = $region9
    $region8: #{tpu_custom_call.1} parent=1 // pred_region
      %s33 = ssub.s32 49152, 49152
      %34 = vsyncadd [#allocation6], %s33
      %s35 = sshll.u32 [#allocation5], 4
      %s36 = int_to_ptr.vmem [resolvable:$true] %s35
      %41 = dma.hbm_to_vmem [thread:$0]  %s1, 49152, %s36, [#allocation6], 128, 128, 8
    $region9: #{tpu_custom_call.1} parent=1 // pred_fallthru
      _
    // Predicated region
    $region10: #{tpu_custom_call.1} parent=1 // pred_check
      _
    $region11: #{tpu_custom_call.1} parent=1 // pred_check_branch
      %43 = sbr.rel (0) target = $region13
    $region12: #{tpu_custom_call.1} parent=1 // pred_region
      %s45 = ssub.s32 2048, 2048
      %46 = vsyncadd [#allocation6], %s45
      %s47 = sshll.u32 [#allocation7], 4
      %s48 = int_to_ptr.vmem [resolvable:$true] %s47
      %53 = dma.hbm_to_vmem [thread:$0]  %s2, 2048, %s48, [#allocation6], 128, 128, 8
    $region13: #{tpu_custom_call.1} parent=1 // pred_fallthru
      _
    // Predicated region
    $region14: #{tpu_custom_call.1} parent=1 // pred_check
      _
    $region15: #{tpu_custom_call.1} parent=1 // pred_check_branch
      %55 = sbr.rel (0) target = $region17
    $region16: #{tpu_custom_call.1} parent=1 // pred_region
      %s57 = ssub.s32 2048, 2048
      %58 = vsyncadd [#allocation9], %s57
      %s59 = sshll.u32 [#allocation8], 4
      %s60 = int_to_ptr.vmem [resolvable:$true] %s59
      %65 = dma.hbm_to_vmem [thread:$0]  %s3, 2048, %s60, [#allocation9], 128, 128, 8
    $region17: #{tpu_custom_call.1} parent=1 // pred_fallthru
      _
    // Predicated region
    $region18: #{tpu_custom_call.1} parent=1 // pred_check
      _
    $region19: #{tpu_custom_call.1} parent=1 // pred_check_branch
      %67 = sbr.rel (0) target = $region21
    $region20: #{tpu_custom_call.1} parent=1 // pred_region
      %s69 = ssub.s32 2048, 2048
      %70 = vsyncadd [#allocation9], %s69
      %s71 = sshll.u32 [#allocation10], 4
      %s72 = int_to_ptr.vmem [resolvable:$true] %s71
      %77 = dma.hbm_to_vmem [thread:$0]  %s4, 2048, %s72, [#allocation9], 128, 128, 8
    $region21: #{tpu_custom_call.1} parent=1 // pred_fallthru
      _
    // Predicated region
    $region22: #{tpu_custom_call.1} parent=1 // pred_check
      _
    $region23: #{tpu_custom_call.1} parent=1 // pred_check_branch
      %79 = sbr.rel (0) target = $region25
    $region24: #{tpu_custom_call.1} parent=1 // pred_region
      %s81 = ssub.s32 16, 16
      %82 = vsyncadd [#allocation12], %s81
      %s84 = sshll.u32 [#allocation11], 4
      %s85 = int_to_ptr.vmem [resolvable:$true] %s84
      %87 = dma.hbm_to_vmem [thread:$0]  %s5, 16, %s85, [#allocation12]
    $region25: #{tpu_custom_call.1} parent=1 // pred_fallthru
      _
    // Predicated region
    $region26: #{tpu_custom_call.1} parent=1 // pred_check
      _
    $region27: #{tpu_custom_call.1} parent=1 // pred_check_branch
      %89 = sbr.rel (0) target = $region29
    $region28: #{tpu_custom_call.1} parent=1 // pred_region
      %s91 = ssub.s32 16, 16
      %92 = vsyncadd [#allocation12], %s91
      %s94 = sshll.u32 [#allocation13], 4
      %s95 = int_to_ptr.vmem [resolvable:$true] %s94
      %97 = dma.hbm_to_vmem [thread:$0]  %s6, 16, %s95, [#allocation12]
    $region29: #{tpu_custom_call.1} parent=1 // pred_fallthru
      _
    // Predicated region
    $region30: #{tpu_custom_call.1} parent=1 // pred_check
      _
    $region31: #{tpu_custom_call.1} parent=1 // pred_check_branch
      %99 = sbr.rel (0) target = $region33
    $region32: #{tpu_custom_call.1} parent=1 // pred_region
      %s101 = ssub.s32 16, 16
      %102 = vsyncadd [#allocation15], %s101
      %s104 = sshll.u32 [#allocation14], 4
      %s105 = int_to_ptr.vmem [resolvable:$true] %s104
      %107 = dma.hbm_to_vmem [thread:$0]  %s7, 16, %s105, [#allocation15]
    $region33: #{tpu_custom_call.1} parent=1 // pred_fallthru
      _
    // Predicated region
    $region34: #{tpu_custom_call.1} parent=1 // pred_check
      _
    $region35: #{tpu_custom_call.1} parent=1 // pred_check_branch
      %109 = sbr.rel (0) target = $region37
    $region36: #{tpu_custom_call.1} parent=1 // pred_region
      %s111 = ssub.s32 16, 16
      %112 = vsyncadd [#allocation15], %s111
      %s114 = sshll.u32 [#allocation16], 4
      %s115 = int_to_ptr.vmem [resolvable:$true] %s114
      %117 = dma.hbm_to_vmem [thread:$0]  %s8, 16, %s115, [#allocation15]
    $region37: #{tpu_custom_call.1} parent=1 // pred_fallthru
      _
    // Predicated region
    $region38: #{tpu_custom_call.1} parent=1 // pred_check
      _
    $region39: #{tpu_custom_call.1} parent=1 // pred_check_branch
      %119 = sbr.rel (0) target = $region41
    $region40: #{tpu_custom_call.1} parent=1 // pred_region
      %120 = dma.done [#allocation3], 768
    $region41: #{tpu_custom_call.1} parent=1 // pred_fallthru
      _
    // Predicated region
    $region42: #{tpu_custom_call.1} parent=1 // pred_check
      _
    $region43: #{tpu_custom_call.1} parent=1 // pred_check_branch
      %122 = sbr.rel (0) target = $region45
    $region44: #{tpu_custom_call.1} parent=1 // pred_region
      %123 = dma.done [#allocation6], 49152
    $region45: #{tpu_custom_call.1} parent=1 // pred_fallthru
      _
    // Predicated region
    $region46: #{tpu_custom_call.1} parent=1 // pred_check
      _
    $region47: #{tpu_custom_call.1} parent=1 // pred_check_branch
      %125 = sbr.rel (0) target = $region49
    $region48: #{tpu_custom_call.1} parent=1 // pred_region
      %126 = dma.done [#allocation6], 2048
    $region49: #{tpu_custom_call.1} parent=1 // pred_fallthru
      _
    // Predicated region
    $region50: #{tpu_custom_call.1} parent=1 // pred_check
      _
    $region51: #{tpu_custom_call.1} parent=1 // pred_check_branch
      %128 = sbr.rel (0) target = $region53
    $region52: #{tpu_custom_call.1} parent=1 // pred_region
      %129 = dma.done [#allocation9], 2048
    $region53: #{tpu_custom_call.1} parent=1 // pred_fallthru
      _
    // Predicated region
    $region54: #{tpu_custom_call.1} parent=1 // pred_check
      _
    $region55: #{tpu_custom_call.1} parent=1 // pred_check_branch
      %131 = sbr.rel (0) target = $region57
    $region56: #{tpu_custom_call.1} parent=1 // pred_region
      %132 = dma.done [#allocation9], 2048
    $region57: #{tpu_custom_call.1} parent=1 // pred_fallthru
      _
    // Predicated region
    $region58: #{tpu_custom_call.1} parent=1 // pred_check
      _
    $region59: #{tpu_custom_call.1} parent=1 // pred_check_branch
      %134 = sbr.rel (0) target = $region61
    $region60: #{tpu_custom_call.1} parent=1 // pred_region
      %135 = dma.done [#allocation12], 16
    $region61: #{tpu_custom_call.1} parent=1 // pred_fallthru
      _
    // Predicated region
    $region62: #{tpu_custom_call.1} parent=1 // pred_check
      _
    $region63: #{tpu_custom_call.1} parent=1 // pred_check_branch
      %137 = sbr.rel (0) target = $region65
    $region64: #{tpu_custom_call.1} parent=1 // pred_region
      %138 = dma.done [#allocation12], 16
    $region65: #{tpu_custom_call.1} parent=1 // pred_fallthru
      _
    // Predicated region
    $region66: #{tpu_custom_call.1} parent=1 // pred_check
      _
    $region67: #{tpu_custom_call.1} parent=1 // pred_check_branch
      %140 = sbr.rel (0) target = $region69
    $region68: #{tpu_custom_call.1} parent=1 // pred_region
      %141 = dma.done [#allocation15], 16
    $region69: #{tpu_custom_call.1} parent=1 // pred_fallthru
      _
    // Predicated region
    $region70: #{tpu_custom_call.1} parent=1 // pred_check
      _
    $region71: #{tpu_custom_call.1} parent=1 // pred_check_branch
      %143 = sbr.rel (0) target = $region73
    $region72: #{tpu_custom_call.1} parent=1 // pred_region
      %144 = dma.done [#allocation15], 16
    $region73: #{tpu_custom_call.1} parent=1 // pred_fallthru
      _
    %v145 = vld [vmem:[#allocation2] sm:$0xff]
    %v146 = vld [vmem:[#allocation2 + $0x8] sm:$0xff]
    %v147 = vld [vmem:[#allocation2 + $0x10] sm:$0xff]
    %v148 = vld [vmem:[#allocation2 + $0x18] sm:$0xff]
    %v149 = vld [vmem:[#allocation2 + $0x20] sm:$0xff]
    %v150 = vld [vmem:[#allocation2 + $0x28] sm:$0xff]
    %v151 = vld [vmem:[#allocation5] sm:$0xff]
    %v152 = vld [vmem:[#allocation5 + $0x8] sm:$0xff]
    %v153 = vld [vmem:[#allocation5 + $0x10] sm:$0xff]
    %v154 = vld [vmem:[#allocation5 + $0x18] sm:$0xff]
    %v155 = vld [vmem:[#allocation5 + $0x20] sm:$0xff]
    %v156 = vld [vmem:[#allocation5 + $0x28] sm:$0xff]
    %v157 = vld [vmem:[#allocation5 + $0x30] sm:$0xff]
    %v158 = vld [vmem:[#allocation5 + $0x38] sm:$0xff]
    %v159 = vld [vmem:[#allocation5 + $0x40] sm:$0xff]
    %v160 = vld [vmem:[#allocation5 + $0x48] sm:$0xff]
    %v161 = vld [vmem:[#allocation5 + $0x50] sm:$0xff]
    %v162 = vld [vmem:[#allocation5 + $0x58] sm:$0xff]
    %v163 = vld [vmem:[#allocation5 + $0x60] sm:$0xff]
    %v164 = vld [vmem:[#allocation5 + $0x68] sm:$0xff]
    %v165 = vld [vmem:[#allocation5 + $0x70] sm:$0xff]
    %v166 = vld [vmem:[#allocation5 + $0x78] sm:$0xff]
    %v167 = vld [vmem:[#allocation5 + $0x80] sm:$0xff]
    %v168 = vld [vmem:[#allocation5 + $0x88] sm:$0xff]
    %v169 = vld [vmem:[#allocation5 + $0x90] sm:$0xff]
    %v170 = vld [vmem:[#allocation5 + $0x98] sm:$0xff]
    %v171 = vld [vmem:[#allocation5 + $0xa0] sm:$0xff]
    %v172 = vld [vmem:[#allocation5 + $0xa8] sm:$0xff]
    %v173 = vld [vmem:[#allocation5 + $0xb0] sm:$0xff]
    %v174 = vld [vmem:[#allocation5 + $0xb8] sm:$0xff]
    %v175 = vld [vmem:[#allocation5 + $0xc0] sm:$0xff]
    %v176 = vld [vmem:[#allocation5 + $0xc8] sm:$0xff]
    %v177 = vld [vmem:[#allocation5 + $0xd0] sm:$0xff]
    %v178 = vld [vmem:[#allocation5 + $0xd8] sm:$0xff]
    %v179 = vld [vmem:[#allocation5 + $0xe0] sm:$0xff]
    %v180 = vld [vmem:[#allocation5 + $0xe8] sm:$0xff]
    %v181 = vld [vmem:[#allocation5 + $0xf0] sm:$0xff]
    %v182 = vld [vmem:[#allocation5 + $0xf8] sm:$0xff]
    %v183 = vld [vmem:[#allocation5 + $0x100] sm:$0xff]
    %v184 = vld [vmem:[#allocation5 + $0x108] sm:$0xff]
    %v185 = vld [vmem:[#allocation5 + $0x110] sm:$0xff]
    %v186 = vld [vmem:[#allocation5 + $0x118] sm:$0xff]
    %v187 = vld [vmem:[#allocation5 + $0x120] sm:$0xff]
    %v188 = vld [vmem:[#allocation5 + $0x128] sm:$0xff]
    %v189 = vld [vmem:[#allocation5 + $0x130] sm:$0xff]
    %v190 = vld [vmem:[#allocation5 + $0x138] sm:$0xff]
    %v191 = vld [vmem:[#allocation5 + $0x140] sm:$0xff]
    %v192 = vld [vmem:[#allocation5 + $0x148] sm:$0xff]
    %v193 = vld [vmem:[#allocation5 + $0x150] sm:$0xff]
    %v194 = vld [vmem:[#allocation5 + $0x158] sm:$0xff]
    %v195 = vld [vmem:[#allocation5 + $0x160] sm:$0xff]
    %v196 = vld [vmem:[#allocation5 + $0x168] sm:$0xff]
    %v197 = vld [vmem:[#allocation5 + $0x170] sm:$0xff]
    %v198 = vld [vmem:[#allocation5 + $0x178] sm:$0xff]
    %v199 = vld [vmem:[#allocation5 + $0x180] sm:$0xff]
    %v200 = vld [vmem:[#allocation5 + $0x188] sm:$0xff]
    %v201 = vld [vmem:[#allocation5 + $0x190] sm:$0xff]
    %v202 = vld [vmem:[#allocation5 + $0x198] sm:$0xff]
    %v203 = vld [vmem:[#allocation5 + $0x1a0] sm:$0xff]
    %v204 = vld [vmem:[#allocation5 + $0x1a8] sm:$0xff]
    %v205 = vld [vmem:[#allocation5 + $0x1b0] sm:$0xff]
    %v206 = vld [vmem:[#allocation5 + $0x1b8] sm:$0xff]
    %v207 = vld [vmem:[#allocation5 + $0x1c0] sm:$0xff]
    %v208 = vld [vmem:[#allocation5 + $0x1c8] sm:$0xff]
    %v209 = vld [vmem:[#allocation5 + $0x1d0] sm:$0xff]
    %v210 = vld [vmem:[#allocation5 + $0x1d8] sm:$0xff]
    %v211 = vld [vmem:[#allocation5 + $0x1e0] sm:$0xff]
    %v212 = vld [vmem:[#allocation5 + $0x1e8] sm:$0xff]
    %v213 = vld [vmem:[#allocation5 + $0x1f0] sm:$0xff]
    %v214 = vld [vmem:[#allocation5 + $0x1f8] sm:$0xff]
    %v215 = vld [vmem:[#allocation5 + $0x200] sm:$0xff]
    %v216 = vld [vmem:[#allocation5 + $0x208] sm:$0xff]
    %v217 = vld [vmem:[#allocation5 + $0x210] sm:$0xff]
    %v218 = vld [vmem:[#allocation5 + $0x218] sm:$0xff]
    %v219 = vld [vmem:[#allocation5 + $0x220] sm:$0xff]
    %v220 = vld [vmem:[#allocation5 + $0x228] sm:$0xff]
    %v221 = vld [vmem:[#allocation5 + $0x230] sm:$0xff]
    %v222 = vld [vmem:[#allocation5 + $0x238] sm:$0xff]
    %v223 = vld [vmem:[#allocation5 + $0x240] sm:$0xff]
    %v224 = vld [vmem:[#allocation5 + $0x248] sm:$0xff]
    %v225 = vld [vmem:[#allocation5 + $0x250] sm:$0xff]
    %v226 = vld [vmem:[#allocation5 + $0x258] sm:$0xff]
    %v227 = vld [vmem:[#allocation5 + $0x260] sm:$0xff]
    %v228 = vld [vmem:[#allocation5 + $0x268] sm:$0xff]
    %v229 = vld [vmem:[#allocation5 + $0x270] sm:$0xff]
    %v230 = vld [vmem:[#allocation5 + $0x278] sm:$0xff]
    %v231 = vld [vmem:[#allocation5 + $0x280] sm:$0xff]
    %v232 = vld [vmem:[#allocation5 + $0x288] sm:$0xff]
    %v233 = vld [vmem:[#allocation5 + $0x290] sm:$0xff]
    %v234 = vld [vmem:[#allocation5 + $0x298] sm:$0xff]
    %v235 = vld [vmem:[#allocation5 + $0x2a0] sm:$0xff]
    %v236 = vld [vmem:[#allocation5 + $0x2a8] sm:$0xff]
    %v237 = vld [vmem:[#allocation5 + $0x2b0] sm:$0xff]
    %v238 = vld [vmem:[#allocation5 + $0x2b8] sm:$0xff]
    %v239 = vld [vmem:[#allocation5 + $0x2c0] sm:$0xff]
    %v240 = vld [vmem:[#allocation5 + $0x2c8] sm:$0xff]
    %v241 = vld [vmem:[#allocation5 + $0x2d0] sm:$0xff]
    %v242 = vld [vmem:[#allocation5 + $0x2d8] sm:$0xff]
    %v243 = vld [vmem:[#allocation5 + $0x2e0] sm:$0xff]
    %v244 = vld [vmem:[#allocation5 + $0x2e8] sm:$0xff]
    %v245 = vld [vmem:[#allocation5 + $0x2f0] sm:$0xff]
    %v246 = vld [vmem:[#allocation5 + $0x2f8] sm:$0xff]
    %v247 = vld [vmem:[#allocation5 + $0x300] sm:$0xff]
    %v248 = vld [vmem:[#allocation5 + $0x308] sm:$0xff]
    %v249 = vld [vmem:[#allocation5 + $0x310] sm:$0xff]
    %v250 = vld [vmem:[#allocation5 + $0x318] sm:$0xff]
    %v251 = vld [vmem:[#allocation5 + $0x320] sm:$0xff]
    %v252 = vld [vmem:[#allocation5 + $0x328] sm:$0xff]
    %v253 = vld [vmem:[#allocation5 + $0x330] sm:$0xff]
    %v254 = vld [vmem:[#allocation5 + $0x338] sm:$0xff]
    %v255 = vld [vmem:[#allocation5 + $0x340] sm:$0xff]
    %v256 = vld [vmem:[#allocation5 + $0x348] sm:$0xff]
    %v257 = vld [vmem:[#allocation5 + $0x350] sm:$0xff]
    %v258 = vld [vmem:[#allocation5 + $0x358] sm:$0xff]
    %v259 = vld [vmem:[#allocation5 + $0x360] sm:$0xff]
    %v260 = vld [vmem:[#allocation5 + $0x368] sm:$0xff]
    %v261 = vld [vmem:[#allocation5 + $0x370] sm:$0xff]
    %v262 = vld [vmem:[#allocation5 + $0x378] sm:$0xff]
    %v263 = vld [vmem:[#allocation5 + $0x380] sm:$0xff]
    %v264 = vld [vmem:[#allocation5 + $0x388] sm:$0xff]
    %v265 = vld [vmem:[#allocation5 + $0x390] sm:$0xff]
    %v266 = vld [vmem:[#allocation5 + $0x398] sm:$0xff]
    %v267 = vld [vmem:[#allocation5 + $0x3a0] sm:$0xff]
    %v268 = vld [vmem:[#allocation5 + $0x3a8] sm:$0xff]
    %v269 = vld [vmem:[#allocation5 + $0x3b0] sm:$0xff]
    %v270 = vld [vmem:[#allocation5 + $0x3b8] sm:$0xff]
    %v271 = vld [vmem:[#allocation5 + $0x3c0] sm:$0xff]
    %v272 = vld [vmem:[#allocation5 + $0x3c8] sm:$0xff]
    %v273 = vld [vmem:[#allocation5 + $0x3d0] sm:$0xff]
    %v274 = vld [vmem:[#allocation5 + $0x3d8] sm:$0xff]
    %v275 = vld [vmem:[#allocation5 + $0x3e0] sm:$0xff]
    %v276 = vld [vmem:[#allocation5 + $0x3e8] sm:$0xff]
    %v277 = vld [vmem:[#allocation5 + $0x3f0] sm:$0xff]
    %v278 = vld [vmem:[#allocation5 + $0x3f8] sm:$0xff]
    %v279 = vld [vmem:[#allocation5 + $0x400] sm:$0xff]
    %v280 = vld [vmem:[#allocation5 + $0x408] sm:$0xff]
    %v281 = vld [vmem:[#allocation5 + $0x410] sm:$0xff]
    %v282 = vld [vmem:[#allocation5 + $0x418] sm:$0xff]
    %v283 = vld [vmem:[#allocation5 + $0x420] sm:$0xff]
    %v284 = vld [vmem:[#allocation5 + $0x428] sm:$0xff]
    %v285 = vld [vmem:[#allocation5 + $0x430] sm:$0xff]
    %v286 = vld [vmem:[#allocation5 + $0x438] sm:$0xff]
    %v287 = vld [vmem:[#allocation5 + $0x440] sm:$0xff]
    %v288 = vld [vmem:[#allocation5 + $0x448] sm:$0xff]
    %v289 = vld [vmem:[#allocation5 + $0x450] sm:$0xff]
    %v290 = vld [vmem:[#allocation5 + $0x458] sm:$0xff]
    %v291 = vld [vmem:[#allocation5 + $0x460] sm:$0xff]
    %v292 = vld [vmem:[#allocation5 + $0x468] sm:$0xff]
    %v293 = vld [vmem:[#allocation5 + $0x470] sm:$0xff]
    %v294 = vld [vmem:[#allocation5 + $0x478] sm:$0xff]
    %v295 = vld [vmem:[#allocation5 + $0x480] sm:$0xff]
    %v296 = vld [vmem:[#allocation5 + $0x488] sm:$0xff]
    %v297 = vld [vmem:[#allocation5 + $0x490] sm:$0xff]
    %v298 = vld [vmem:[#allocation5 + $0x498] sm:$0xff]
    %v299 = vld [vmem:[#allocation5 + $0x4a0] sm:$0xff]
    %v300 = vld [vmem:[#allocation5 + $0x4a8] sm:$0xff]
    %v301 = vld [vmem:[#allocation5 + $0x4b0] sm:$0xff]
    %v302 = vld [vmem:[#allocation5 + $0x4b8] sm:$0xff]
    %v303 = vld [vmem:[#allocation5 + $0x4c0] sm:$0xff]
    %v304 = vld [vmem:[#allocation5 + $0x4c8] sm:$0xff]
    %v305 = vld [vmem:[#allocation5 + $0x4d0] sm:$0xff]
    %v306 = vld [vmem:[#allocation5 + $0x4d8] sm:$0xff]
    %v307 = vld [vmem:[#allocation5 + $0x4e0] sm:$0xff]
    %v308 = vld [vmem:[#allocation5 + $0x4e8] sm:$0xff]
    %v309 = vld [vmem:[#allocation5 + $0x4f0] sm:$0xff]
    %v310 = vld [vmem:[#allocation5 + $0x4f8] sm:$0xff]
    %v311 = vld [vmem:[#allocation5 + $0x500] sm:$0xff]
    %v312 = vld [vmem:[#allocation5 + $0x508] sm:$0xff]
    %v313 = vld [vmem:[#allocation5 + $0x510] sm:$0xff]
    %v314 = vld [vmem:[#allocation5 + $0x518] sm:$0xff]
    %v315 = vld [vmem:[#allocation5 + $0x520] sm:$0xff]
    %v316 = vld [vmem:[#allocation5 + $0x528] sm:$0xff]
    %v317 = vld [vmem:[#allocation5 + $0x530] sm:$0xff]
    %v318 = vld [vmem:[#allocation5 + $0x538] sm:$0xff]
    %v319 = vld [vmem:[#allocation5 + $0x540] sm:$0xff]
    %v320 = vld [vmem:[#allocation5 + $0x548] sm:$0xff]
    %v321 = vld [vmem:[#allocation5 + $0x550] sm:$0xff]
    %v322 = vld [vmem:[#allocation5 + $0x558] sm:$0xff]
    %v323 = vld [vmem:[#allocation5 + $0x560] sm:$0xff]
    %v324 = vld [vmem:[#allocation5 + $0x568] sm:$0xff]
    %v325 = vld [vmem:[#allocation5 + $0x570] sm:$0xff]
    %v326 = vld [vmem:[#allocation5 + $0x578] sm:$0xff]
    %v327 = vld [vmem:[#allocation5 + $0x580] sm:$0xff]
    %v328 = vld [vmem:[#allocation5 + $0x588] sm:$0xff]
    %v329 = vld [vmem:[#allocation5 + $0x590] sm:$0xff]
    %v330 = vld [vmem:[#allocation5 + $0x598] sm:$0xff]
    %v331 = vld [vmem:[#allocation5 + $0x5a0] sm:$0xff]
    %v332 = vld [vmem:[#allocation5 + $0x5a8] sm:$0xff]
    %v333 = vld [vmem:[#allocation5 + $0x5b0] sm:$0xff]
    %v334 = vld [vmem:[#allocation5 + $0x5b8] sm:$0xff]
    %v335 = vld [vmem:[#allocation5 + $0x5c0] sm:$0xff]
    %v336 = vld [vmem:[#allocation5 + $0x5c8] sm:$0xff]
    %v337 = vld [vmem:[#allocation5 + $0x5d0] sm:$0xff]
    %v338 = vld [vmem:[#allocation5 + $0x5d8] sm:$0xff]
    %v339 = vld [vmem:[#allocation5 + $0x5e0] sm:$0xff]
    %v340 = vld [vmem:[#allocation5 + $0x5e8] sm:$0xff]
    %v341 = vld [vmem:[#allocation5 + $0x5f0] sm:$0xff]
    %v342 = vld [vmem:[#allocation5 + $0x5f8] sm:$0xff]
    %v343 = vld [vmem:[#allocation5 + $0x600] sm:$0xff]
    %v344 = vld [vmem:[#allocation5 + $0x608] sm:$0xff]
    %v345 = vld [vmem:[#allocation5 + $0x610] sm:$0xff]
    %v346 = vld [vmem:[#allocation5 + $0x618] sm:$0xff]
    %v347 = vld [vmem:[#allocation5 + $0x620] sm:$0xff]
    %v348 = vld [vmem:[#allocation5 + $0x628] sm:$0xff]
    %v349 = vld [vmem:[#allocation5 + $0x630] sm:$0xff]
    %v350 = vld [vmem:[#allocation5 + $0x638] sm:$0xff]
    %v351 = vld [vmem:[#allocation5 + $0x640] sm:$0xff]
    %v352 = vld [vmem:[#allocation5 + $0x648] sm:$0xff]
    %v353 = vld [vmem:[#allocation5 + $0x650] sm:$0xff]
    %v354 = vld [vmem:[#allocation5 + $0x658] sm:$0xff]
    %v355 = vld [vmem:[#allocation5 + $0x660] sm:$0xff]
    %v356 = vld [vmem:[#allocation5 + $0x668] sm:$0xff]
    %v357 = vld [vmem:[#allocation5 + $0x670] sm:$0xff]
    %v358 = vld [vmem:[#allocation5 + $0x678] sm:$0xff]
    %v359 = vld [vmem:[#allocation5 + $0x680] sm:$0xff]
    %v360 = vld [vmem:[#allocation5 + $0x688] sm:$0xff]
    %v361 = vld [vmem:[#allocation5 + $0x690] sm:$0xff]
    %v362 = vld [vmem:[#allocation5 + $0x698] sm:$0xff]
    %v363 = vld [vmem:[#allocation5 + $0x6a0] sm:$0xff]
    %v364 = vld [vmem:[#allocation5 + $0x6a8] sm:$0xff]
    %v365 = vld [vmem:[#allocation5 + $0x6b0] sm:$0xff]
    %v366 = vld [vmem:[#allocation5 + $0x6b8] sm:$0xff]
    %v367 = vld [vmem:[#allocation5 + $0x6c0] sm:$0xff]
    %v368 = vld [vmem:[#allocation5 + $0x6c8] sm:$0xff]
    %v369 = vld [vmem:[#allocation5 + $0x6d0] sm:$0xff]
    %v370 = vld [vmem:[#allocation5 + $0x6d8] sm:$0xff]
    %v371 = vld [vmem:[#allocation5 + $0x6e0] sm:$0xff]
    %v372 = vld [vmem:[#allocation5 + $0x6e8] sm:$0xff]
    %v373 = vld [vmem:[#allocation5 + $0x6f0] sm:$0xff]
    %v374 = vld [vmem:[#allocation5 + $0x6f8] sm:$0xff]
    %v375 = vld [vmem:[#allocation5 + $0x700] sm:$0xff]
    %v376 = vld [vmem:[#allocation5 + $0x708] sm:$0xff]
    %v377 = vld [vmem:[#allocation5 + $0x710] sm:$0xff]
    %v378 = vld [vmem:[#allocation5 + $0x718] sm:$0xff]
    %v379 = vld [vmem:[#allocation5 + $0x720] sm:$0xff]
    %v380 = vld [vmem:[#allocation5 + $0x728] sm:$0xff]
    %v381 = vld [vmem:[#allocation5 + $0x730] sm:$0xff]
    %v382 = vld [vmem:[#allocation5 + $0x738] sm:$0xff]
    %v383 = vld [vmem:[#allocation5 + $0x740] sm:$0xff]
    %v384 = vld [vmem:[#allocation5 + $0x748] sm:$0xff]
    %v385 = vld [vmem:[#allocation5 + $0x750] sm:$0xff]
    %v386 = vld [vmem:[#allocation5 + $0x758] sm:$0xff]
    %v387 = vld [vmem:[#allocation5 + $0x760] sm:$0xff]
    %v388 = vld [vmem:[#allocation5 + $0x768] sm:$0xff]
    %v389 = vld [vmem:[#allocation5 + $0x770] sm:$0xff]
    %v390 = vld [vmem:[#allocation5 + $0x778] sm:$0xff]
    %v391 = vld [vmem:[#allocation5 + $0x780] sm:$0xff]
    %v392 = vld [vmem:[#allocation5 + $0x788] sm:$0xff]
    %v393 = vld [vmem:[#allocation5 + $0x790] sm:$0xff]
    %v394 = vld [vmem:[#allocation5 + $0x798] sm:$0xff]
    %v395 = vld [vmem:[#allocation5 + $0x7a0] sm:$0xff]
    %v396 = vld [vmem:[#allocation5 + $0x7a8] sm:$0xff]
    %v397 = vld [vmem:[#allocation5 + $0x7b0] sm:$0xff]
    %v398 = vld [vmem:[#allocation5 + $0x7b8] sm:$0xff]
    %v399 = vld [vmem:[#allocation5 + $0x7c0] sm:$0xff]
    %v400 = vld [vmem:[#allocation5 + $0x7c8] sm:$0xff]
    %v401 = vld [vmem:[#allocation5 + $0x7d0] sm:$0xff]
    %v402 = vld [vmem:[#allocation5 + $0x7d8] sm:$0xff]
    %v403 = vld [vmem:[#allocation5 + $0x7e0] sm:$0xff]
    %v404 = vld [vmem:[#allocation5 + $0x7e8] sm:$0xff]
    %v405 = vld [vmem:[#allocation5 + $0x7f0] sm:$0xff]
    %v406 = vld [vmem:[#allocation5 + $0x7f8] sm:$0xff]
    %v407 = vld [vmem:[#allocation5 + $0x800] sm:$0xff]
    %v408 = vld [vmem:[#allocation5 + $0x808] sm:$0xff]
    %v409 = vld [vmem:[#allocation5 + $0x810] sm:$0xff]
    %v410 = vld [vmem:[#allocation5 + $0x818] sm:$0xff]
    %v411 = vld [vmem:[#allocation5 + $0x820] sm:$0xff]
    %v412 = vld [vmem:[#allocation5 + $0x828] sm:$0xff]
    %v413 = vld [vmem:[#allocation5 + $0x830] sm:$0xff]
    %v414 = vld [vmem:[#allocation5 + $0x838] sm:$0xff]
    %v415 = vld [vmem:[#allocation5 + $0x840] sm:$0xff]
    %v416 = vld [vmem:[#allocation5 + $0x848] sm:$0xff]
    %v417 = vld [vmem:[#allocation5 + $0x850] sm:$0xff]
    %v418 = vld [vmem:[#allocation5 + $0x858] sm:$0xff]
    %v419 = vld [vmem:[#allocation5 + $0x860] sm:$0xff]
    %v420 = vld [vmem:[#allocation5 + $0x868] sm:$0xff]
    %v421 = vld [vmem:[#allocation5 + $0x870] sm:$0xff]
    %v422 = vld [vmem:[#allocation5 + $0x878] sm:$0xff]
    %v423 = vld [vmem:[#allocation5 + $0x880] sm:$0xff]
    %v424 = vld [vmem:[#allocation5 + $0x888] sm:$0xff]
    %v425 = vld [vmem:[#allocation5 + $0x890] sm:$0xff]
    %v426 = vld [vmem:[#allocation5 + $0x898] sm:$0xff]
    %v427 = vld [vmem:[#allocation5 + $0x8a0] sm:$0xff]
    %v428 = vld [vmem:[#allocation5 + $0x8a8] sm:$0xff]
    %v429 = vld [vmem:[#allocation5 + $0x8b0] sm:$0xff]
    %v430 = vld [vmem:[#allocation5 + $0x8b8] sm:$0xff]
    %v431 = vld [vmem:[#allocation5 + $0x8c0] sm:$0xff]
    %v432 = vld [vmem:[#allocation5 + $0x8c8] sm:$0xff]
    %v433 = vld [vmem:[#allocation5 + $0x8d0] sm:$0xff]
    %v434 = vld [vmem:[#allocation5 + $0x8d8] sm:$0xff]
    %v435 = vld [vmem:[#allocation5 + $0x8e0] sm:$0xff]
    %v436 = vld [vmem:[#allocation5 + $0x8e8] sm:$0xff]
    %v437 = vld [vmem:[#allocation5 + $0x8f0] sm:$0xff]
    %v438 = vld [vmem:[#allocation5 + $0x8f8] sm:$0xff]
    %v439 = vld [vmem:[#allocation5 + $0x900] sm:$0xff]
    %v440 = vld [vmem:[#allocation5 + $0x908] sm:$0xff]
    %v441 = vld [vmem:[#allocation5 + $0x910] sm:$0xff]
    %v442 = vld [vmem:[#allocation5 + $0x918] sm:$0xff]
    %v443 = vld [vmem:[#allocation5 + $0x920] sm:$0xff]
    %v444 = vld [vmem:[#allocation5 + $0x928] sm:$0xff]
    %v445 = vld [vmem:[#allocation5 + $0x930] sm:$0xff]
    %v446 = vld [vmem:[#allocation5 + $0x938] sm:$0xff]
    %v447 = vld [vmem:[#allocation5 + $0x940] sm:$0xff]
    %v448 = vld [vmem:[#allocation5 + $0x948] sm:$0xff]
    %v449 = vld [vmem:[#allocation5 + $0x950] sm:$0xff]
    %v450 = vld [vmem:[#allocation5 + $0x958] sm:$0xff]
    %v451 = vld [vmem:[#allocation5 + $0x960] sm:$0xff]
    %v452 = vld [vmem:[#allocation5 + $0x968] sm:$0xff]
    %v453 = vld [vmem:[#allocation5 + $0x970] sm:$0xff]
    %v454 = vld [vmem:[#allocation5 + $0x978] sm:$0xff]
    %v455 = vld [vmem:[#allocation5 + $0x980] sm:$0xff]
    %v456 = vld [vmem:[#allocation5 + $0x988] sm:$0xff]
    %v457 = vld [vmem:[#allocation5 + $0x990] sm:$0xff]
    %v458 = vld [vmem:[#allocation5 + $0x998] sm:$0xff]
    %v459 = vld [vmem:[#allocation5 + $0x9a0] sm:$0xff]
    %v460 = vld [vmem:[#allocation5 + $0x9a8] sm:$0xff]
    %v461 = vld [vmem:[#allocation5 + $0x9b0] sm:$0xff]
    %v462 = vld [vmem:[#allocation5 + $0x9b8] sm:$0xff]
    %v463 = vld [vmem:[#allocation5 + $0x9c0] sm:$0xff]
    %v464 = vld [vmem:[#allocation5 + $0x9c8] sm:$0xff]
    %v465 = vld [vmem:[#allocation5 + $0x9d0] sm:$0xff]
    %v466 = vld [vmem:[#allocation5 + $0x9d8] sm:$0xff]
    %v467 = vld [vmem:[#allocation5 + $0x9e0] sm:$0xff]
    %v468 = vld [vmem:[#allocation5 + $0x9e8] sm:$0xff]
    %v469 = vld [vmem:[#allocation5 + $0x9f0] sm:$0xff]
    %v470 = vld [vmem:[#allocation5 + $0x9f8] sm:$0xff]
    %v471 = vld [vmem:[#allocation5 + $0xa00] sm:$0xff]
    %v472 = vld [vmem:[#allocation5 + $0xa08] sm:$0xff]
    %v473 = vld [vmem:[#allocation5 + $0xa10] sm:$0xff]
    %v474 = vld [vmem:[#allocation5 + $0xa18] sm:$0xff]
    %v475 = vld [vmem:[#allocation5 + $0xa20] sm:$0xff]
    %v476 = vld [vmem:[#allocation5 + $0xa28] sm:$0xff]
    %v477 = vld [vmem:[#allocation5 + $0xa30] sm:$0xff]
    %v478 = vld [vmem:[#allocation5 + $0xa38] sm:$0xff]
    %v479 = vld [vmem:[#allocation5 + $0xa40] sm:$0xff]
    %v480 = vld [vmem:[#allocation5 + $0xa48] sm:$0xff]
    %v481 = vld [vmem:[#allocation5 + $0xa50] sm:$0xff]
    %v482 = vld [vmem:[#allocation5 + $0xa58] sm:$0xff]
    %v483 = vld [vmem:[#allocation5 + $0xa60] sm:$0xff]
    %v484 = vld [vmem:[#allocation5 + $0xa68] sm:$0xff]
    %v485 = vld [vmem:[#allocation5 + $0xa70] sm:$0xff]
    %v486 = vld [vmem:[#allocation5 + $0xa78] sm:$0xff]
    %v487 = vld [vmem:[#allocation5 + $0xa80] sm:$0xff]
    %v488 = vld [vmem:[#allocation5 + $0xa88] sm:$0xff]
    %v489 = vld [vmem:[#allocation5 + $0xa90] sm:$0xff]
    %v490 = vld [vmem:[#allocation5 + $0xa98] sm:$0xff]
    %v491 = vld [vmem:[#allocation5 + $0xaa0] sm:$0xff]
    %v492 = vld [vmem:[#allocation5 + $0xaa8] sm:$0xff]
    %v493 = vld [vmem:[#allocation5 + $0xab0] sm:$0xff]
    %v494 = vld [vmem:[#allocation5 + $0xab8] sm:$0xff]
    %v495 = vld [vmem:[#allocation5 + $0xac0] sm:$0xff]
    %v496 = vld [vmem:[#allocation5 + $0xac8] sm:$0xff]
    %v497 = vld [vmem:[#allocation5 + $0xad0] sm:$0xff]
    %v498 = vld [vmem:[#allocation5 + $0xad8] sm:$0xff]
    %v499 = vld [vmem:[#allocation5 + $0xae0] sm:$0xff]
    %v500 = vld [vmem:[#allocation5 + $0xae8] sm:$0xff]
    %v501 = vld [vmem:[#allocation5 + $0xaf0] sm:$0xff]
    %v502 = vld [vmem:[#allocation5 + $0xaf8] sm:$0xff]
    %v503 = vld [vmem:[#allocation5 + $0xb00] sm:$0xff]
    %v504 = vld [vmem:[#allocation5 + $0xb08] sm:$0xff]
    %v505 = vld [vmem:[#allocation5 + $0xb10] sm:$0xff]
    %v506 = vld [vmem:[#allocation5 + $0xb18] sm:$0xff]
    %v507 = vld [vmem:[#allocation5 + $0xb20] sm:$0xff]
    %v508 = vld [vmem:[#allocation5 + $0xb28] sm:$0xff]
    %v509 = vld [vmem:[#allocation5 + $0xb30] sm:$0xff]
    %v510 = vld [vmem:[#allocation5 + $0xb38] sm:$0xff]
    %v511 = vld [vmem:[#allocation5 + $0xb40] sm:$0xff]
    %v512 = vld [vmem:[#allocation5 + $0xb48] sm:$0xff]
    %v513 = vld [vmem:[#allocation5 + $0xb50] sm:$0xff]
    %v514 = vld [vmem:[#allocation5 + $0xb58] sm:$0xff]
    %v515 = vld [vmem:[#allocation5 + $0xb60] sm:$0xff]
    %v516 = vld [vmem:[#allocation5 + $0xb68] sm:$0xff]
    %v517 = vld [vmem:[#allocation5 + $0xb70] sm:$0xff]
    %v518 = vld [vmem:[#allocation5 + $0xb78] sm:$0xff]
    %v519 = vld [vmem:[#allocation5 + $0xb80] sm:$0xff]
    %v520 = vld [vmem:[#allocation5 + $0xb88] sm:$0xff]
    %v521 = vld [vmem:[#allocation5 + $0xb90] sm:$0xff]
    %v522 = vld [vmem:[#allocation5 + $0xb98] sm:$0xff]
    %v523 = vld [vmem:[#allocation5 + $0xba0] sm:$0xff]
    %v524 = vld [vmem:[#allocation5 + $0xba8] sm:$0xff]
    %v525 = vld [vmem:[#allocation5 + $0xbb0] sm:$0xff]
    %v526 = vld [vmem:[#allocation5 + $0xbb8] sm:$0xff]
    %v527 = vld [vmem:[#allocation5 + $0xbc0] sm:$0xff]
    %v528 = vld [vmem:[#allocation5 + $0xbc8] sm:$0xff]
    %v529 = vld [vmem:[#allocation5 + $0xbd0] sm:$0xff]
    %v530 = vld [vmem:[#allocation5 + $0xbd8] sm:$0xff]
    %v531 = vld [vmem:[#allocation5 + $0xbe0] sm:$0xff]
    %v532 = vld [vmem:[#allocation5 + $0xbe8] sm:$0xff]
    %v533 = vld [vmem:[#allocation5 + $0xbf0] sm:$0xff]
    %v534 = vld [vmem:[#allocation5 + $0xbf8] sm:$0xff]
    %v535 = vld [vmem:[#allocation11] sm:$0x1]
    %v537 = vlaneseq
    %v538 = vshrl.u32 %v537, 7
    %v539 = vsub.s32 0, %v538
    %v540 = vrot.slane %v535, %v539
    %v548 = vcombine.high %v145, %v145
    %v550 = vunpack.c.l.s4 1983009808
    %v551 = vunpack.c.0.s8 %v550
    %v552 = vlaneseq
    %v553 = vshrl.u32 %v552, 7
    %v554 = vsub.s32 %v551, %v553
    %v555 = vrot.slane %v145, %v554
    %v557 = vunpack.c.l.s4 1983009808
    %v558 = vunpack.c.0.s8 %v557
    %v559 = vlaneseq
    %v560 = vshrl.u32 %v559, 7
    %v561 = vsub.s32 %v558, %v560
    %v562 = vrot.slane %v548, %v561
    %v563 = vcombine.high %v555, %v555
    %v564 = vcombine.high %v562, %v562
    %v565 = vcombine.high %v146, %v146
    %v567 = vunpack.c.l.s4 1983009808
    %v568 = vunpack.c.0.s8 %v567
    %v569 = vlaneseq
    %v570 = vshrl.u32 %v569, 7
    %v571 = vsub.s32 %v568, %v570
    %v572 = vrot.slane %v146, %v571
    %v574 = vunpack.c.l.s4 1983009808
    %v575 = vunpack.c.0.s8 %v574
    %v576 = vlaneseq
    %v577 = vshrl.u32 %v576, 7
    %v578 = vsub.s32 %v575, %v577
    %v579 = vrot.slane %v565, %v578
    %v580 = vcombine.high %v572, %v572
    %v581 = vcombine.high %v579, %v579
    %v582 = vcombine.high %v147, %v147
    %v584 = vunpack.c.l.s4 1983009808
    %v585 = vunpack.c.0.s8 %v584
    %v586 = vlaneseq
    %v587 = vshrl.u32 %v586, 7
    %v588 = vsub.s32 %v585, %v587
    %v589 = vrot.slane %v147, %v588
    %v591 = vunpack.c.l.s4 1983009808
    %v592 = vunpack.c.0.s8 %v591
    %v593 = vlaneseq
    %v594 = vshrl.u32 %v593, 7
    %v595 = vsub.s32 %v592, %v594
    %v596 = vrot.slane %v582, %v595
    %v597 = vcombine.high %v589, %v589
    %v598 = vcombine.high %v596, %v596
    %v599 = vcombine.high %v148, %v148
    %v601 = vunpack.c.l.s4 1983009808
    %v602 = vunpack.c.0.s8 %v601
    %v603 = vlaneseq
    %v604 = vshrl.u32 %v603, 7
    %v605 = vsub.s32 %v602, %v604
    %v606 = vrot.slane %v148, %v605
    %v608 = vunpack.c.l.s4 1983009808
    %v609 = vunpack.c.0.s8 %v608
    %v610 = vlaneseq
    %v611 = vshrl.u32 %v610, 7
    %v612 = vsub.s32 %v609, %v611
    %v613 = vrot.slane %v599, %v612
    %v614 = vcombine.high %v606, %v606
    %v615 = vcombine.high %v613, %v613
    %v616 = vcombine.high %v149, %v149
    %v618 = vunpack.c.l.s4 1983009808
    %v619 = vunpack.c.0.s8 %v618
    %v620 = vlaneseq
    %v621 = vshrl.u32 %v620, 7
    %v622 = vsub.s32 %v619, %v621
    %v623 = vrot.slane %v149, %v622
    %v625 = vunpack.c.l.s4 1983009808
    %v626 = vunpack.c.0.s8 %v625
    %v627 = vlaneseq
    %v628 = vshrl.u32 %v627, 7
    %v629 = vsub.s32 %v626, %v628
    %v630 = vrot.slane %v616, %v629
    %v631 = vcombine.high %v623, %v623
    %v632 = vcombine.high %v630, %v630
    %v633 = vcombine.high %v150, %v150
    %v635 = vunpack.c.l.s4 1983009808
    %v636 = vunpack.c.0.s8 %v635
    %v637 = vlaneseq
    %v638 = vshrl.u32 %v637, 7
    %v639 = vsub.s32 %v636, %v638
    %v640 = vrot.slane %v150, %v639
    %v642 = vunpack.c.l.s4 1983009808
    %v643 = vunpack.c.0.s8 %v642
    %v644 = vlaneseq
    %v645 = vshrl.u32 %v644, 7
    %v646 = vsub.s32 %v643, %v645
    %v647 = vrot.slane %v633, %v646
    %v648 = vcombine.high %v640, %v640
    %v649 = vcombine.high %v647, %v647
    %674 = vmatprep.subr.mxu0 0.0
    %675 = vmatpush1.msra.mxu0 %v151
    %676 = vmatprep.subr.mxu0 0.0
    %677 = vmatpush1.msra.mxu0 %v152
    %678 = vmatprep.subr.mxu0 0.0
    %679 = vmatpush1.msra.mxu0 %v153
    %680 = vmatprep.subr.mxu0 0.0
    %681 = vmatpush1.msra.mxu0 %v154
    %682 = vmatprep.subr.mxu0 0.0
    %683 = vmatpush1.msra.mxu0 %v155
    %684 = vmatprep.subr.mxu0 0.0
    %685 = vmatpush1.msra.mxu0 %v156
    %686 = vmatprep.subr.mxu0 0.0
    %687 = vmatpush1.msra.mxu0 %v157
    %688 = vmatprep.subr.mxu0 0.0
    %689 = vmatpush1.msra.mxu0 %v158
    %690 = vmatprep.subr.mxu0 0.0
    %691 = vmatpush1.msra.mxu0 %v159
    %692 = vmatprep.subr.mxu0 0.0
    %693 = vmatpush1.msra.mxu0 %v160
    %694 = vmatprep.subr.mxu0 0.0
    %695 = vmatpush1.msra.mxu0 %v161
    %696 = vmatprep.subr.mxu0 0.0
    %697 = vmatpush1.msra.mxu0 %v162
    %698 = vmatprep.subr.mxu0 0.0
    %699 = vmatpush1.msra.mxu0 %v163
    %700 = vmatprep.subr.mxu0 0.0
    %701 = vmatpush1.msra.mxu0 %v164
    %702 = vmatprep.subr.mxu0 0.0
    %703 = vmatpush1.msra.mxu0 %v165
    %704 = vmatprep.subr.mxu0 0.0
    %705 = vmatpush1.msra.mxu0 %v166
    %706 = vmatprep.subr.mxu0 0.0
    %707 = vmatpush1.msra.mxu0 %v167
    %708 = vmatprep.subr.mxu0 0.0
    %709 = vmatpush1.msra.mxu0 %v168
    %710 = vmatprep.subr.mxu0 0.0
    %711 = vmatpush1.msra.mxu0 %v169
    %712 = vmatprep.subr.mxu0 0.0
    %713 = vmatpush1.msra.mxu0 %v170
    %714 = vmatprep.subr.mxu0 0.0
    %715 = vmatpush1.msra.mxu0 %v171
    %716 = vmatprep.subr.mxu0 0.0
    %717 = vmatpush1.msra.mxu0 %v172
    %718 = vmatprep.subr.mxu0 0.0
    %719 = vmatpush1.msra.mxu0 %v173
    %720 = vmatprep.subr.mxu0 0.0
    %721 = vmatpush1.msra.mxu0 %v174
    %722 = vmatprep.subr.mxu0 0.0
    %723 = vmatpush1.msra.mxu0 %v175
    %724 = vmatprep.subr.mxu0 0.0
    %725 = vmatpush1.msra.mxu0 %v176
    %726 = vmatprep.subr.mxu0 0.0
    %727 = vmatpush1.msra.mxu0 %v177
    %728 = vmatprep.subr.mxu0 0.0
    %729 = vmatpush1.msra.mxu0 %v178
    %730 = vmatprep.subr.mxu0 0.0
    %731 = vmatpush1.msra.mxu0 %v179
    %732 = vmatprep.subr.mxu0 0.0
    %733 = vmatpush1.msra.mxu0 %v180
    %734 = vmatprep.subr.mxu0 0.0
    %735 = vmatpush1.msra.mxu0 %v181
    %736 = vmatprep.subr.mxu0 0.0
    %737 = vmatpush1.msra.mxu0 %v182
    %738 = vmatprep.mubr.f32.mxu0 %v563
    %739 = vmatmul.mubr.f32.gmra.mrb[0].mxu0 %v555
    %v740 = vpop.f32.mrb[0].mxu0
    %v741 = vadd.f32 %v540, %v740
    %v742 = vpop.f32.mrb[0].mxu0
    %743 = vdwg.mxu0
    %744 = vmatprep.subr.mxu0 0.0
    %745 = vmatpush1.msra.mxu0 %v183
    %746 = vmatprep.subr.mxu0 0.0
    %747 = vmatpush1.msra.mxu0 %v184
    %748 = vmatprep.subr.mxu0 0.0
    %749 = vmatpush1.msra.mxu0 %v185
    %750 = vmatprep.subr.mxu0 0.0
    %751 = vmatpush1.msra.mxu0 %v186
    %752 = vmatprep.subr.mxu0 0.0
    %753 = vmatpush1.msra.mxu0 %v187
    %754 = vmatprep.subr.mxu0 0.0
    %755 = vmatpush1.msra.mxu0 %v188
    %756 = vmatprep.subr.mxu0 0.0
    %757 = vmatpush1.msra.mxu0 %v189
    %758 = vmatprep.subr.mxu0 0.0
    %759 = vmatpush1.msra.mxu0 %v190
    %760 = vmatprep.subr.mxu0 0.0
    %761 = vmatpush1.msra.mxu0 %v191
    %762 = vmatprep.subr.mxu0 0.0
    %763 = vmatpush1.msra.mxu0 %v192
    %764 = vmatprep.subr.mxu0 0.0
    %765 = vmatpush1.msra.mxu0 %v193
    %766 = vmatprep.subr.mxu0 0.0
    %767 = vmatpush1.msra.mxu0 %v194
    %768 = vmatprep.subr.mxu0 0.0
    %769 = vmatpush1.msra.mxu0 %v195
    %770 = vmatprep.subr.mxu0 0.0
    %771 = vmatpush1.msra.mxu0 %v196
    %772 = vmatprep.subr.mxu0 0.0
    %773 = vmatpush1.msra.mxu0 %v197
    %774 = vmatprep.subr.mxu0 0.0
    %775 = vmatpush1.msra.mxu0 %v198
    %776 = vmatprep.subr.mxu0 0.0
    %777 = vmatpush1.msra.mxu0 %v199
    %778 = vmatprep.subr.mxu0 0.0
    %779 = vmatpush1.msra.mxu0 %v200
    %780 = vmatprep.subr.mxu0 0.0
    %781 = vmatpush1.msra.mxu0 %v201
    %782 = vmatprep.subr.mxu0 0.0
    %783 = vmatpush1.msra.mxu0 %v202
    %784 = vmatprep.subr.mxu0 0.0
    %785 = vmatpush1.msra.mxu0 %v203
    %786 = vmatprep.subr.mxu0 0.0
    %787 = vmatpush1.msra.mxu0 %v204
    %788 = vmatprep.subr.mxu0 0.0
    %789 = vmatpush1.msra.mxu0 %v205
    %790 = vmatprep.subr.mxu0 0.0
    %791 = vmatpush1.msra.mxu0 %v206
    %792 = vmatprep.subr.mxu0 0.0
    %793 = vmatpush1.msra.mxu0 %v207
    %794 = vmatprep.subr.mxu0 0.0
    %795 = vmatpush1.msra.mxu0 %v208
    %796 = vmatprep.subr.mxu0 0.0
    %797 = vmatpush1.msra.mxu0 %v209
    %798 = vmatprep.subr.mxu0 0.0
    %799 = vmatpush1.msra.mxu0 %v210
    %800 = vmatprep.subr.mxu0 0.0
    %801 = vmatpush1.msra.mxu0 %v211
    %802 = vmatprep.subr.mxu0 0.0
    %803 = vmatpush1.msra.mxu0 %v212
    %804 = vmatprep.subr.mxu0 0.0
    %805 = vmatpush1.msra.mxu0 %v213
    %806 = vmatprep.subr.mxu0 0.0
    %807 = vmatpush1.msra.mxu0 %v214
    %808 = vmatprep.mubr.f32.mxu0 %v564
    %809 = vmatmul.mubr.f32.gmra.mrb[0].mxu0 %v562
    %v810 = vpop.f32.mrb[0].mxu0
    %v811 = vadd.f32 %v741, %v810
    %v812 = vpop.f32.mrb[0].mxu0
    %813 = vdwg.mxu0
    %814 = vmatprep.subr.mxu0 0.0
    %815 = vmatpush1.msra.mxu0 %v215
    %816 = vmatprep.subr.mxu0 0.0
    %817 = vmatpush1.msra.mxu0 %v216
    %818 = vmatprep.subr.mxu0 0.0
    %819 = vmatpush1.msra.mxu0 %v217
    %820 = vmatprep.subr.mxu0 0.0
    %821 = vmatpush1.msra.mxu0 %v218
    %822 = vmatprep.subr.mxu0 0.0
    %823 = vmatpush1.msra.mxu0 %v219
    %824 = vmatprep.subr.mxu0 0.0
    %825 = vmatpush1.msra.mxu0 %v220
    %826 = vmatprep.subr.mxu0 0.0
    %827 = vmatpush1.msra.mxu0 %v221
    %828 = vmatprep.subr.mxu0 0.0
    %829 = vmatpush1.msra.mxu0 %v222
    %830 = vmatprep.subr.mxu0 0.0
    %831 = vmatpush1.msra.mxu0 %v223
    %832 = vmatprep.subr.mxu0 0.0
    %833 = vmatpush1.msra.mxu0 %v224
    %834 = vmatprep.subr.mxu0 0.0
    %835 = vmatpush1.msra.mxu0 %v225
    %836 = vmatprep.subr.mxu0 0.0
    %837 = vmatpush1.msra.mxu0 %v226
    %838 = vmatprep.subr.mxu0 0.0
    %839 = vmatpush1.msra.mxu0 %v227
    %840 = vmatprep.subr.mxu0 0.0
    %841 = vmatpush1.msra.mxu0 %v228
    %842 = vmatprep.subr.mxu0 0.0
    %843 = vmatpush1.msra.mxu0 %v229
    %844 = vmatprep.subr.mxu0 0.0
    %845 = vmatpush1.msra.mxu0 %v230
    %846 = vmatprep.subr.mxu0 0.0
    %847 = vmatpush1.msra.mxu0 %v231
    %848 = vmatprep.subr.mxu0 0.0
    %849 = vmatpush1.msra.mxu0 %v232
    %850 = vmatprep.subr.mxu0 0.0
    %851 = vmatpush1.msra.mxu0 %v233
    %852 = vmatprep.subr.mxu0 0.0
    %853 = vmatpush1.msra.mxu0 %v234
    %854 = vmatprep.subr.mxu0 0.0
    %855 = vmatpush1.msra.mxu0 %v235
    %856 = vmatprep.subr.mxu0 0.0
    %857 = vmatpush1.msra.mxu0 %v236
    %858 = vmatprep.subr.mxu0 0.0
    %859 = vmatpush1.msra.mxu0 %v237
    %860 = vmatprep.subr.mxu0 0.0
    %861 = vmatpush1.msra.mxu0 %v238
    %862 = vmatprep.subr.mxu0 0.0
    %863 = vmatpush1.msra.mxu0 %v239
    %864 = vmatprep.subr.mxu0 0.0
    %865 = vmatpush1.msra.mxu0 %v240
    %866 = vmatprep.subr.mxu0 0.0
    %867 = vmatpush1.msra.mxu0 %v241
    %868 = vmatprep.subr.mxu0 0.0
    %869 = vmatpush1.msra.mxu0 %v242
    %870 = vmatprep.subr.mxu0 0.0
    %871 = vmatpush1.msra.mxu0 %v243
    %872 = vmatprep.subr.mxu0 0.0
    %873 = vmatpush1.msra.mxu0 %v244
    %874 = vmatprep.subr.mxu0 0.0
    %875 = vmatpush1.msra.mxu0 %v245
    %876 = vmatprep.subr.mxu0 0.0
    %877 = vmatpush1.msra.mxu0 %v246
    %878 = vmatprep.mubr.f32.mxu0 %v580
    %879 = vmatmul.mubr.f32.gmra.mrb[0].mxu0 %v572
    %v880 = vpop.f32.mrb[0].mxu0
    %v881 = vadd.f32 %v811, %v880
    %v882 = vpop.f32.mrb[0].mxu0
    %883 = vdwg.mxu0
    %884 = vmatprep.subr.mxu0 0.0
    %885 = vmatpush1.msra.mxu0 %v247
    %886 = vmatprep.subr.mxu0 0.0
    %887 = vmatpush1.msra.mxu0 %v248
    %888 = vmatprep.subr.mxu0 0.0
    %889 = vmatpush1.msra.mxu0 %v249
    %890 = vmatprep.subr.mxu0 0.0
    %891 = vmatpush1.msra.mxu0 %v250
    %892 = vmatprep.subr.mxu0 0.0
    %893 = vmatpush1.msra.mxu0 %v251
    %894 = vmatprep.subr.mxu0 0.0
    %895 = vmatpush1.msra.mxu0 %v252
    %896 = vmatprep.subr.mxu0 0.0
    %897 = vmatpush1.msra.mxu0 %v253
    %898 = vmatprep.subr.mxu0 0.0
    %899 = vmatpush1.msra.mxu0 %v254
    %900 = vmatprep.subr.mxu0 0.0
    %901 = vmatpush1.msra.mxu0 %v255
    %902 = vmatprep.subr.mxu0 0.0
    %903 = vmatpush1.msra.mxu0 %v256
    %904 = vmatprep.subr.mxu0 0.0
    %905 = vmatpush1.msra.mxu0 %v257
    %906 = vmatprep.subr.mxu0 0.0
    %907 = vmatpush1.msra.mxu0 %v258
    %908 = vmatprep.subr.mxu0 0.0
    %909 = vmatpush1.msra.mxu0 %v259
    %910 = vmatprep.subr.mxu0 0.0
    %911 = vmatpush1.msra.mxu0 %v260
    %912 = vmatprep.subr.mxu0 0.0
    %913 = vmatpush1.msra.mxu0 %v261
    %914 = vmatprep.subr.mxu0 0.0
    %915 = vmatpush1.msra.mxu0 %v262
    %916 = vmatprep.subr.mxu0 0.0
    %917 = vmatpush1.msra.mxu0 %v263
    %918 = vmatprep.subr.mxu0 0.0
    %919 = vmatpush1.msra.mxu0 %v264
    %920 = vmatprep.subr.mxu0 0.0
    %921 = vmatpush1.msra.mxu0 %v265
    %922 = vmatprep.subr.mxu0 0.0
    %923 = vmatpush1.msra.mxu0 %v266
    %924 = vmatprep.subr.mxu0 0.0
    %925 = vmatpush1.msra.mxu0 %v267
    %926 = vmatprep.subr.mxu0 0.0
    %927 = vmatpush1.msra.mxu0 %v268
    %928 = vmatprep.subr.mxu0 0.0
    %929 = vmatpush1.msra.mxu0 %v269
    %930 = vmatprep.subr.mxu0 0.0
    %931 = vmatpush1.msra.mxu0 %v270
    %932 = vmatprep.subr.mxu0 0.0
    %933 = vmatpush1.msra.mxu0 %v271
    %934 = vmatprep.subr.mxu0 0.0
    %935 = vmatpush1.msra.mxu0 %v272
    %936 = vmatprep.subr.mxu0 0.0
    %937 = vmatpush1.msra.mxu0 %v273
    %938 = vmatprep.subr.mxu0 0.0
    %939 = vmatpush1.msra.mxu0 %v274
    %940 = vmatprep.subr.mxu0 0.0
    %941 = vmatpush1.msra.mxu0 %v275
    %942 = vmatprep.subr.mxu0 0.0
    %943 = vmatpush1.msra.mxu0 %v276
    %944 = vmatprep.subr.mxu0 0.0
    %945 = vmatpush1.msra.mxu0 %v277
    %946 = vmatprep.subr.mxu0 0.0
    %947 = vmatpush1.msra.mxu0 %v278
    %948 = vmatprep.mubr.f32.mxu0 %v581
    %949 = vmatmul.mubr.f32.gmra.mrb[0].mxu0 %v579
    %v950 = vpop.f32.mrb[0].mxu0
    %v951 = vadd.f32 %v881, %v950
    %v952 = vpop.f32.mrb[0].mxu0
    %953 = vdwg.mxu0
    %954 = vmatprep.subr.mxu0 0.0
    %955 = vmatpush1.msra.mxu0 %v279
    %956 = vmatprep.subr.mxu0 0.0
    %957 = vmatpush1.msra.mxu0 %v280
    %958 = vmatprep.subr.mxu0 0.0
    %959 = vmatpush1.msra.mxu0 %v281
    %960 = vmatprep.subr.mxu0 0.0
    %961 = vmatpush1.msra.mxu0 %v282
    %962 = vmatprep.subr.mxu0 0.0
    %963 = vmatpush1.msra.mxu0 %v283
    %964 = vmatprep.subr.mxu0 0.0
    %965 = vmatpush1.msra.mxu0 %v284
    %966 = vmatprep.subr.mxu0 0.0
    %967 = vmatpush1.msra.mxu0 %v285
    %968 = vmatprep.subr.mxu0 0.0
    %969 = vmatpush1.msra.mxu0 %v286
    %970 = vmatprep.subr.mxu0 0.0
    %971 = vmatpush1.msra.mxu0 %v287
    %972 = vmatprep.subr.mxu0 0.0
    %973 = vmatpush1.msra.mxu0 %v288
    %974 = vmatprep.subr.mxu0 0.0
    %975 = vmatpush1.msra.mxu0 %v289
    %976 = vmatprep.subr.mxu0 0.0
    %977 = vmatpush1.msra.mxu0 %v290
    %978 = vmatprep.subr.mxu0 0.0
    %979 = vmatpush1.msra.mxu0 %v291
    %980 = vmatprep.subr.mxu0 0.0
    %981 = vmatpush1.msra.mxu0 %v292
    %982 = vmatprep.subr.mxu0 0.0
    %983 = vmatpush1.msra.mxu0 %v293
    %984 = vmatprep.subr.mxu0 0.0
    %985 = vmatpush1.msra.mxu0 %v294
    %986 = vmatprep.subr.mxu0 0.0
    %987 = vmatpush1.msra.mxu0 %v295
    %988 = vmatprep.subr.mxu0 0.0
    %989 = vmatpush1.msra.mxu0 %v296
    %990 = vmatprep.subr.mxu0 0.0
    %991 = vmatpush1.msra.mxu0 %v297
    %992 = vmatprep.subr.mxu0 0.0
    %993 = vmatpush1.msra.mxu0 %v298
    %994 = vmatprep.subr.mxu0 0.0
    %995 = vmatpush1.msra.mxu0 %v299
    %996 = vmatprep.subr.mxu0 0.0
    %997 = vmatpush1.msra.mxu0 %v300
    %998 = vmatprep.subr.mxu0 0.0
    %999 = vmatpush1.msra.mxu0 %v301
    %1000 = vmatprep.subr.mxu0 0.0
    %1001 = vmatpush1.msra.mxu0 %v302
    %1002 = vmatprep.subr.mxu0 0.0
    %1003 = vmatpush1.msra.mxu0 %v303
    %1004 = vmatprep.subr.mxu0 0.0
    %1005 = vmatpush1.msra.mxu0 %v304
    %1006 = vmatprep.subr.mxu0 0.0
    %1007 = vmatpush1.msra.mxu0 %v305
    %1008 = vmatprep.subr.mxu0 0.0
    %1009 = vmatpush1.msra.mxu0 %v306
    %1010 = vmatprep.subr.mxu0 0.0
    %1011 = vmatpush1.msra.mxu0 %v307
    %1012 = vmatprep.subr.mxu0 0.0
    %1013 = vmatpush1.msra.mxu0 %v308
    %1014 = vmatprep.subr.mxu0 0.0
    %1015 = vmatpush1.msra.mxu0 %v309
    %1016 = vmatprep.subr.mxu0 0.0
    %1017 = vmatpush1.msra.mxu0 %v310
    %1018 = vmatprep.mubr.f32.mxu0 %v597
    %1019 = vmatmul.mubr.f32.gmra.mrb[0].mxu0 %v589
    %v1020 = vpop.f32.mrb[0].mxu0
    %v1021 = vadd.f32 %v951, %v1020
    %v1022 = vpop.f32.mrb[0].mxu0
    %1023 = vdwg.mxu0
    %1024 = vmatprep.subr.mxu0 0.0
    %1025 = vmatpush1.msra.mxu0 %v311
    %1026 = vmatprep.subr.mxu0 0.0
    %1027 = vmatpush1.msra.mxu0 %v312
    %1028 = vmatprep.subr.mxu0 0.0
    %1029 = vmatpush1.msra.mxu0 %v313
    %1030 = vmatprep.subr.mxu0 0.0
    %1031 = vmatpush1.msra.mxu0 %v314
    %1032 = vmatprep.subr.mxu0 0.0
    %1033 = vmatpush1.msra.mxu0 %v315
    %1034 = vmatprep.subr.mxu0 0.0
    %1035 = vmatpush1.msra.mxu0 %v316
    %1036 = vmatprep.subr.mxu0 0.0
    %1037 = vmatpush1.msra.mxu0 %v317
    %1038 = vmatprep.subr.mxu0 0.0
    %1039 = vmatpush1.msra.mxu0 %v318
    %1040 = vmatprep.subr.mxu0 0.0
    %1041 = vmatpush1.msra.mxu0 %v319
    %1042 = vmatprep.subr.mxu0 0.0
    %1043 = vmatpush1.msra.mxu0 %v320
    %1044 = vmatprep.subr.mxu0 0.0
    %1045 = vmatpush1.msra.mxu0 %v321
    %1046 = vmatprep.subr.mxu0 0.0
    %1047 = vmatpush1.msra.mxu0 %v322
    %1048 = vmatprep.subr.mxu0 0.0
    %1049 = vmatpush1.msra.mxu0 %v323
    %1050 = vmatprep.subr.mxu0 0.0
    %1051 = vmatpush1.msra.mxu0 %v324
    %1052 = vmatprep.subr.mxu0 0.0
    %1053 = vmatpush1.msra.mxu0 %v325
    %1054 = vmatprep.subr.mxu0 0.0
    %1055 = vmatpush1.msra.mxu0 %v326
    %1056 = vmatprep.subr.mxu0 0.0
    %1057 = vmatpush1.msra.mxu0 %v327
    %1058 = vmatprep.subr.mxu0 0.0
    %1059 = vmatpush1.msra.mxu0 %v328
    %1060 = vmatprep.subr.mxu0 0.0
    %1061 = vmatpush1.msra.mxu0 %v329
    %1062 = vmatprep.subr.mxu0 0.0
    %1063 = vmatpush1.msra.mxu0 %v330
    %1064 = vmatprep.subr.mxu0 0.0
    %1065 = vmatpush1.msra.mxu0 %v331
    %1066 = vmatprep.subr.mxu0 0.0
    %1067 = vmatpush1.msra.mxu0 %v332
    %1068 = vmatprep.subr.mxu0 0.0
    %1069 = vmatpush1.msra.mxu0 %v333
    %1070 = vmatprep.subr.mxu0 0.0
    %1071 = vmatpush1.msra.mxu0 %v334
    %1072 = vmatprep.subr.mxu0 0.0
    %1073 = vmatpush1.msra.mxu0 %v335
    %1074 = vmatprep.subr.mxu0 0.0
    %1075 = vmatpush1.msra.mxu0 %v336
    %1076 = vmatprep.subr.mxu0 0.0
    %1077 = vmatpush1.msra.mxu0 %v337
    %1078 = vmatprep.subr.mxu0 0.0
    %1079 = vmatpush1.msra.mxu0 %v338
    %1080 = vmatprep.subr.mxu0 0.0
    %1081 = vmatpush1.msra.mxu0 %v339
    %1082 = vmatprep.subr.mxu0 0.0
    %1083 = vmatpush1.msra.mxu0 %v340
    %1084 = vmatprep.subr.mxu0 0.0
    %1085 = vmatpush1.msra.mxu0 %v341
    %1086 = vmatprep.subr.mxu0 0.0
    %1087 = vmatpush1.msra.mxu0 %v342
    %1088 = vmatprep.mubr.f32.mxu0 %v598
    %1089 = vmatmul.mubr.f32.gmra.mrb[0].mxu0 %v596
    %v1090 = vpop.f32.mrb[0].mxu0
    %v1091 = vadd.f32 %v1021, %v1090
    %v1092 = vpop.f32.mrb[0].mxu0
    %1093 = vdwg.mxu0
    %1094 = vmatprep.subr.mxu0 0.0
    %1095 = vmatpush1.msra.mxu0 %v343
    %1096 = vmatprep.subr.mxu0 0.0
    %1097 = vmatpush1.msra.mxu0 %v344
    %1098 = vmatprep.subr.mxu0 0.0
    %1099 = vmatpush1.msra.mxu0 %v345
    %1100 = vmatprep.subr.mxu0 0.0
    %1101 = vmatpush1.msra.mxu0 %v346
    %1102 = vmatprep.subr.mxu0 0.0
    %1103 = vmatpush1.msra.mxu0 %v347
    %1104 = vmatprep.subr.mxu0 0.0
    %1105 = vmatpush1.msra.mxu0 %v348
    %1106 = vmatprep.subr.mxu0 0.0
    %1107 = vmatpush1.msra.mxu0 %v349
    %1108 = vmatprep.subr.mxu0 0.0
    %1109 = vmatpush1.msra.mxu0 %v350
    %1110 = vmatprep.subr.mxu0 0.0
    %1111 = vmatpush1.msra.mxu0 %v351
    %1112 = vmatprep.subr.mxu0 0.0
    %1113 = vmatpush1.msra.mxu0 %v352
    %1114 = vmatprep.subr.mxu0 0.0
    %1115 = vmatpush1.msra.mxu0 %v353
    %1116 = vmatprep.subr.mxu0 0.0
    %1117 = vmatpush1.msra.mxu0 %v354
    %1118 = vmatprep.subr.mxu0 0.0
    %1119 = vmatpush1.msra.mxu0 %v355
    %1120 = vmatprep.subr.mxu0 0.0
    %1121 = vmatpush1.msra.mxu0 %v356
    %1122 = vmatprep.subr.mxu0 0.0
    %1123 = vmatpush1.msra.mxu0 %v357
    %1124 = vmatprep.subr.mxu0 0.0
    %1125 = vmatpush1.msra.mxu0 %v358
    %1126 = vmatprep.subr.mxu0 0.0
    %1127 = vmatpush1.msra.mxu0 %v359
    %1128 = vmatprep.subr.mxu0 0.0
    %1129 = vmatpush1.msra.mxu0 %v360
    %1130 = vmatprep.subr.mxu0 0.0
    %1131 = vmatpush1.msra.mxu0 %v361
    %1132 = vmatprep.subr.mxu0 0.0
    %1133 = vmatpush1.msra.mxu0 %v362
    %1134 = vmatprep.subr.mxu0 0.0
    %1135 = vmatpush1.msra.mxu0 %v363
    %1136 = vmatprep.subr.mxu0 0.0
    %1137 = vmatpush1.msra.mxu0 %v364
    %1138 = vmatprep.subr.mxu0 0.0
    %1139 = vmatpush1.msra.mxu0 %v365
    %1140 = vmatprep.subr.mxu0 0.0
    %1141 = vmatpush1.msra.mxu0 %v366
    %1142 = vmatprep.subr.mxu0 0.0
    %1143 = vmatpush1.msra.mxu0 %v367
    %1144 = vmatprep.subr.mxu0 0.0
    %1145 = vmatpush1.msra.mxu0 %v368
    %1146 = vmatprep.subr.mxu0 0.0
    %1147 = vmatpush1.msra.mxu0 %v369
    %1148 = vmatprep.subr.mxu0 0.0
    %1149 = vmatpush1.msra.mxu0 %v370
    %1150 = vmatprep.subr.mxu0 0.0
    %1151 = vmatpush1.msra.mxu0 %v371
    %1152 = vmatprep.subr.mxu0 0.0
    %1153 = vmatpush1.msra.mxu0 %v372
    %1154 = vmatprep.subr.mxu0 0.0
    %1155 = vmatpush1.msra.mxu0 %v373
    %1156 = vmatprep.subr.mxu0 0.0
    %1157 = vmatpush1.msra.mxu0 %v374
    %1158 = vmatprep.mubr.f32.mxu0 %v614
    %1159 = vmatmul.mubr.f32.gmra.mrb[0].mxu0 %v606
    %v1160 = vpop.f32.mrb[0].mxu0
    %v1161 = vadd.f32 %v1091, %v1160
    %v1162 = vpop.f32.mrb[0].mxu0
    %1163 = vdwg.mxu0
    %1164 = vmatprep.subr.mxu0 0.0
    %1165 = vmatpush1.msra.mxu0 %v375
    %1166 = vmatprep.subr.mxu0 0.0
    %1167 = vmatpush1.msra.mxu0 %v376
    %1168 = vmatprep.subr.mxu0 0.0
    %1169 = vmatpush1.msra.mxu0 %v377
    %1170 = vmatprep.subr.mxu0 0.0
    %1171 = vmatpush1.msra.mxu0 %v378
    %1172 = vmatprep.subr.mxu0 0.0
    %1173 = vmatpush1.msra.mxu0 %v379
    %1174 = vmatprep.subr.mxu0 0.0
    %1175 = vmatpush1.msra.mxu0 %v380
    %1176 = vmatprep.subr.mxu0 0.0
    %1177 = vmatpush1.msra.mxu0 %v381
    %1178 = vmatprep.subr.mxu0 0.0
    %1179 = vmatpush1.msra.mxu0 %v382
    %1180 = vmatprep.subr.mxu0 0.0
    %1181 = vmatpush1.msra.mxu0 %v383
    %1182 = vmatprep.subr.mxu0 0.0
    %1183 = vmatpush1.msra.mxu0 %v384
    %1184 = vmatprep.subr.mxu0 0.0
    %1185 = vmatpush1.msra.mxu0 %v385
    %1186 = vmatprep.subr.mxu0 0.0
    %1187 = vmatpush1.msra.mxu0 %v386
    %1188 = vmatprep.subr.mxu0 0.0
    %1189 = vmatpush1.msra.mxu0 %v387
    %1190 = vmatprep.subr.mxu0 0.0
    %1191 = vmatpush1.msra.mxu0 %v388
    %1192 = vmatprep.subr.mxu0 0.0
    %1193 = vmatpush1.msra.mxu0 %v389
    %1194 = vmatprep.subr.mxu0 0.0
    %1195 = vmatpush1.msra.mxu0 %v390
    %1196 = vmatprep.subr.mxu0 0.0
    %1197 = vmatpush1.msra.mxu0 %v391
    %1198 = vmatprep.subr.mxu0 0.0
    %1199 = vmatpush1.msra.mxu0 %v392
    %1200 = vmatprep.subr.mxu0 0.0
    %1201 = vmatpush1.msra.mxu0 %v393
    %1202 = vmatprep.subr.mxu0 0.0
    %1203 = vmatpush1.msra.mxu0 %v394
    %1204 = vmatprep.subr.mxu0 0.0
    %1205 = vmatpush1.msra.mxu0 %v395
    %1206 = vmatprep.subr.mxu0 0.0
    %1207 = vmatpush1.msra.mxu0 %v396
    %1208 = vmatprep.subr.mxu0 0.0
    %1209 = vmatpush1.msra.mxu0 %v397
    %1210 = vmatprep.subr.mxu0 0.0
    %1211 = vmatpush1.msra.mxu0 %v398
    %1212 = vmatprep.subr.mxu0 0.0
    %1213 = vmatpush1.msra.mxu0 %v399
    %1214 = vmatprep.subr.mxu0 0.0
    %1215 = vmatpush1.msra.mxu0 %v400
    %1216 = vmatprep.subr.mxu0 0.0
    %1217 = vmatpush1.msra.mxu0 %v401
    %1218 = vmatprep.subr.mxu0 0.0
    %1219 = vmatpush1.msra.mxu0 %v402
    %1220 = vmatprep.subr.mxu0 0.0
    %1221 = vmatpush1.msra.mxu0 %v403
    %1222 = vmatprep.subr.mxu0 0.0
    %1223 = vmatpush1.msra.mxu0 %v404
    %1224 = vmatprep.subr.mxu0 0.0
    %1225 = vmatpush1.msra.mxu0 %v405
    %1226 = vmatprep.subr.mxu0 0.0
    %1227 = vmatpush1.msra.mxu0 %v406
    %1228 = vmatprep.mubr.f32.mxu0 %v615
    %1229 = vmatmul.mubr.f32.gmra.mrb[0].mxu0 %v613
    %v1230 = vpop.f32.mrb[0].mxu0
    %v1231 = vadd.f32 %v1161, %v1230
    %v1232 = vpop.f32.mrb[0].mxu0
    %1233 = vdwg.mxu0
    %1234 = vmatprep.subr.mxu0 0.0
    %1235 = vmatpush1.msra.mxu0 %v407
    %1236 = vmatprep.subr.mxu0 0.0
    %1237 = vmatpush1.msra.mxu0 %v408
    %1238 = vmatprep.subr.mxu0 0.0
    %1239 = vmatpush1.msra.mxu0 %v409
    %1240 = vmatprep.subr.mxu0 0.0
    %1241 = vmatpush1.msra.mxu0 %v410
    %1242 = vmatprep.subr.mxu0 0.0
    %1243 = vmatpush1.msra.mxu0 %v411
    %1244 = vmatprep.subr.mxu0 0.0
    %1245 = vmatpush1.msra.mxu0 %v412
    %1246 = vmatprep.subr.mxu0 0.0
    %1247 = vmatpush1.msra.mxu0 %v413
    %1248 = vmatprep.subr.mxu0 0.0
    %1249 = vmatpush1.msra.mxu0 %v414
    %1250 = vmatprep.subr.mxu0 0.0
    %1251 = vmatpush1.msra.mxu0 %v415
    %1252 = vmatprep.subr.mxu0 0.0
    %1253 = vmatpush1.msra.mxu0 %v416
    %1254 = vmatprep.subr.mxu0 0.0
    %1255 = vmatpush1.msra.mxu0 %v417
    %1256 = vmatprep.subr.mxu0 0.0
    %1257 = vmatpush1.msra.mxu0 %v418
    %1258 = vmatprep.subr.mxu0 0.0
    %1259 = vmatpush1.msra.mxu0 %v419
    %1260 = vmatprep.subr.mxu0 0.0
    %1261 = vmatpush1.msra.mxu0 %v420
    %1262 = vmatprep.subr.mxu0 0.0
    %1263 = vmatpush1.msra.mxu0 %v421
    %1264 = vmatprep.subr.mxu0 0.0
    %1265 = vmatpush1.msra.mxu0 %v422
    %1266 = vmatprep.subr.mxu0 0.0
    %1267 = vmatpush1.msra.mxu0 %v423
    %1268 = vmatprep.subr.mxu0 0.0
    %1269 = vmatpush1.msra.mxu0 %v424
    %1270 = vmatprep.subr.mxu0 0.0
    %1271 = vmatpush1.msra.mxu0 %v425
    %1272 = vmatprep.subr.mxu0 0.0
    %1273 = vmatpush1.msra.mxu0 %v426
    %1274 = vmatprep.subr.mxu0 0.0
    %1275 = vmatpush1.msra.mxu0 %v427
    %1276 = vmatprep.subr.mxu0 0.0
    %1277 = vmatpush1.msra.mxu0 %v428
    %1278 = vmatprep.subr.mxu0 0.0
    %1279 = vmatpush1.msra.mxu0 %v429
    %1280 = vmatprep.subr.mxu0 0.0
    %1281 = vmatpush1.msra.mxu0 %v430
    %1282 = vmatprep.subr.mxu0 0.0
    %1283 = vmatpush1.msra.mxu0 %v431
    %1284 = vmatprep.subr.mxu0 0.0
    %1285 = vmatpush1.msra.mxu0 %v432
    %1286 = vmatprep.subr.mxu0 0.0
    %1287 = vmatpush1.msra.mxu0 %v433
    %1288 = vmatprep.subr.mxu0 0.0
    %1289 = vmatpush1.msra.mxu0 %v434
    %1290 = vmatprep.subr.mxu0 0.0
    %1291 = vmatpush1.msra.mxu0 %v435
    %1292 = vmatprep.subr.mxu0 0.0
    %1293 = vmatpush1.msra.mxu0 %v436
    %1294 = vmatprep.subr.mxu0 0.0
    %1295 = vmatpush1.msra.mxu0 %v437
    %1296 = vmatprep.subr.mxu0 0.0
    %1297 = vmatpush1.msra.mxu0 %v438
    %1298 = vmatprep.mubr.f32.mxu0 %v631
    %1299 = vmatmul.mubr.f32.gmra.mrb[0].mxu0 %v623
    %v1300 = vpop.f32.mrb[0].mxu0
    %v1301 = vadd.f32 %v1231, %v1300
    %v1302 = vpop.f32.mrb[0].mxu0
    %1303 = vdwg.mxu0
    %1304 = vmatprep.subr.mxu0 0.0
    %1305 = vmatpush1.msra.mxu0 %v439
    %1306 = vmatprep.subr.mxu0 0.0
    %1307 = vmatpush1.msra.mxu0 %v440
    %1308 = vmatprep.subr.mxu0 0.0
    %1309 = vmatpush1.msra.mxu0 %v441
    %1310 = vmatprep.subr.mxu0 0.0
    %1311 = vmatpush1.msra.mxu0 %v442
    %1312 = vmatprep.subr.mxu0 0.0
    %1313 = vmatpush1.msra.mxu0 %v443
    %1314 = vmatprep.subr.mxu0 0.0
    %1315 = vmatpush1.msra.mxu0 %v444
    %1316 = vmatprep.subr.mxu0 0.0
    %1317 = vmatpush1.msra.mxu0 %v445
    %1318 = vmatprep.subr.mxu0 0.0
    %1319 = vmatpush1.msra.mxu0 %v446
    %1320 = vmatprep.subr.mxu0 0.0
    %1321 = vmatpush1.msra.mxu0 %v447
    %1322 = vmatprep.subr.mxu0 0.0
    %1323 = vmatpush1.msra.mxu0 %v448
    %1324 = vmatprep.subr.mxu0 0.0
    %1325 = vmatpush1.msra.mxu0 %v449
    %1326 = vmatprep.subr.mxu0 0.0
    %1327 = vmatpush1.msra.mxu0 %v450
    %1328 = vmatprep.subr.mxu0 0.0
    %1329 = vmatpush1.msra.mxu0 %v451
    %1330 = vmatprep.subr.mxu0 0.0
    %1331 = vmatpush1.msra.mxu0 %v452
    %1332 = vmatprep.subr.mxu0 0.0
    %1333 = vmatpush1.msra.mxu0 %v453
    %1334 = vmatprep.subr.mxu0 0.0
    %1335 = vmatpush1.msra.mxu0 %v454
    %1336 = vmatprep.subr.mxu0 0.0
    %1337 = vmatpush1.msra.mxu0 %v455
    %1338 = vmatprep.subr.mxu0 0.0
    %1339 = vmatpush1.msra.mxu0 %v456
    %1340 = vmatprep.subr.mxu0 0.0
    %1341 = vmatpush1.msra.mxu0 %v457
    %1342 = vmatprep.subr.mxu0 0.0
    %1343 = vmatpush1.msra.mxu0 %v458
    %1344 = vmatprep.subr.mxu0 0.0
    %1345 = vmatpush1.msra.mxu0 %v459
    %1346 = vmatprep.subr.mxu0 0.0
    %1347 = vmatpush1.msra.mxu0 %v460
    %1348 = vmatprep.subr.mxu0 0.0
    %1349 = vmatpush1.msra.mxu0 %v461
    %1350 = vmatprep.subr.mxu0 0.0
    %1351 = vmatpush1.msra.mxu0 %v462
    %1352 = vmatprep.subr.mxu0 0.0
    %1353 = vmatpush1.msra.mxu0 %v463
    %1354 = vmatprep.subr.mxu0 0.0
    %1355 = vmatpush1.msra.mxu0 %v464
    %1356 = vmatprep.subr.mxu0 0.0
    %1357 = vmatpush1.msra.mxu0 %v465
    %1358 = vmatprep.subr.mxu0 0.0
    %1359 = vmatpush1.msra.mxu0 %v466
    %1360 = vmatprep.subr.mxu0 0.0
    %1361 = vmatpush1.msra.mxu0 %v467
    %1362 = vmatprep.subr.mxu0 0.0
    %1363 = vmatpush1.msra.mxu0 %v468
    %1364 = vmatprep.subr.mxu0 0.0
    %1365 = vmatpush1.msra.mxu0 %v469
    %1366 = vmatprep.subr.mxu0 0.0
    %1367 = vmatpush1.msra.mxu0 %v470
    %1368 = vmatprep.mubr.f32.mxu0 %v632
    %1369 = vmatmul.mubr.f32.gmra.mrb[0].mxu0 %v630
    %v1370 = vpop.f32.mrb[0].mxu0
    %v1371 = vadd.f32 %v1301, %v1370
    %v1372 = vpop.f32.mrb[0].mxu0
    %1373 = vdwg.mxu0
    %1374 = vmatprep.subr.mxu0 0.0
    %1375 = vmatpush1.msra.mxu0 %v471
    %1376 = vmatprep.subr.mxu0 0.0
    %1377 = vmatpush1.msra.mxu0 %v472
    %1378 = vmatprep.subr.mxu0 0.0
    %1379 = vmatpush1.msra.mxu0 %v473
    %1380 = vmatprep.subr.mxu0 0.0
    %1381 = vmatpush1.msra.mxu0 %v474
    %1382 = vmatprep.subr.mxu0 0.0
    %1383 = vmatpush1.msra.mxu0 %v475
    %1384 = vmatprep.subr.mxu0 0.0
    %1385 = vmatpush1.msra.mxu0 %v476
    %1386 = vmatprep.subr.mxu0 0.0
    %1387 = vmatpush1.msra.mxu0 %v477
    %1388 = vmatprep.subr.mxu0 0.0
    %1389 = vmatpush1.msra.mxu0 %v478
    %1390 = vmatprep.subr.mxu0 0.0
    %1391 = vmatpush1.msra.mxu0 %v479
    %1392 = vmatprep.subr.mxu0 0.0
    %1393 = vmatpush1.msra.mxu0 %v480
    %1394 = vmatprep.subr.mxu0 0.0
    %1395 = vmatpush1.msra.mxu0 %v481
    %1396 = vmatprep.subr.mxu0 0.0
    %1397 = vmatpush1.msra.mxu0 %v482
    %1398 = vmatprep.subr.mxu0 0.0
    %1399 = vmatpush1.msra.mxu0 %v483
    %1400 = vmatprep.subr.mxu0 0.0
    %1401 = vmatpush1.msra.mxu0 %v484
    %1402 = vmatprep.subr.mxu0 0.0
    %1403 = vmatpush1.msra.mxu0 %v485
    %1404 = vmatprep.subr.mxu0 0.0
    %1405 = vmatpush1.msra.mxu0 %v486
    %1406 = vmatprep.subr.mxu0 0.0
    %1407 = vmatpush1.msra.mxu0 %v487
    %1408 = vmatprep.subr.mxu0 0.0
    %1409 = vmatpush1.msra.mxu0 %v488
    %1410 = vmatprep.subr.mxu0 0.0
    %1411 = vmatpush1.msra.mxu0 %v489
    %1412 = vmatprep.subr.mxu0 0.0
    %1413 = vmatpush1.msra.mxu0 %v490
    %1414 = vmatprep.subr.mxu0 0.0
    %1415 = vmatpush1.msra.mxu0 %v491
    %1416 = vmatprep.subr.mxu0 0.0
    %1417 = vmatpush1.msra.mxu0 %v492
    %1418 = vmatprep.subr.mxu0 0.0
    %1419 = vmatpush1.msra.mxu0 %v493
    %1420 = vmatprep.subr.mxu0 0.0
    %1421 = vmatpush1.msra.mxu0 %v494
    %1422 = vmatprep.subr.mxu0 0.0
    %1423 = vmatpush1.msra.mxu0 %v495
    %1424 = vmatprep.subr.mxu0 0.0
    %1425 = vmatpush1.msra.mxu0 %v496
    %1426 = vmatprep.subr.mxu0 0.0
    %1427 = vmatpush1.msra.mxu0 %v497
    %1428 = vmatprep.subr.mxu0 0.0
    %1429 = vmatpush1.msra.mxu0 %v498
    %1430 = vmatprep.subr.mxu0 0.0
    %1431 = vmatpush1.msra.mxu0 %v499
    %1432 = vmatprep.subr.mxu0 0.0
    %1433 = vmatpush1.msra.mxu0 %v500
    %1434 = vmatprep.subr.mxu0 0.0
    %1435 = vmatpush1.msra.mxu0 %v501
    %1436 = vmatprep.subr.mxu0 0.0
    %1437 = vmatpush1.msra.mxu0 %v502
    %1438 = vmatprep.mubr.f32.mxu0 %v648
    %1439 = vmatmul.mubr.f32.gmra.mrb[0].mxu0 %v640
    %v1440 = vpop.f32.mrb[0].mxu0
    %v1441 = vadd.f32 %v1371, %v1440
    %v1442 = vpop.f32.mrb[0].mxu0
    %1443 = vdwg.mxu0
    %1444 = vmatprep.subr.mxu0 0.0
    %1445 = vmatpush1.msra.mxu0 %v503
    %1446 = vmatprep.subr.mxu0 0.0
    %1447 = vmatpush1.msra.mxu0 %v504
    %1448 = vmatprep.subr.mxu0 0.0
    %1449 = vmatpush1.msra.mxu0 %v505
    %1450 = vmatprep.subr.mxu0 0.0
    %1451 = vmatpush1.msra.mxu0 %v506
    %1452 = vmatprep.subr.mxu0 0.0
    %1453 = vmatpush1.msra.mxu0 %v507
    %1454 = vmatprep.subr.mxu0 0.0
    %1455 = vmatpush1.msra.mxu0 %v508
    %1456 = vmatprep.subr.mxu0 0.0
    %1457 = vmatpush1.msra.mxu0 %v509
    %1458 = vmatprep.subr.mxu0 0.0
    %1459 = vmatpush1.msra.mxu0 %v510
    %1460 = vmatprep.subr.mxu0 0.0
    %1461 = vmatpush1.msra.mxu0 %v511
    %1462 = vmatprep.subr.mxu0 0.0
    %1463 = vmatpush1.msra.mxu0 %v512
    %1464 = vmatprep.subr.mxu0 0.0
    %1465 = vmatpush1.msra.mxu0 %v513
    %1466 = vmatprep.subr.mxu0 0.0
    %1467 = vmatpush1.msra.mxu0 %v514
    %1468 = vmatprep.subr.mxu0 0.0
    %1469 = vmatpush1.msra.mxu0 %v515
    %1470 = vmatprep.subr.mxu0 0.0
    %1471 = vmatpush1.msra.mxu0 %v516
    %1472 = vmatprep.subr.mxu0 0.0
    %1473 = vmatpush1.msra.mxu0 %v517
    %1474 = vmatprep.subr.mxu0 0.0
    %1475 = vmatpush1.msra.mxu0 %v518
    %1476 = vmatprep.subr.mxu0 0.0
    %1477 = vmatpush1.msra.mxu0 %v519
    %1478 = vmatprep.subr.mxu0 0.0
    %1479 = vmatpush1.msra.mxu0 %v520
    %1480 = vmatprep.subr.mxu0 0.0
    %1481 = vmatpush1.msra.mxu0 %v521
    %1482 = vmatprep.subr.mxu0 0.0
    %1483 = vmatpush1.msra.mxu0 %v522
    %1484 = vmatprep.subr.mxu0 0.0
    %1485 = vmatpush1.msra.mxu0 %v523
    %1486 = vmatprep.subr.mxu0 0.0
    %1487 = vmatpush1.msra.mxu0 %v524
    %1488 = vmatprep.subr.mxu0 0.0
    %1489 = vmatpush1.msra.mxu0 %v525
    %1490 = vmatprep.subr.mxu0 0.0
    %1491 = vmatpush1.msra.mxu0 %v526
    %1492 = vmatprep.subr.mxu0 0.0
    %1493 = vmatpush1.msra.mxu0 %v527
    %1494 = vmatprep.subr.mxu0 0.0
    %1495 = vmatpush1.msra.mxu0 %v528
    %1496 = vmatprep.subr.mxu0 0.0
    %1497 = vmatpush1.msra.mxu0 %v529
    %1498 = vmatprep.subr.mxu0 0.0
    %1499 = vmatpush1.msra.mxu0 %v530
    %1500 = vmatprep.subr.mxu0 0.0
    %1501 = vmatpush1.msra.mxu0 %v531
    %1502 = vmatprep.subr.mxu0 0.0
    %1503 = vmatpush1.msra.mxu0 %v532
    %1504 = vmatprep.subr.mxu0 0.0
    %1505 = vmatpush1.msra.mxu0 %v533
    %1506 = vmatprep.subr.mxu0 0.0
    %1507 = vmatpush1.msra.mxu0 %v534
    %1508 = vmatprep.mubr.f32.mxu0 %v649
    %1509 = vmatmul.mubr.f32.gmra.mrb[0].mxu0 %v647
    %v1510 = vpop.f32.mrb[0].mxu0
    %v1511 = vadd.f32 %v1441, %v1510
    %v1512 = vpop.f32.mrb[0].mxu0
    %1513 = vdwg.mxu0
    %v1514 = vmax.f32 %v1511, 0.0
    %v1515 = vld [vmem:[#allocation7] sm:$0xff]
    %v1516 = vld [vmem:[#allocation7 + $0x8] sm:$0xff]
    %v1517 = vld [vmem:[#allocation7 + $0x10] sm:$0xff]
    %v1518 = vld [vmem:[#allocation7 + $0x18] sm:$0xff]
    %v1519 = vld [vmem:[#allocation7 + $0x20] sm:$0xff]
    %v1520 = vld [vmem:[#allocation7 + $0x28] sm:$0xff]
    %v1521 = vld [vmem:[#allocation7 + $0x30] sm:$0xff]
    %v1522 = vld [vmem:[#allocation7 + $0x38] sm:$0xff]
    %v1523 = vld [vmem:[#allocation7 + $0x40] sm:$0xff]
    %v1524 = vld [vmem:[#allocation7 + $0x48] sm:$0xff]
    %v1525 = vld [vmem:[#allocation7 + $0x50] sm:$0xff]
    %v1526 = vld [vmem:[#allocation7 + $0x58] sm:$0xff]
    %v1527 = vld [vmem:[#allocation7 + $0x60] sm:$0xff]
    %v1528 = vld [vmem:[#allocation7 + $0x68] sm:$0xff]
    %v1529 = vld [vmem:[#allocation7 + $0x70] sm:$0xff]
    %v1530 = vld [vmem:[#allocation7 + $0x78] sm:$0xff]
    %v1531 = vld [vmem:[#allocation13] sm:$0x1]
    %v1533 = vlaneseq
    %v1534 = vshrl.u32 %v1533, 7
    %v1535 = vsub.s32 0, %v1534
    %v1536 = vrot.slane %v1531, %v1535
    %1538 = vmatprep.subr.mxu0 0.0
    %1539 = vmatpush1.msra.mxu0 %v1515
    %1540 = vmatprep.subr.mxu0 0.0
    %1541 = vmatpush1.msra.mxu0 %v1516
    %1542 = vmatprep.subr.mxu0 0.0
    %1543 = vmatpush1.msra.mxu0 %v1517
    %1544 = vmatprep.subr.mxu0 0.0
    %1545 = vmatpush1.msra.mxu0 %v1518
    %1546 = vmatprep.subr.mxu0 0.0
    %1547 = vmatpush1.msra.mxu0 %v1519
    %1548 = vmatprep.subr.mxu0 0.0
    %1549 = vmatpush1.msra.mxu0 %v1520
    %1550 = vmatprep.subr.mxu0 0.0
    %1551 = vmatpush1.msra.mxu0 %v1521
    %1552 = vmatprep.subr.mxu0 0.0
    %1553 = vmatpush1.msra.mxu0 %v1522
    %1554 = vmatprep.subr.mxu0 0.0
    %1555 = vmatpush1.msra.mxu0 %v1523
    %1556 = vmatprep.subr.mxu0 0.0
    %1557 = vmatpush1.msra.mxu0 %v1524
    %1558 = vmatprep.subr.mxu0 0.0
    %1559 = vmatpush1.msra.mxu0 %v1525
    %1560 = vmatprep.subr.mxu0 0.0
    %1561 = vmatpush1.msra.mxu0 %v1526
    %1562 = vmatprep.subr.mxu0 0.0
    %1563 = vmatpush1.msra.mxu0 %v1527
    %1564 = vmatprep.subr.mxu0 0.0
    %1565 = vmatpush1.msra.mxu0 %v1528
    %1566 = vmatprep.subr.mxu0 0.0
    %1567 = vmatpush1.msra.mxu0 %v1529
    %1568 = vmatprep.subr.mxu0 0.0
    %1569 = vmatpush1.msra.mxu0 %v1530
    %1570 = vmatprep.subr.mxu0 0.0
    %1571 = vmatpush1.msra.mxu0 0.0
    %1572 = vmatprep.subr.mxu0 0.0
    %1573 = vmatpush1.msra.mxu0 0.0
    %1574 = vmatprep.subr.mxu0 0.0
    %1575 = vmatpush1.msra.mxu0 0.0
    %1576 = vmatprep.subr.mxu0 0.0
    %1577 = vmatpush1.msra.mxu0 0.0
    %1578 = vmatprep.subr.mxu0 0.0
    %1579 = vmatpush1.msra.mxu0 0.0
    %1580 = vmatprep.subr.mxu0 0.0
    %1581 = vmatpush1.msra.mxu0 0.0
    %1582 = vmatprep.subr.mxu0 0.0
    %1583 = vmatpush1.msra.mxu0 0.0
    %1584 = vmatprep.subr.mxu0 0.0
    %1585 = vmatpush1.msra.mxu0 0.0
    %1586 = vmatprep.subr.mxu0 0.0
    %1587 = vmatpush1.msra.mxu0 0.0
    %1588 = vmatprep.subr.mxu0 0.0
    %1589 = vmatpush1.msra.mxu0 0.0
    %1590 = vmatprep.subr.mxu0 0.0
    %1591 = vmatpush1.msra.mxu0 0.0
    %1592 = vmatprep.subr.mxu0 0.0
    %1593 = vmatpush1.msra.mxu0 0.0
    %1594 = vmatprep.subr.mxu0 0.0
    %1595 = vmatpush1.msra.mxu0 0.0
    %1596 = vmatprep.subr.mxu0 0.0
    %1597 = vmatpush1.msra.mxu0 0.0
    %1598 = vmatprep.subr.mxu0 0.0
    %1599 = vmatpush1.msra.mxu0 0.0
    %1600 = vmatprep.subr.mxu0 0.0
    %1601 = vmatpush1.msra.mxu0 0.0
    %1602 = vmatprep.mubr.f32.mxu0 0.0
    %1603 = vmatmul.mubr.f32.gmra.mrb[0].mxu0 %v1514
    %v1604 = vpop.f32.mrb[0].mxu0
    %v1605 = vadd.f32 %v1536, %v1604
    %v1606 = vpop.f32.mrb[0].mxu0
    %1607 = vdwg.mxu0
    %v1608 = vmax.f32 %v1605, 0.0
    %v1609 = vld [vmem:[#allocation8] sm:$0xff]
    %v1610 = vld [vmem:[#allocation8 + $0x8] sm:$0xff]
    %v1611 = vld [vmem:[#allocation8 + $0x10] sm:$0xff]
    %v1612 = vld [vmem:[#allocation8 + $0x18] sm:$0xff]
    %v1613 = vld [vmem:[#allocation8 + $0x20] sm:$0xff]
    %v1614 = vld [vmem:[#allocation8 + $0x28] sm:$0xff]
    %v1615 = vld [vmem:[#allocation8 + $0x30] sm:$0xff]
    %v1616 = vld [vmem:[#allocation8 + $0x38] sm:$0xff]
    %v1617 = vld [vmem:[#allocation8 + $0x40] sm:$0xff]
    %v1618 = vld [vmem:[#allocation8 + $0x48] sm:$0xff]
    %v1619 = vld [vmem:[#allocation8 + $0x50] sm:$0xff]
    %v1620 = vld [vmem:[#allocation8 + $0x58] sm:$0xff]
    %v1621 = vld [vmem:[#allocation8 + $0x60] sm:$0xff]
    %v1622 = vld [vmem:[#allocation8 + $0x68] sm:$0xff]
    %v1623 = vld [vmem:[#allocation8 + $0x70] sm:$0xff]
    %v1624 = vld [vmem:[#allocation8 + $0x78] sm:$0xff]
    %v1625 = vld [vmem:[#allocation14] sm:$0x1]
    %v1627 = vlaneseq
    %v1628 = vshrl.u32 %v1627, 7
    %v1629 = vsub.s32 0, %v1628
    %v1630 = vrot.slane %v1625, %v1629
    %1632 = vmatprep.subr.mxu0 0.0
    %1633 = vmatpush1.msra.mxu0 %v1609
    %1634 = vmatprep.subr.mxu0 0.0
    %1635 = vmatpush1.msra.mxu0 %v1610
    %1636 = vmatprep.subr.mxu0 0.0
    %1637 = vmatpush1.msra.mxu0 %v1611
    %1638 = vmatprep.subr.mxu0 0.0
    %1639 = vmatpush1.msra.mxu0 %v1612
    %1640 = vmatprep.subr.mxu0 0.0
    %1641 = vmatpush1.msra.mxu0 %v1613
    %1642 = vmatprep.subr.mxu0 0.0
    %1643 = vmatpush1.msra.mxu0 %v1614
    %1644 = vmatprep.subr.mxu0 0.0
    %1645 = vmatpush1.msra.mxu0 %v1615
    %1646 = vmatprep.subr.mxu0 0.0
    %1647 = vmatpush1.msra.mxu0 %v1616
    %1648 = vmatprep.subr.mxu0 0.0
    %1649 = vmatpush1.msra.mxu0 %v1617
    %1650 = vmatprep.subr.mxu0 0.0
    %1651 = vmatpush1.msra.mxu0 %v1618
    %1652 = vmatprep.subr.mxu0 0.0
    %1653 = vmatpush1.msra.mxu0 %v1619
    %1654 = vmatprep.subr.mxu0 0.0
    %1655 = vmatpush1.msra.mxu0 %v1620
    %1656 = vmatprep.subr.mxu0 0.0
    %1657 = vmatpush1.msra.mxu0 %v1621
    %1658 = vmatprep.subr.mxu0 0.0
    %1659 = vmatpush1.msra.mxu0 %v1622
    %1660 = vmatprep.subr.mxu0 0.0
    %1661 = vmatpush1.msra.mxu0 %v1623
    %1662 = vmatprep.subr.mxu0 0.0
    %1663 = vmatpush1.msra.mxu0 %v1624
    %1664 = vmatprep.subr.mxu0 0.0
    %1665 = vmatpush1.msra.mxu0 0.0
    %1666 = vmatprep.subr.mxu0 0.0
    %1667 = vmatpush1.msra.mxu0 0.0
    %1668 = vmatprep.subr.mxu0 0.0
    %1669 = vmatpush1.msra.mxu0 0.0
    %1670 = vmatprep.subr.mxu0 0.0
    %1671 = vmatpush1.msra.mxu0 0.0
    %1672 = vmatprep.subr.mxu0 0.0
    %1673 = vmatpush1.msra.mxu0 0.0
    %1674 = vmatprep.subr.mxu0 0.0
    %1675 = vmatpush1.msra.mxu0 0.0
    %1676 = vmatprep.subr.mxu0 0.0
    %1677 = vmatpush1.msra.mxu0 0.0
    %1678 = vmatprep.subr.mxu0 0.0
    %1679 = vmatpush1.msra.mxu0 0.0
    %1680 = vmatprep.subr.mxu0 0.0
    %1681 = vmatpush1.msra.mxu0 0.0
    %1682 = vmatprep.subr.mxu0 0.0
    %1683 = vmatpush1.msra.mxu0 0.0
    %1684 = vmatprep.subr.mxu0 0.0
    %1685 = vmatpush1.msra.mxu0 0.0
    %1686 = vmatprep.subr.mxu0 0.0
    %1687 = vmatpush1.msra.mxu0 0.0
    %1688 = vmatprep.subr.mxu0 0.0
    %1689 = vmatpush1.msra.mxu0 0.0
    %1690 = vmatprep.subr.mxu0 0.0
    %1691 = vmatpush1.msra.mxu0 0.0
    %1692 = vmatprep.subr.mxu0 0.0
    %1693 = vmatpush1.msra.mxu0 0.0
    %1694 = vmatprep.subr.mxu0 0.0
    %1695 = vmatpush1.msra.mxu0 0.0
    %1696 = vmatprep.mubr.f32.mxu0 0.0
    %1697 = vmatmul.mubr.f32.gmra.mrb[0].mxu0 %v1608
    %v1698 = vpop.f32.mrb[0].mxu0
    %v1699 = vadd.f32 %v1630, %v1698
    %v1700 = vpop.f32.mrb[0].mxu0
    %1701 = vdwg.mxu0
    %v1702 = vmax.f32 %v1699, 0.0
    %v1703 = vld [vmem:[#allocation10] sm:$0xff]
    %v1704 = vld [vmem:[#allocation10 + $0x8] sm:$0xff]
    %v1705 = vld [vmem:[#allocation10 + $0x10] sm:$0xff]
    %v1706 = vld [vmem:[#allocation10 + $0x18] sm:$0xff]
    %v1707 = vld [vmem:[#allocation10 + $0x20] sm:$0xff]
    %v1708 = vld [vmem:[#allocation10 + $0x28] sm:$0xff]
    %v1709 = vld [vmem:[#allocation10 + $0x30] sm:$0xff]
    %v1710 = vld [vmem:[#allocation10 + $0x38] sm:$0xff]
    %v1711 = vld [vmem:[#allocation10 + $0x40] sm:$0xff]
    %v1712 = vld [vmem:[#allocation10 + $0x48] sm:$0xff]
    %v1713 = vld [vmem:[#allocation10 + $0x50] sm:$0xff]
    %v1714 = vld [vmem:[#allocation10 + $0x58] sm:$0xff]
    %v1715 = vld [vmem:[#allocation10 + $0x60] sm:$0xff]
    %v1716 = vld [vmem:[#allocation10 + $0x68] sm:$0xff]
    %v1717 = vld [vmem:[#allocation10 + $0x70] sm:$0xff]
    %v1718 = vld [vmem:[#allocation10 + $0x78] sm:$0xff]
    %v1719 = vld [vmem:[#allocation16] sm:$0x1]
    %v1721 = vlaneseq
    %v1722 = vshrl.u32 %v1721, 7
    %v1723 = vsub.s32 0, %v1722
    %v1724 = vrot.slane %v1719, %v1723
    %1726 = vmatprep.subr.mxu0 0.0
    %1727 = vmatpush1.msra.mxu0 %v1703
    %1728 = vmatprep.subr.mxu0 0.0
    %1729 = vmatpush1.msra.mxu0 %v1704
    %1730 = vmatprep.subr.mxu0 0.0
    %1731 = vmatpush1.msra.mxu0 %v1705
    %1732 = vmatprep.subr.mxu0 0.0
    %1733 = vmatpush1.msra.mxu0 %v1706
    %1734 = vmatprep.subr.mxu0 0.0
    %1735 = vmatpush1.msra.mxu0 %v1707
    %1736 = vmatprep.subr.mxu0 0.0
    %1737 = vmatpush1.msra.mxu0 %v1708
    %1738 = vmatprep.subr.mxu0 0.0
    %1739 = vmatpush1.msra.mxu0 %v1709
    %1740 = vmatprep.subr.mxu0 0.0
    %1741 = vmatpush1.msra.mxu0 %v1710
    %1742 = vmatprep.subr.mxu0 0.0
    %1743 = vmatpush1.msra.mxu0 %v1711
    %1744 = vmatprep.subr.mxu0 0.0
    %1745 = vmatpush1.msra.mxu0 %v1712
    %1746 = vmatprep.subr.mxu0 0.0
    %1747 = vmatpush1.msra.mxu0 %v1713
    %1748 = vmatprep.subr.mxu0 0.0
    %1749 = vmatpush1.msra.mxu0 %v1714
    %1750 = vmatprep.subr.mxu0 0.0
    %1751 = vmatpush1.msra.mxu0 %v1715
    %1752 = vmatprep.subr.mxu0 0.0
    %1753 = vmatpush1.msra.mxu0 %v1716
    %1754 = vmatprep.subr.mxu0 0.0
    %1755 = vmatpush1.msra.mxu0 %v1717
    %1756 = vmatprep.subr.mxu0 0.0
    %1757 = vmatpush1.msra.mxu0 %v1718
    %1758 = vmatprep.subr.mxu0 0.0
    %1759 = vmatpush1.msra.mxu0 0.0
    %1760 = vmatprep.subr.mxu0 0.0
    %1761 = vmatpush1.msra.mxu0 0.0
    %1762 = vmatprep.subr.mxu0 0.0
    %1763 = vmatpush1.msra.mxu0 0.0
    %1764 = vmatprep.subr.mxu0 0.0
    %1765 = vmatpush1.msra.mxu0 0.0
    %1766 = vmatprep.subr.mxu0 0.0
    %1767 = vmatpush1.msra.mxu0 0.0
    %1768 = vmatprep.subr.mxu0 0.0
    %1769 = vmatpush1.msra.mxu0 0.0
    %1770 = vmatprep.subr.mxu0 0.0
    %1771 = vmatpush1.msra.mxu0 0.0
    %1772 = vmatprep.subr.mxu0 0.0
    %1773 = vmatpush1.msra.mxu0 0.0
    %1774 = vmatprep.subr.mxu0 0.0
    %1775 = vmatpush1.msra.mxu0 0.0
    %1776 = vmatprep.subr.mxu0 0.0
    %1777 = vmatpush1.msra.mxu0 0.0
    %1778 = vmatprep.subr.mxu0 0.0
    %1779 = vmatpush1.msra.mxu0 0.0
    %1780 = vmatprep.subr.mxu0 0.0
    %1781 = vmatpush1.msra.mxu0 0.0
    %1782 = vmatprep.subr.mxu0 0.0
    %1783 = vmatpush1.msra.mxu0 0.0
    %1784 = vmatprep.subr.mxu0 0.0
    %1785 = vmatpush1.msra.mxu0 0.0
    %1786 = vmatprep.subr.mxu0 0.0
    %1787 = vmatpush1.msra.mxu0 0.0
    %1788 = vmatprep.subr.mxu0 0.0
    %1789 = vmatpush1.msra.mxu0 0.0
    %1790 = vmatprep.mubr.f32.mxu0 0.0
    %1791 = vmatmul.mubr.f32.gmra.mrb[0].mxu0 %v1702
    %v1792 = vpop.f32.mrb[0].mxu0
    %v1793 = vadd.f32 %v1724, %v1792
    %v1794 = vpop.f32.mrb[0].mxu0
    %1795 = vdwg.mxu0
    %1796 = vst [vmem:[#allocation17] sm:$0x3] %v1793
    // Predicated region
    $region74: #{tpu_custom_call.1} parent=1 // pred_check
      _
    $region75: #{tpu_custom_call.1} parent=1 // pred_check_branch
      %1798 = sbr.rel (0) target = $region77
    $region76: #{tpu_custom_call.1} parent=1 // pred_region
      %s1800 = ssub.s32 32, 32
      %1801 = vsyncadd [#allocation4], %s1800
      %s1803 = sshll.u32 [#allocation17], 4
      %s1804 = int_to_ptr.vmem [resolvable:$true] %s1803
      %1806 = dma.vmem_to_hbm [thread:$0]  %s1804, 32, %s9, [#allocation4]
    $region77: #{tpu_custom_call.1} parent=1 // pred_fallthru
      _
    // Predicated region
    $region78: #{tpu_custom_call.1} parent=1 // pred_check
      _
    $region79: #{tpu_custom_call.1} parent=1 // pred_check_branch
      %1808 = sbr.rel (0) target = $region81
    $region80: #{tpu_custom_call.1} parent=1 // pred_region
      %1809 = dma.done [#allocation4], 32
    $region81: #{tpu_custom_call.1} parent=1 // pred_fallthru
      _
    %1810 = vsyncpa [#allocation3], 1
    %1811 = vsyncpa [#allocation6], 1
    %1812 = vsyncpa [#allocation9], 1
    %1813 = vsyncpa [#allocation12], 1
    %1814 = vsyncpa [#allocation15], 1
    %1815 = vsyncpa [#allocation4], 1

</llo_original>
